<compile_context>
chip_gen: v7x
topology: tpu7x:2x2x1
jax: 0.10.0
libtpu: 0.0.40
codegen_flags: <defaults>
</compile_context>

<pallas_src>
import math

import jax
import jax.numpy as jnp
from jax.experimental import pallas as pl
from jax.experimental.pallas import tpu as pltpu

# ---------------- small synthetic ViT config ----------------
IMG_RES   = 16                      # stands in for 224
PATCH     = 8                       # stands in for 14
IN_CH     = 3
WIDTH     = 32                      # transformer width D
HEADS     = 4
HEAD_DIM  = WIDTH // HEADS
LAYERS    = 2
MLP_DIM   = 4 * WIDTH
EMBED_DIM = 16                      # output projection dim
LN_EPS    = 1e-5

GRID_H    = IMG_RES // PATCH
N_PATCH   = GRID_H * GRID_H
SEQ       = N_PATCH + 1             # +1 cls token
PATCH_DIM = IN_CH * PATCH * PATCH

DTYPE = jnp.bfloat16                # matmul operand dtype (fp32 accumulation)


def _layer_norm(x, gamma, beta):
    mean = jnp.mean(x, axis=-1, keepdims=True)
    var = jnp.mean(jnp.square(x - mean), axis=-1, keepdims=True)
    return (x - mean) * jax.lax.rsqrt(var + LN_EPS) * gamma + beta


# ---------------- fused ViT kernel: one (batch, layer) grid step ----------------
def _vit_kernel(patches_ref, conv_w_ref, embed_bias_ref, ln_pre_ref,
                ln12_ref, wq_ref, wk_ref, wv_ref, in_b_ref, out_w_ref,
                dbias_ref, fc1_w_ref, fc1_b_ref, fc2_w_ref,
                ln_post_ref, proj_ref,
                z_ref, x_scr):
    layer = pl.program_id(1)

    # ---- prologue (layer 0): patch embed + cls/pos + ln_pre -> residual ----
    @pl.when(layer == 0)
    def _():
        # patches row 0 is all-zero, so row 0 of `pe` is 0 and the cls token
        # comes entirely from embed_bias (= class_emb + pos_emb[0]).
        pe = jnp.dot(patches_ref[0], conv_w_ref[...],
                     preferred_element_type=jnp.float32)            # (S, D)
        x0 = pe + embed_bias_ref[...]
        x_scr[...] = _layer_norm(x0, ln_pre_ref[0:1, :], ln_pre_ref[1:2, :])

    x = x_scr[...]                                                  # (S, D) fp32

    # ---- attention branch ----
    hn = _layer_norm(x, ln12_ref[0, 0:1, :], ln12_ref[0, 1:2, :])
    hn_b = hn.astype(DTYPE)
    attn = jnp.zeros((SEQ, WIDTH), jnp.float32)
    for h in range(HEADS):                      # static unroll, head-major weights
        q = (jnp.dot(hn_b, wq_ref[0, h], preferred_element_type=jnp.float32)
             + in_b_ref[0, h, 0:1, :]).astype(DTYPE)                # pre-scaled
        k = (jnp.dot(hn_b, wk_ref[0, h], preferred_element_type=jnp.float32)
             + in_b_ref[0, h, 1:2, :]).astype(DTYPE)
        v = (jnp.dot(hn_b, wv_ref[0, h], preferred_element_type=jnp.float32)
             + in_b_ref[0, h, 2:3, :]).astype(DTYPE)
        s = jax.lax.dot_general(q, k, (((1,), (1,)), ((), ())),
                                preferred_element_type=jnp.float32)  # (S, S)
        s = s - jnp.max(s, axis=-1, keepdims=True)
        p = jnp.exp(s)
        p = p / jnp.sum(p, axis=-1, keepdims=True)                   # exact softmax
        o = jnp.dot(p.astype(DTYPE), v,
                    preferred_element_type=jnp.float32)              # (S, Dh)
        attn = attn + jnp.dot(o.astype(DTYPE), out_w_ref[0, h],
                              preferred_element_type=jnp.float32)    # (S, D)
    x = x + attn + dbias_ref[0, 0:1, :]

    # ---- MLP branch ----
    hn = _layer_norm(x, ln12_ref[0, 2:3, :], ln12_ref[0, 3:4, :])
    h1 = (jnp.dot(hn.astype(DTYPE), fc1_w_ref[0],
                  preferred_element_type=jnp.float32) + fc1_b_ref[0])
    # TODO(synk): OpenCLIP uses exact erf GELU; tanh approximation used here
    # for guaranteed Mosaic lowering.
    h1 = jax.nn.gelu(h1, approximate=True)
    h2 = jnp.dot(h1.astype(DTYPE), fc2_w_ref[0],
                 preferred_element_type=jnp.float32)
    x = x + h2 + dbias_ref[0, 1:2, :]
    x_scr[...] = x

    # ---- epilogue (last layer): pool cls token, ln_post, projection ----
    @pl.when(layer == pl.num_programs(1) - 1)
    def _():
        pooled = x[0:1, :]                                           # (1, D)
        pooled = _layer_norm(pooled, ln_post_ref[0:1, :], ln_post_ref[1:2, :])
        z_ref[0] = jnp.dot(pooled.astype(DTYPE), proj_ref[...],
                           preferred_element_type=jnp.float32)       # (1, E)


# ---------------- wrapper ----------------
def encode_image(packed, image):
    B, C, Himg, Wimg = image.shape
    assert (C, Himg, Wimg) == (IN_CH, IMG_RES, IMG_RES)
    # TODO(synk): NCHW -> patch extraction stays in XLA (layout only); fold it
    # into the kernel via a strided/Element BlockSpec for production images.
    patches = image.reshape(B, C, GRID_H, PATCH, GRID_H, PATCH)
    patches = patches.transpose(0, 2, 4, 1, 3, 5).reshape(B, N_PATCH, PATCH_DIM)
    patches_ext = jnp.concatenate(
        [jnp.zeros((B, 1, PATCH_DIM), patches.dtype), patches], axis=1
    ).astype(DTYPE)                                                  # (B, S, C*P*P)

    z = pl.pallas_call(
        _vit_kernel,
        out_shape=jax.ShapeDtypeStruct((B, 1, EMBED_DIM), jnp.float32),
        grid=(B, LAYERS),
        in_specs=[
            pl.BlockSpec((1, SEQ, PATCH_DIM), lambda b, l: (b, 0, 0)),          # patches
            pl.BlockSpec((PATCH_DIM, WIDTH), lambda b, l: (0, 0)),              # conv_w
            pl.BlockSpec((SEQ, WIDTH), lambda b, l: (0, 0)),                    # cls+pos
            pl.BlockSpec((2, WIDTH), lambda b, l: (0, 0)),                      # ln_pre g/b
            pl.BlockSpec((1, 4, WIDTH), lambda b, l: (l, 0, 0)),                # ln1/ln2 g/b
            pl.BlockSpec((1, HEADS, WIDTH, HEAD_DIM), lambda b, l: (l, 0, 0, 0)),  # wq
            pl.BlockSpec((1, HEADS, WIDTH, HEAD_DIM), lambda b, l: (l, 0, 0, 0)),  # wk
            pl.BlockSpec((1, HEADS, WIDTH, HEAD_DIM), lambda b, l: (l, 0, 0, 0)),  # wv
            pl.BlockSpec((1, HEADS, 3, HEAD_DIM), lambda b, l: (l, 0, 0, 0)),      # q/k/v bias
            pl.BlockSpec((1, HEADS, HEAD_DIM, WIDTH), lambda b, l: (l, 0, 0, 0)),  # out_w
            pl.BlockSpec((1, 2, WIDTH), lambda b, l: (l, 0, 0)),                # out_b/fc2_b
            pl.BlockSpec((1, WIDTH, MLP_DIM), lambda b, l: (l, 0, 0)),          # fc1_w
            pl.BlockSpec((1, 1, MLP_DIM), lambda b, l: (l, 0, 0)),              # fc1_b
            pl.BlockSpec((1, MLP_DIM, WIDTH), lambda b, l: (l, 0, 0)),          # fc2_w
            pl.BlockSpec((2, WIDTH), lambda b, l: (0, 0)),                      # ln_post g/b
            pl.BlockSpec((WIDTH, EMBED_DIM), lambda b, l: (0, 0)),              # proj
        ],
        out_specs=pl.BlockSpec((1, 1, EMBED_DIM), lambda b, l: (b, 0, 0)),
        scratch_shapes=[pltpu.VMEM((SEQ, WIDTH), jnp.float32)],      # residual stream
        compiler_params=pltpu.CompilerParams(
            dimension_semantics=("parallel", "arbitrary")),
    )(patches_ext,
      packed["conv_w"], packed["embed_bias"], packed["ln_pre"],
      packed["ln12"], packed["wq"], packed["wk"], packed["wv"],
      packed["in_b"], packed["out_w"], packed["dbias"],
      packed["fc1_w"], packed["fc1_b"], packed["fc2_w"],
      packed["ln_post"], packed["proj"])
    return z.reshape(B, EMBED_DIM)


# ---------------- parameters ----------------
def init_params(key):
    keys = iter(jax.random.split(key, 64))

    def nrm(shape, scale=0.02):
        return scale * jax.random.normal(next(keys), shape, jnp.float32)

    params = {
        "conv_w": nrm((PATCH_DIM, WIDTH)),   # conv1 (stride=kernel=patch, no bias)
        "class_emb": nrm((WIDTH,)),
        "pos_emb": nrm((SEQ, WIDTH)),
        "ln_pre_g": 1.0 + nrm((WIDTH,)), "ln_pre_b": nrm((WIDTH,)),
        "ln_post_g": 1.0 + nrm((WIDTH,)), "ln_post_b": nrm((WIDTH,)),
        "proj": nrm((WIDTH, EMBED_DIM)),
        "blocks": [],
    }
    for _ in range(LAYERS):
        params["blocks"].append({
            "ln1_g": 1.0 + nrm((WIDTH,)), "ln1_b": nrm((WIDTH,)),
            "in_w": nrm((WIDTH, 3 * WIDTH)), "in_b": nrm((3 * WIDTH,)),
            "out_w": nrm((WIDTH, WIDTH)), "out_b": nrm((WIDTH,)),
            "ln2_g": 1.0 + nrm((WIDTH,)), "ln2_b": nrm((WIDTH,)),
            "fc1_w": nrm((WIDTH, MLP_DIM)), "fc1_b": nrm((MLP_DIM,)),
            "fc2_w": nrm((MLP_DIM, WIDTH)), "fc2_b": nrm((WIDTH,)),
        })
    return params


def pack_params(p):
    """Re-layout the frozen weights for the fused kernel (done once, offline)."""
    scale = 1.0 / math.sqrt(HEAD_DIM)
    D = WIDTH

    def split_heads_cols(w):                       # (D, D) -> (H, D, Dh)
        return w.reshape(D, HEADS, HEAD_DIM).transpose(1, 0, 2)

    ln12, wq, wk, wv, in_b, out_w, dbias, fc1_w, fc1_b, fc2_w = \
        [], [], [], [], [], [], [], [], [], []
    for blk in p["blocks"]:
        ln12.append(jnp.stack([blk["ln1_g"], blk["ln1_b"],
                               blk["ln2_g"], blk["ln2_b"]]))
        wq.append(split_heads_cols(blk["in_w"][:, :D]) * scale)      # scale folded
        wk.append(split_heads_cols(blk["in_w"][:, D:2 * D]))
        wv.append(split_heads_cols(blk["in_w"][:, 2 * D:]))
        in_b.append(jnp.stack(
            [blk["in_b"][:D].reshape(HEADS, HEAD_DIM) * scale,
             blk["in_b"][D:2 * D].reshape(HEADS, HEAD_DIM),
             blk["in_b"][2 * D:].reshape(HEADS, HEAD_DIM)], axis=1))  # (H, 3, Dh)
        out_w.append(blk["out_w"].reshape(HEADS, HEAD_DIM, D))
        dbias.append(jnp.stack([blk["out_b"], blk["fc2_b"]]))         # (2, D)
        fc1_w.append(blk["fc1_w"])
        fc1_b.append(blk["fc1_b"].reshape(1, MLP_DIM))
        fc2_w.append(blk["fc2_w"])

    embed_bias = p["pos_emb"].at[0].add(p["class_emb"])               # cls+pos fused

    return {
        "conv_w": p["conv_w"].astype(DTYPE),
        "embed_bias": embed_bias.astype(jnp.float32),
        "ln_pre": jnp.stack([p["ln_pre_g"], p["ln_pre_b"]]),
        "ln12": jnp.stack(ln12),
        "wq": jnp.stack(wq).astype(DTYPE),
        "wk": jnp.stack(wk).astype(DTYPE),
        "wv": jnp.stack(wv).astype(DTYPE),
        "in_b": jnp.stack(in_b).astype(jnp.float32),
        "out_w": jnp.stack(out_w).astype(DTYPE),
        "dbias": jnp.stack(dbias).astype(jnp.float32),
        "fc1_w": jnp.stack(fc1_w).astype(DTYPE),
        "fc1_b": jnp.stack(fc1_b).astype(jnp.float32),
        "fc2_w": jnp.stack(fc2_w).astype(DTYPE),
        "ln_post": jnp.stack([p["ln_post_g"], p["ln_post_b"]]),
        "proj": p["proj"].astype(DTYPE),
    }


@jax.jit
def frozen_openclip_visual_embedder_forward(packed, image):
    return encode_image(packed, image)


if __name__ == "__main__":
    key = jax.random.PRNGKey(0)
    pkey, ikey = jax.random.split(key)
    packed = pack_params(init_params(pkey))
    image = jax.random.normal(ikey, (2, IN_CH, IMG_RES, IMG_RES), dtype=jnp.float32)

    z = frozen_openclip_visual_embedder_forward(packed, image)
    jax.block_until_ready(z)
    assert z.shape == (2, EMBED_DIM) and z.dtype == jnp.float32
    assert bool(jnp.all(jnp.isfinite(z)))
    print("KERNEL_OK")
</pallas_src>

<mosaic_0001>
module attributes {stable_mosaic.version = 11 : i64} {
  func.func @_vit_kernel(%arg0: i32, %arg1: i32, %arg2: memref<1x5x192xbf16, #tpu.memory_space<vmem>>, %arg3: memref<192x32xbf16, #tpu.memory_space<vmem>>, %arg4: memref<5x32xf32, #tpu.memory_space<vmem>>, %arg5: memref<2x32xf32, #tpu.memory_space<vmem>>, %arg6: memref<1x4x32xf32, #tpu.memory_space<vmem>>, %arg7: memref<1x4x32x8xbf16, #tpu.memory_space<vmem>>, %arg8: memref<1x4x32x8xbf16, #tpu.memory_space<vmem>>, %arg9: memref<1x4x32x8xbf16, #tpu.memory_space<vmem>>, %arg10: memref<1x4x3x8xf32, #tpu.memory_space<vmem>>, %arg11: memref<1x4x8x32xbf16, #tpu.memory_space<vmem>>, %arg12: memref<1x2x32xf32, #tpu.memory_space<vmem>>, %arg13: memref<1x32x128xbf16, #tpu.memory_space<vmem>>, %arg14: memref<1x1x128xf32, #tpu.memory_space<vmem>>, %arg15: memref<1x128x32xbf16, #tpu.memory_space<vmem>>, %arg16: memref<2x32xf32, #tpu.memory_space<vmem>>, %arg17: memref<32x16xbf16, #tpu.memory_space<vmem>>, %arg18: memref<1x1x16xf32, #tpu.memory_space<vmem>>, %arg19: memref<5x32xf32, #tpu.memory_space<vmem>>) attributes {dimension_semantics = [#tpu.dimension_semantics<parallel>, #tpu.dimension_semantics<arbitrary>], iteration_bounds = array<i64: 2, 2>, scalar_prefetch = 0 : i64, scratch_operands = 1 : i64, tpu.core_type = #tpu.core_type<tc>, window_params = [{transform_indices = @transform_0, window_bounds = array<i64: 1, 5, 192>}, {pipeline_mode = #tpu.pipeline_mode<synchronous>, transform_indices = @transform_1, window_bounds = array<i64: 192, 32>}, {pipeline_mode = #tpu.pipeline_mode<synchronous>, transform_indices = @transform_2, window_bounds = array<i64: 5, 32>}, {pipeline_mode = #tpu.pipeline_mode<synchronous>, transform_indices = @transform_3, window_bounds = array<i64: 2, 32>}, {transform_indices = @transform_4, window_bounds = array<i64: 1, 4, 32>}, {transform_indices = @transform_5, window_bounds = array<i64: 1, 4, 32, 8>}, {transform_indices = @transform_6, window_bounds = array<i64: 1, 4, 32, 8>}, {transform_indices = @transform_7, window_bounds = array<i64: 1, 4, 32, 8>}, {transform_indices = @transform_8, window_bounds = array<i64: 1, 4, 3, 8>}, {transform_indices = @transform_9, window_bounds = array<i64: 1, 4, 8, 32>}, {transform_indices = @transform_10, window_bounds = array<i64: 1, 2, 32>}, {transform_indices = @transform_11, window_bounds = array<i64: 1, 32, 128>}, {transform_indices = @transform_12, window_bounds = array<i64: 1, 1, 128>}, {transform_indices = @transform_13, window_bounds = array<i64: 1, 128, 32>}, {pipeline_mode = #tpu.pipeline_mode<synchronous>, transform_indices = @transform_14, window_bounds = array<i64: 2, 32>}, {pipeline_mode = #tpu.pipeline_mode<synchronous>, transform_indices = @transform_15, window_bounds = array<i64: 32, 16>}, {transform_indices = @transform_16, window_bounds = array<i64: 1, 1, 16>}]} {
    %c0_i32 = arith.constant 0 : i32
    %0 = arith.cmpi eq, %arg1, %c0_i32 : i32
    %1 = arith.extui %0 : i1 to i32
    %c0_i32_0 = arith.constant 0 : i32
    %2 = arith.cmpi ne, %1, %c0_i32_0 : i32
    scf.if %2 {
      %c0_189 = arith.constant 0 : index
      %c0_190 = arith.constant 0 : index
      %c0_191 = arith.constant 0 : index
      %261 = vector.load %arg2[%c0_189, %c0_190, %c0_191] : memref<1x5x192xbf16, #tpu.memory_space<vmem>>, vector<1x5x192xbf16>
      %262 = vector.shape_cast %261 : vector<1x5x192xbf16> to vector<5x192xbf16>
      %c0_192 = arith.constant 0 : index
      %c0_193 = arith.constant 0 : index
      %263 = vector.load %arg3[%c0_192, %c0_193] : memref<192x32xbf16, #tpu.memory_space<vmem>>, vector<192x32xbf16>
      %cst_194 = arith.constant dense<0.000000e+00> : vector<5x32xf32>
      %264 = tpu.matmul %262, %263, %cst_194 {dimension_numbers = #tpu.dot_dimension_numbers<[1], [0], [0], [1], [0, 0, 1, 1], [], []>} : vector<5x192xbf16>, vector<192x32xbf16>, vector<5x32xf32> -> vector<5x32xf32>
      %c0_195 = arith.constant 0 : index
      %c0_196 = arith.constant 0 : index
      %265 = vector.load %arg4[%c0_195, %c0_196] : memref<5x32xf32, #tpu.memory_space<vmem>>, vector<5x32xf32>
      %266 = arith.addf %264, %265 : vector<5x32xf32>
      %c0_197 = arith.constant 0 : index
      %c0_198 = arith.constant 0 : index
      %267 = vector.load %arg5[%c0_197, %c0_198] : memref<2x32xf32, #tpu.memory_space<vmem>>, vector<1x32xf32>
      %c1_199 = arith.constant 1 : index
      %c0_200 = arith.constant 0 : index
      %268 = vector.load %arg5[%c1_199, %c0_200] : memref<2x32xf32, #tpu.memory_space<vmem>>, vector<1x32xf32>
      %cst_201 = arith.constant dense<0.000000e+00> : vector<5xf32>
      %269 = vector.multi_reduction <add>, %266, %cst_201 [1] : vector<5x32xf32> to vector<5xf32>
      %270 = vector.shape_cast %269 : vector<5xf32> to vector<5x1xf32>
      %cst_202 = arith.constant 3.200000e+01 : f32
      %271 = vector.broadcast %cst_202 : f32 to vector<5x1xf32>
      %272 = arith.divf %270, %271 : vector<5x1xf32>
      %273 = vector.broadcast %272 : vector<5x1xf32> to vector<5x32xf32>
      %274 = arith.subf %266, %273 : vector<5x32xf32>
      %275 = arith.mulf %274, %274 : vector<5x32xf32>
      %cst_203 = arith.constant dense<0.000000e+00> : vector<5xf32>
      %276 = vector.multi_reduction <add>, %275, %cst_203 [1] : vector<5x32xf32> to vector<5xf32>
      %277 = vector.shape_cast %276 : vector<5xf32> to vector<5x1xf32>
      %cst_204 = arith.constant 3.200000e+01 : f32
      %278 = vector.broadcast %cst_204 : f32 to vector<5x1xf32>
      %279 = arith.divf %277, %278 : vector<5x1xf32>
      %280 = vector.broadcast %272 : vector<5x1xf32> to vector<5x32xf32>
      %281 = arith.subf %266, %280 : vector<5x32xf32>
      %cst_205 = arith.constant 9.99999974E-6 : f32
      %282 = vector.broadcast %cst_205 : f32 to vector<5x1xf32>
      %283 = arith.addf %279, %282 : vector<5x1xf32>
      %284 = math.rsqrt %283 : vector<5x1xf32>
      %285 = vector.broadcast %284 : vector<5x1xf32> to vector<5x32xf32>
      %286 = arith.mulf %281, %285 : vector<5x32xf32>
      %287 = vector.broadcast %267 : vector<1x32xf32> to vector<5x32xf32>
      %288 = arith.mulf %286, %287 : vector<5x32xf32>
      %289 = vector.broadcast %268 : vector<1x32xf32> to vector<5x32xf32>
      %290 = arith.addf %288, %289 : vector<5x32xf32>
      %c0_206 = arith.constant 0 : index
      %c0_207 = arith.constant 0 : index
      %291 = vector.load %arg19[%c0_206, %c0_207] : memref<5x32xf32, #tpu.memory_space<vmem>>, vector<5x32xf32>
      tpu.vector_store %arg19[%c0_206, %c0_207], %290 {strides = array<i32>} : memref<5x32xf32, #tpu.memory_space<vmem>>, vector<5x32xf32>,
    } else {
    }
    %c0 = arith.constant 0 : index
    %c0_1 = arith.constant 0 : index
    %3 = vector.load %arg19[%c0, %c0_1] : memref<5x32xf32, #tpu.memory_space<vmem>>, vector<5x32xf32>
    %c0_2 = arith.constant 0 : index
    %c0_3 = arith.constant 0 : index
    %c0_4 = arith.constant 0 : index
    %4 = vector.load %arg6[%c0_2, %c0_3, %c0_4] : memref<1x4x32xf32, #tpu.memory_space<vmem>>, vector<1x1x32xf32>
    %5 = vector.shape_cast %4 : vector<1x1x32xf32> to vector<1x32xf32>
    %c0_5 = arith.constant 0 : index
    %c1 = arith.constant 1 : index
    %c0_6 = arith.constant 0 : index
    %6 = vector.load %arg6[%c0_5, %c1, %c0_6] : memref<1x4x32xf32, #tpu.memory_space<vmem>>, vector<1x1x32xf32>
    %7 = vector.shape_cast %6 : vector<1x1x32xf32> to vector<1x32xf32>
    %cst = arith.constant dense<0.000000e+00> : vector<5xf32>
    %8 = vector.multi_reduction <add>, %3, %cst [1] : vector<5x32xf32> to vector<5xf32>
    %9 = vector.shape_cast %8 : vector<5xf32> to vector<5x1xf32>
    %cst_7 = arith.constant 3.200000e+01 : f32
    %10 = vector.broadcast %cst_7 : f32 to vector<5x1xf32>
    %11 = arith.divf %9, %10 : vector<5x1xf32>
    %12 = vector.broadcast %11 : vector<5x1xf32> to vector<5x32xf32>
    %13 = arith.subf %3, %12 : vector<5x32xf32>
    %14 = arith.mulf %13, %13 : vector<5x32xf32>
    %cst_8 = arith.constant dense<0.000000e+00> : vector<5xf32>
    %15 = vector.multi_reduction <add>, %14, %cst_8 [1] : vector<5x32xf32> to vector<5xf32>
    %16 = vector.shape_cast %15 : vector<5xf32> to vector<5x1xf32>
    %cst_9 = arith.constant 3.200000e+01 : f32
    %17 = vector.broadcast %cst_9 : f32 to vector<5x1xf32>
    %18 = arith.divf %16, %17 : vector<5x1xf32>
    %19 = vector.broadcast %11 : vector<5x1xf32> to vector<5x32xf32>
    %20 = arith.subf %3, %19 : vector<5x32xf32>
    %cst_10 = arith.constant 9.99999974E-6 : f32
    %21 = vector.broadcast %cst_10 : f32 to vector<5x1xf32>
    %22 = arith.addf %18, %21 : vector<5x1xf32>
    %23 = math.rsqrt %22 : vector<5x1xf32>
    %24 = vector.broadcast %23 : vector<5x1xf32> to vector<5x32xf32>
    %25 = arith.mulf %20, %24 : vector<5x32xf32>
    %26 = vector.broadcast %5 : vector<1x32xf32> to vector<5x32xf32>
    %27 = arith.mulf %25, %26 : vector<5x32xf32>
    %28 = vector.broadcast %7 : vector<1x32xf32> to vector<5x32xf32>
    %29 = arith.addf %27, %28 : vector<5x32xf32>
    %30 = arith.truncf %29 : vector<5x32xf32> to vector<5x32xbf16>
    %cst_11 = arith.constant 0.000000e+00 : f32
    %31 = vector.broadcast %cst_11 : f32 to vector<5x32xf32>
    %c0_12 = arith.constant 0 : index
    %c0_13 = arith.constant 0 : index
    %c0_14 = arith.constant 0 : index
    %c0_15 = arith.constant 0 : index
    %32 = vector.load %arg7[%c0_12, %c0_13, %c0_14, %c0_15] : memref<1x4x32x8xbf16, #tpu.memory_space<vmem>>, vector<1x1x32x8xbf16>
    %33 = vector.shape_cast %32 : vector<1x1x32x8xbf16> to vector<32x8xbf16>
    %cst_16 = arith.constant dense<0.000000e+00> : vector<5x8xf32>
    %34 = tpu.matmul %30, %33, %cst_16 {dimension_numbers = #tpu.dot_dimension_numbers<[1], [0], [0], [1], [0, 0, 1, 1], [], []>} : vector<5x32xbf16>, vector<32x8xbf16>, vector<5x8xf32> -> vector<5x8xf32>
    %c0_17 = arith.constant 0 : index
    %c0_18 = arith.constant 0 : index
    %c0_19 = arith.constant 0 : index
    %c0_20 = arith.constant 0 : index
    %35 = vector.load %arg10[%c0_17, %c0_18, %c0_19, %c0_20] : memref<1x4x3x8xf32, #tpu.memory_space<vmem>>, vector<1x1x1x8xf32>
    %36 = vector.shape_cast %35 : vector<1x1x1x8xf32> to vector<1x8xf32>
    %37 = vector.broadcast %36 : vector<1x8xf32> to vector<5x8xf32>
    %38 = arith.addf %34, %37 : vector<5x8xf32>
    %39 = arith.truncf %38 : vector<5x8xf32> to vector<5x8xbf16>
    %c0_21 = arith.constant 0 : index
    %c0_22 = arith.constant 0 : index
    %c0_23 = arith.constant 0 : index
    %c0_24 = arith.constant 0 : index
    %40 = vector.load %arg8[%c0_21, %c0_22, %c0_23, %c0_24] : memref<1x4x32x8xbf16, #tpu.memory_space<vmem>>, vector<1x1x32x8xbf16>
    %41 = vector.shape_cast %40 : vector<1x1x32x8xbf16> to vector<32x8xbf16>
    %cst_25 = arith.constant dense<0.000000e+00> : vector<5x8xf32>
    %42 = tpu.matmul %30, %41, %cst_25 {dimension_numbers = #tpu.dot_dimension_numbers<[1], [0], [0], [1], [0, 0, 1, 1], [], []>} : vector<5x32xbf16>, vector<32x8xbf16>, vector<5x8xf32> -> vector<5x8xf32>
    %c0_26 = arith.constant 0 : index
    %c0_27 = arith.constant 0 : index
    %c1_28 = arith.constant 1 : index
    %c0_29 = arith.constant 0 : index
    %43 = vector.load %arg10[%c0_26, %c0_27, %c1_28, %c0_29] : memref<1x4x3x8xf32, #tpu.memory_space<vmem>>, vector<1x1x1x8xf32>
    %44 = vector.shape_cast %43 : vector<1x1x1x8xf32> to vector<1x8xf32>
    %45 = vector.broadcast %44 : vector<1x8xf32> to vector<5x8xf32>
    %46 = arith.addf %42, %45 : vector<5x8xf32>
    %47 = arith.truncf %46 : vector<5x8xf32> to vector<5x8xbf16>
    %c0_30 = arith.constant 0 : index
    %c0_31 = arith.constant 0 : index
    %c0_32 = arith.constant 0 : index
    %c0_33 = arith.constant 0 : index
    %48 = vector.load %arg9[%c0_30, %c0_31, %c0_32, %c0_33] : memref<1x4x32x8xbf16, #tpu.memory_space<vmem>>, vector<1x1x32x8xbf16>
    %49 = vector.shape_cast %48 : vector<1x1x32x8xbf16> to vector<32x8xbf16>
    %cst_34 = arith.constant dense<0.000000e+00> : vector<5x8xf32>
    %50 = tpu.matmul %30, %49, %cst_34 {dimension_numbers = #tpu.dot_dimension_numbers<[1], [0], [0], [1], [0, 0, 1, 1], [], []>} : vector<5x32xbf16>, vector<32x8xbf16>, vector<5x8xf32> -> vector<5x8xf32>
    %c0_35 = arith.constant 0 : index
    %c0_36 = arith.constant 0 : index
    %c2 = arith.constant 2 : index
    %c0_37 = arith.constant 0 : index
    %51 = vector.load %arg10[%c0_35, %c0_36, %c2, %c0_37] : memref<1x4x3x8xf32, #tpu.memory_space<vmem>>, vector<1x1x1x8xf32>
    %52 = vector.shape_cast %51 : vector<1x1x1x8xf32> to vector<1x8xf32>
    %53 = vector.broadcast %52 : vector<1x8xf32> to vector<5x8xf32>
    %54 = arith.addf %50, %53 : vector<5x8xf32>
    %55 = arith.truncf %54 : vector<5x8xf32> to vector<5x8xbf16>
    %cst_38 = arith.constant dense<0.000000e+00> : vector<5x5xf32>
    %56 = tpu.matmul %39, %47, %cst_38 {dimension_numbers = #tpu.dot_dimension_numbers<[1], [1], [0], [0], [0, 0, 1, 0], [], []>} : vector<5x8xbf16>, vector<5x8xbf16>, vector<5x5xf32> -> vector<5x5xf32>
    %cst_39 = arith.constant dense<0xFF800000> : vector<5xf32>
    %57 = vector.multi_reduction <maximumf>, %56, %cst_39 [1] : vector<5x5xf32> to vector<5xf32>
    %58 = vector.shape_cast %57 : vector<5xf32> to vector<5x1xf32>
    %59 = vector.broadcast %58 : vector<5x1xf32> to vector<5x5xf32>
    %60 = arith.subf %56, %59 : vector<5x5xf32>
    %61 = math.exp %60 : vector<5x5xf32>
    %cst_40 = arith.constant dense<0.000000e+00> : vector<5xf32>
    %62 = vector.multi_reduction <add>, %61, %cst_40 [1] : vector<5x5xf32> to vector<5xf32>
    %63 = vector.shape_cast %62 : vector<5xf32> to vector<5x1xf32>
    %64 = vector.broadcast %63 : vector<5x1xf32> to vector<5x5xf32>
    %65 = arith.divf %61, %64 : vector<5x5xf32>
    %66 = arith.truncf %65 : vector<5x5xf32> to vector<5x5xbf16>
    %cst_41 = arith.constant dense<0.000000e+00> : vector<5x8xf32>
    %67 = tpu.matmul %66, %55, %cst_41 {dimension_numbers = #tpu.dot_dimension_numbers<[1], [0], [0], [1], [0, 0, 1, 1], [], []>} : vector<5x5xbf16>, vector<5x8xbf16>, vector<5x8xf32> -> vector<5x8xf32>
    %68 = arith.truncf %67 : vector<5x8xf32> to vector<5x8xbf16>
    %c0_42 = arith.constant 0 : index
    %c0_43 = arith.constant 0 : index
    %c0_44 = arith.constant 0 : index
    %c0_45 = arith.constant 0 : index
    %69 = vector.load %arg11[%c0_42, %c0_43, %c0_44, %c0_45] : memref<1x4x8x32xbf16, #tpu.memory_space<vmem>>, vector<1x1x8x32xbf16>
    %70 = vector.shape_cast %69 : vector<1x1x8x32xbf16> to vector<8x32xbf16>
    %cst_46 = arith.constant dense<0.000000e+00> : vector<5x32xf32>
    %71 = tpu.matmul %68, %70, %cst_46 {dimension_numbers = #tpu.dot_dimension_numbers<[1], [0], [0], [1], [0, 0, 1, 1], [], []>} : vector<5x8xbf16>, vector<8x32xbf16>, vector<5x32xf32> -> vector<5x32xf32>
    %72 = arith.addf %31, %71 : vector<5x32xf32>
    %c0_47 = arith.constant 0 : index
    %c1_48 = arith.constant 1 : index
    %c0_49 = arith.constant 0 : index
    %c0_50 = arith.constant 0 : index
    %73 = vector.load %arg7[%c0_47, %c1_48, %c0_49, %c0_50] : memref<1x4x32x8xbf16, #tpu.memory_space<vmem>>, vector<1x1x32x8xbf16>
    %74 = vector.shape_cast %73 : vector<1x1x32x8xbf16> to vector<32x8xbf16>
    %cst_51 = arith.constant dense<0.000000e+00> : vector<5x8xf32>
    %75 = tpu.matmul %30, %74, %cst_51 {dimension_numbers = #tpu.dot_dimension_numbers<[1], [0], [0], [1], [0, 0, 1, 1], [], []>} : vector<5x32xbf16>, vector<32x8xbf16>, vector<5x8xf32> -> vector<5x8xf32>
    %c0_52 = arith.constant 0 : index
    %c1_53 = arith.constant 1 : index
    %c0_54 = arith.constant 0 : index
    %c0_55 = arith.constant 0 : index
    %76 = vector.load %arg10[%c0_52, %c1_53, %c0_54, %c0_55] : memref<1x4x3x8xf32, #tpu.memory_space<vmem>>, vector<1x1x1x8xf32>
    %77 = vector.shape_cast %76 : vector<1x1x1x8xf32> to vector<1x8xf32>
    %78 = vector.broadcast %77 : vector<1x8xf32> to vector<5x8xf32>
    %79 = arith.addf %75, %78 : vector<5x8xf32>
    %80 = arith.truncf %79 : vector<5x8xf32> to vector<5x8xbf16>
    %c0_56 = arith.constant 0 : index
    %c1_57 = arith.constant 1 : index
    %c0_58 = arith.constant 0 : index
    %c0_59 = arith.constant 0 : index
    %81 = vector.load %arg8[%c0_56, %c1_57, %c0_58, %c0_59] : memref<1x4x32x8xbf16, #tpu.memory_space<vmem>>, vector<1x1x32x8xbf16>
    %82 = vector.shape_cast %81 : vector<1x1x32x8xbf16> to vector<32x8xbf16>
    %cst_60 = arith.constant dense<0.000000e+00> : vector<5x8xf32>
    %83 = tpu.matmul %30, %82, %cst_60 {dimension_numbers = #tpu.dot_dimension_numbers<[1], [0], [0], [1], [0, 0, 1, 1], [], []>} : vector<5x32xbf16>, vector<32x8xbf16>, vector<5x8xf32> -> vector<5x8xf32>
    %c0_61 = arith.constant 0 : index
    %c1_62 = arith.constant 1 : index
    %c1_63 = arith.constant 1 : index
    %c0_64 = arith.constant 0 : index
    %84 = vector.load %arg10[%c0_61, %c1_62, %c1_63, %c0_64] : memref<1x4x3x8xf32, #tpu.memory_space<vmem>>, vector<1x1x1x8xf32>
    %85 = vector.shape_cast %84 : vector<1x1x1x8xf32> to vector<1x8xf32>
    %86 = vector.broadcast %85 : vector<1x8xf32> to vector<5x8xf32>
    %87 = arith.addf %83, %86 : vector<5x8xf32>
    %88 = arith.truncf %87 : vector<5x8xf32> to vector<5x8xbf16>
    %c0_65 = arith.constant 0 : index
    %c1_66 = arith.constant 1 : index
    %c0_67 = arith.constant 0 : index
    %c0_68 = arith.constant 0 : index
    %89 = vector.load %arg9[%c0_65, %c1_66, %c0_67, %c0_68] : memref<1x4x32x8xbf16, #tpu.memory_space<vmem>>, vector<1x1x32x8xbf16>
    %90 = vector.shape_cast %89 : vector<1x1x32x8xbf16> to vector<32x8xbf16>
    %cst_69 = arith.constant dense<0.000000e+00> : vector<5x8xf32>
    %91 = tpu.matmul %30, %90, %cst_69 {dimension_numbers = #tpu.dot_dimension_numbers<[1], [0], [0], [1], [0, 0, 1, 1], [], []>} : vector<5x32xbf16>, vector<32x8xbf16>, vector<5x8xf32> -> vector<5x8xf32>
    %c0_70 = arith.constant 0 : index
    %c1_71 = arith.constant 1 : index
    %c2_72 = arith.constant 2 : index
    %c0_73 = arith.constant 0 : index
    %92 = vector.load %arg10[%c0_70, %c1_71, %c2_72, %c0_73] : memref<1x4x3x8xf32, #tpu.memory_space<vmem>>, vector<1x1x1x8xf32>
    %93 = vector.shape_cast %92 : vector<1x1x1x8xf32> to vector<1x8xf32>
    %94 = vector.broadcast %93 : vector<1x8xf32> to vector<5x8xf32>
    %95 = arith.addf %91, %94 : vector<5x8xf32>
    %96 = arith.truncf %95 : vector<5x8xf32> to vector<5x8xbf16>
    %cst_74 = arith.constant dense<0.000000e+00> : vector<5x5xf32>
    %97 = tpu.matmul %80, %88, %cst_74 {dimension_numbers = #tpu.dot_dimension_numbers<[1], [1], [0], [0], [0, 0, 1, 0], [], []>} : vector<5x8xbf16>, vector<5x8xbf16>, vector<5x5xf32> -> vector<5x5xf32>
    %cst_75 = arith.constant dense<0xFF800000> : vector<5xf32>
    %98 = vector.multi_reduction <maximumf>, %97, %cst_75 [1] : vector<5x5xf32> to vector<5xf32>
    %99 = vector.shape_cast %98 : vector<5xf32> to vector<5x1xf32>
    %100 = vector.broadcast %99 : vector<5x1xf32> to vector<5x5xf32>
    %101 = arith.subf %97, %100 : vector<5x5xf32>
    %102 = math.exp %101 : vector<5x5xf32>
    %cst_76 = arith.constant dense<0.000000e+00> : vector<5xf32>
    %103 = vector.multi_reduction <add>, %102, %cst_76 [1] : vector<5x5xf32> to vector<5xf32>
    %104 = vector.shape_cast %103 : vector<5xf32> to vector<5x1xf32>
    %105 = vector.broadcast %104 : vector<5x1xf32> to vector<5x5xf32>
    %106 = arith.divf %102, %105 : vector<5x5xf32>
    %107 = arith.truncf %106 : vector<5x5xf32> to vector<5x5xbf16>
    %cst_77 = arith.constant dense<0.000000e+00> : vector<5x8xf32>
    %108 = tpu.matmul %107, %96, %cst_77 {dimension_numbers = #tpu.dot_dimension_numbers<[1], [0], [0], [1], [0, 0, 1, 1], [], []>} : vector<5x5xbf16>, vector<5x8xbf16>, vector<5x8xf32> -> vector<5x8xf32>
    %109 = arith.truncf %108 : vector<5x8xf32> to vector<5x8xbf16>
    %c0_78 = arith.constant 0 : index
    %c1_79 = arith.constant 1 : index
    %c0_80 = arith.constant 0 : index
    %c0_81 = arith.constant 0 : index
    %110 = vector.load %arg11[%c0_78, %c1_79, %c0_80, %c0_81] : memref<1x4x8x32xbf16, #tpu.memory_space<vmem>>, vector<1x1x8x32xbf16>
    %111 = vector.shape_cast %110 : vector<1x1x8x32xbf16> to vector<8x32xbf16>
    %cst_82 = arith.constant dense<0.000000e+00> : vector<5x32xf32>
    %112 = tpu.matmul %109, %111, %cst_82 {dimension_numbers = #tpu.dot_dimension_numbers<[1], [0], [0], [1], [0, 0, 1, 1], [], []>} : vector<5x8xbf16>, vector<8x32xbf16>, vector<5x32xf32> -> vector<5x32xf32>
    %113 = arith.addf %72, %112 : vector<5x32xf32>
    %c0_83 = arith.constant 0 : index
    %c2_84 = arith.constant 2 : index
    %c0_85 = arith.constant 0 : index
    %c0_86 = arith.constant 0 : index
    %114 = vector.load %arg7[%c0_83, %c2_84, %c0_85, %c0_86] : memref<1x4x32x8xbf16, #tpu.memory_space<vmem>>, vector<1x1x32x8xbf16>
    %115 = vector.shape_cast %114 : vector<1x1x32x8xbf16> to vector<32x8xbf16>
    %cst_87 = arith.constant dense<0.000000e+00> : vector<5x8xf32>
    %116 = tpu.matmul %30, %115, %cst_87 {dimension_numbers = #tpu.dot_dimension_numbers<[1], [0], [0], [1], [0, 0, 1, 1], [], []>} : vector<5x32xbf16>, vector<32x8xbf16>, vector<5x8xf32> -> vector<5x8xf32>
    %c0_88 = arith.constant 0 : index
    %c2_89 = arith.constant 2 : index
    %c0_90 = arith.constant 0 : index
    %c0_91 = arith.constant 0 : index
    %117 = vector.load %arg10[%c0_88, %c2_89, %c0_90, %c0_91] : memref<1x4x3x8xf32, #tpu.memory_space<vmem>>, vector<1x1x1x8xf32>
    %118 = vector.shape_cast %117 : vector<1x1x1x8xf32> to vector<1x8xf32>
    %119 = vector.broadcast %118 : vector<1x8xf32> to vector<5x8xf32>
    %120 = arith.addf %116, %119 : vector<5x8xf32>
    %121 = arith.truncf %120 : vector<5x8xf32> to vector<5x8xbf16>
    %c0_92 = arith.constant 0 : index
    %c2_93 = arith.constant 2 : index
    %c0_94 = arith.constant 0 : index
    %c0_95 = arith.constant 0 : index
    %122 = vector.load %arg8[%c0_92, %c2_93, %c0_94, %c0_95] : memref<1x4x32x8xbf16, #tpu.memory_space<vmem>>, vector<1x1x32x8xbf16>
    %123 = vector.shape_cast %122 : vector<1x1x32x8xbf16> to vector<32x8xbf16>
    %cst_96 = arith.constant dense<0.000000e+00> : vector<5x8xf32>
    %124 = tpu.matmul %30, %123, %cst_96 {dimension_numbers = #tpu.dot_dimension_numbers<[1], [0], [0], [1], [0, 0, 1, 1], [], []>} : vector<5x32xbf16>, vector<32x8xbf16>, vector<5x8xf32> -> vector<5x8xf32>
    %c0_97 = arith.constant 0 : index
    %c2_98 = arith.constant 2 : index
    %c1_99 = arith.constant 1 : index
    %c0_100 = arith.constant 0 : index
    %125 = vector.load %arg10[%c0_97, %c2_98, %c1_99, %c0_100] : memref<1x4x3x8xf32, #tpu.memory_space<vmem>>, vector<1x1x1x8xf32>
    %126 = vector.shape_cast %125 : vector<1x1x1x8xf32> to vector<1x8xf32>
    %127 = vector.broadcast %126 : vector<1x8xf32> to vector<5x8xf32>
    %128 = arith.addf %124, %127 : vector<5x8xf32>
    %129 = arith.truncf %128 : vector<5x8xf32> to vector<5x8xbf16>
    %c0_101 = arith.constant 0 : index
    %c2_102 = arith.constant 2 : index
    %c0_103 = arith.constant 0 : index
    %c0_104 = arith.constant 0 : index
    %130 = vector.load %arg9[%c0_101, %c2_102, %c0_103, %c0_104] : memref<1x4x32x8xbf16, #tpu.memory_space<vmem>>, vector<1x1x32x8xbf16>
    %131 = vector.shape_cast %130 : vector<1x1x32x8xbf16> to vector<32x8xbf16>
    %cst_105 = arith.constant dense<0.000000e+00> : vector<5x8xf32>
    %132 = tpu.matmul %30, %131, %cst_105 {dimension_numbers = #tpu.dot_dimension_numbers<[1], [0], [0], [1], [0, 0, 1, 1], [], []>} : vector<5x32xbf16>, vector<32x8xbf16>, vector<5x8xf32> -> vector<5x8xf32>
    %c0_106 = arith.constant 0 : index
    %c2_107 = arith.constant 2 : index
    %c2_108 = arith.constant 2 : index
    %c0_109 = arith.constant 0 : index
    %133 = vector.load %arg10[%c0_106, %c2_107, %c2_108, %c0_109] : memref<1x4x3x8xf32, #tpu.memory_space<vmem>>, vector<1x1x1x8xf32>
    %134 = vector.shape_cast %133 : vector<1x1x1x8xf32> to vector<1x8xf32>
    %135 = vector.broadcast %134 : vector<1x8xf32> to vector<5x8xf32>
    %136 = arith.addf %132, %135 : vector<5x8xf32>
    %137 = arith.truncf %136 : vector<5x8xf32> to vector<5x8xbf16>
    %cst_110 = arith.constant dense<0.000000e+00> : vector<5x5xf32>
    %138 = tpu.matmul %121, %129, %cst_110 {dimension_numbers = #tpu.dot_dimension_numbers<[1], [1], [0], [0], [0, 0, 1, 0], [], []>} : vector<5x8xbf16>, vector<5x8xbf16>, vector<5x5xf32> -> vector<5x5xf32>
    %cst_111 = arith.constant dense<0xFF800000> : vector<5xf32>
    %139 = vector.multi_reduction <maximumf>, %138, %cst_111 [1] : vector<5x5xf32> to vector<5xf32>
    %140 = vector.shape_cast %139 : vector<5xf32> to vector<5x1xf32>
    %141 = vector.broadcast %140 : vector<5x1xf32> to vector<5x5xf32>
    %142 = arith.subf %138, %141 : vector<5x5xf32>
    %143 = math.exp %142 : vector<5x5xf32>
    %cst_112 = arith.constant dense<0.000000e+00> : vector<5xf32>
    %144 = vector.multi_reduction <add>, %143, %cst_112 [1] : vector<5x5xf32> to vector<5xf32>
    %145 = vector.shape_cast %144 : vector<5xf32> to vector<5x1xf32>
    %146 = vector.broadcast %145 : vector<5x1xf32> to vector<5x5xf32>
    %147 = arith.divf %143, %146 : vector<5x5xf32>
    %148 = arith.truncf %147 : vector<5x5xf32> to vector<5x5xbf16>
    %cst_113 = arith.constant dense<0.000000e+00> : vector<5x8xf32>
    %149 = tpu.matmul %148, %137, %cst_113 {dimension_numbers = #tpu.dot_dimension_numbers<[1], [0], [0], [1], [0, 0, 1, 1], [], []>} : vector<5x5xbf16>, vector<5x8xbf16>, vector<5x8xf32> -> vector<5x8xf32>
    %150 = arith.truncf %149 : vector<5x8xf32> to vector<5x8xbf16>
    %c0_114 = arith.constant 0 : index
    %c2_115 = arith.constant 2 : index
    %c0_116 = arith.constant 0 : index
    %c0_117 = arith.constant 0 : index
    %151 = vector.load %arg11[%c0_114, %c2_115, %c0_116, %c0_117] : memref<1x4x8x32xbf16, #tpu.memory_space<vmem>>, vector<1x1x8x32xbf16>
    %152 = vector.shape_cast %151 : vector<1x1x8x32xbf16> to vector<8x32xbf16>
    %cst_118 = arith.constant dense<0.000000e+00> : vector<5x32xf32>
    %153 = tpu.matmul %150, %152, %cst_118 {dimension_numbers = #tpu.dot_dimension_numbers<[1], [0], [0], [1], [0, 0, 1, 1], [], []>} : vector<5x8xbf16>, vector<8x32xbf16>, vector<5x32xf32> -> vector<5x32xf32>
    %154 = arith.addf %113, %153 : vector<5x32xf32>
    %c0_119 = arith.constant 0 : index
    %c3 = arith.constant 3 : index
    %c0_120 = arith.constant 0 : index
    %c0_121 = arith.constant 0 : index
    %155 = vector.load %arg7[%c0_119, %c3, %c0_120, %c0_121] : memref<1x4x32x8xbf16, #tpu.memory_space<vmem>>, vector<1x1x32x8xbf16>
    %156 = vector.shape_cast %155 : vector<1x1x32x8xbf16> to vector<32x8xbf16>
    %cst_122 = arith.constant dense<0.000000e+00> : vector<5x8xf32>
    %157 = tpu.matmul %30, %156, %cst_122 {dimension_numbers = #tpu.dot_dimension_numbers<[1], [0], [0], [1], [0, 0, 1, 1], [], []>} : vector<5x32xbf16>, vector<32x8xbf16>, vector<5x8xf32> -> vector<5x8xf32>
    %c0_123 = arith.constant 0 : index
    %c3_124 = arith.constant 3 : index
    %c0_125 = arith.constant 0 : index
    %c0_126 = arith.constant 0 : index
    %158 = vector.load %arg10[%c0_123, %c3_124, %c0_125, %c0_126] : memref<1x4x3x8xf32, #tpu.memory_space<vmem>>, vector<1x1x1x8xf32>
    %159 = vector.shape_cast %158 : vector<1x1x1x8xf32> to vector<1x8xf32>
    %160 = vector.broadcast %159 : vector<1x8xf32> to vector<5x8xf32>
    %161 = arith.addf %157, %160 : vector<5x8xf32>
    %162 = arith.truncf %161 : vector<5x8xf32> to vector<5x8xbf16>
    %c0_127 = arith.constant 0 : index
    %c3_128 = arith.constant 3 : index
    %c0_129 = arith.constant 0 : index
    %c0_130 = arith.constant 0 : index
    %163 = vector.load %arg8[%c0_127, %c3_128, %c0_129, %c0_130] : memref<1x4x32x8xbf16, #tpu.memory_space<vmem>>, vector<1x1x32x8xbf16>
    %164 = vector.shape_cast %163 : vector<1x1x32x8xbf16> to vector<32x8xbf16>
    %cst_131 = arith.constant dense<0.000000e+00> : vector<5x8xf32>
    %165 = tpu.matmul %30, %164, %cst_131 {dimension_numbers = #tpu.dot_dimension_numbers<[1], [0], [0], [1], [0, 0, 1, 1], [], []>} : vector<5x32xbf16>, vector<32x8xbf16>, vector<5x8xf32> -> vector<5x8xf32>
    %c0_132 = arith.constant 0 : index
    %c3_133 = arith.constant 3 : index
    %c1_134 = arith.constant 1 : index
    %c0_135 = arith.constant 0 : index
    %166 = vector.load %arg10[%c0_132, %c3_133, %c1_134, %c0_135] : memref<1x4x3x8xf32, #tpu.memory_space<vmem>>, vector<1x1x1x8xf32>
    %167 = vector.shape_cast %166 : vector<1x1x1x8xf32> to vector<1x8xf32>
    %168 = vector.broadcast %167 : vector<1x8xf32> to vector<5x8xf32>
    %169 = arith.addf %165, %168 : vector<5x8xf32>
    %170 = arith.truncf %169 : vector<5x8xf32> to vector<5x8xbf16>
    %c0_136 = arith.constant 0 : index
    %c3_137 = arith.constant 3 : index
    %c0_138 = arith.constant 0 : index
    %c0_139 = arith.constant 0 : index
    %171 = vector.load %arg9[%c0_136, %c3_137, %c0_138, %c0_139] : memref<1x4x32x8xbf16, #tpu.memory_space<vmem>>, vector<1x1x32x8xbf16>
    %172 = vector.shape_cast %171 : vector<1x1x32x8xbf16> to vector<32x8xbf16>
    %cst_140 = arith.constant dense<0.000000e+00> : vector<5x8xf32>
    %173 = tpu.matmul %30, %172, %cst_140 {dimension_numbers = #tpu.dot_dimension_numbers<[1], [0], [0], [1], [0, 0, 1, 1], [], []>} : vector<5x32xbf16>, vector<32x8xbf16>, vector<5x8xf32> -> vector<5x8xf32>
    %c0_141 = arith.constant 0 : index
    %c3_142 = arith.constant 3 : index
    %c2_143 = arith.constant 2 : index
    %c0_144 = arith.constant 0 : index
    %174 = vector.load %arg10[%c0_141, %c3_142, %c2_143, %c0_144] : memref<1x4x3x8xf32, #tpu.memory_space<vmem>>, vector<1x1x1x8xf32>
    %175 = vector.shape_cast %174 : vector<1x1x1x8xf32> to vector<1x8xf32>
    %176 = vector.broadcast %175 : vector<1x8xf32> to vector<5x8xf32>
    %177 = arith.addf %173, %176 : vector<5x8xf32>
    %178 = arith.truncf %177 : vector<5x8xf32> to vector<5x8xbf16>
    %cst_145 = arith.constant dense<0.000000e+00> : vector<5x5xf32>
    %179 = tpu.matmul %162, %170, %cst_145 {dimension_numbers = #tpu.dot_dimension_numbers<[1], [1], [0], [0], [0, 0, 1, 0], [], []>} : vector<5x8xbf16>, vector<5x8xbf16>, vector<5x5xf32> -> vector<5x5xf32>
    %cst_146 = arith.constant dense<0xFF800000> : vector<5xf32>
    %180 = vector.multi_reduction <maximumf>, %179, %cst_146 [1] : vector<5x5xf32> to vector<5xf32>
    %181 = vector.shape_cast %180 : vector<5xf32> to vector<5x1xf32>
    %182 = vector.broadcast %181 : vector<5x1xf32> to vector<5x5xf32>
    %183 = arith.subf %179, %182 : vector<5x5xf32>
    %184 = math.exp %183 : vector<5x5xf32>
    %cst_147 = arith.constant dense<0.000000e+00> : vector<5xf32>
    %185 = vector.multi_reduction <add>, %184, %cst_147 [1] : vector<5x5xf32> to vector<5xf32>
    %186 = vector.shape_cast %185 : vector<5xf32> to vector<5x1xf32>
    %187 = vector.broadcast %186 : vector<5x1xf32> to vector<5x5xf32>
    %188 = arith.divf %184, %187 : vector<5x5xf32>
    %189 = arith.truncf %188 : vector<5x5xf32> to vector<5x5xbf16>
    %cst_148 = arith.constant dense<0.000000e+00> : vector<5x8xf32>
    %190 = tpu.matmul %189, %178, %cst_148 {dimension_numbers = #tpu.dot_dimension_numbers<[1], [0], [0], [1], [0, 0, 1, 1], [], []>} : vector<5x5xbf16>, vector<5x8xbf16>, vector<5x8xf32> -> vector<5x8xf32>
    %191 = arith.truncf %190 : vector<5x8xf32> to vector<5x8xbf16>
    %c0_149 = arith.constant 0 : index
    %c3_150 = arith.constant 3 : index
    %c0_151 = arith.constant 0 : index
    %c0_152 = arith.constant 0 : index
    %192 = vector.load %arg11[%c0_149, %c3_150, %c0_151, %c0_152] : memref<1x4x8x32xbf16, #tpu.memory_space<vmem>>, vector<1x1x8x32xbf16>
    %193 = vector.shape_cast %192 : vector<1x1x8x32xbf16> to vector<8x32xbf16>
    %cst_153 = arith.constant dense<0.000000e+00> : vector<5x32xf32>
    %194 = tpu.matmul %191, %193, %cst_153 {dimension_numbers = #tpu.dot_dimension_numbers<[1], [0], [0], [1], [0, 0, 1, 1], [], []>} : vector<5x8xbf16>, vector<8x32xbf16>, vector<5x32xf32> -> vector<5x32xf32>
    %195 = arith.addf %154, %194 : vector<5x32xf32>
    %196 = arith.addf %3, %195 : vector<5x32xf32>
    %c0_154 = arith.constant 0 : index
    %c0_155 = arith.constant 0 : index
    %c0_156 = arith.constant 0 : index
    %197 = vector.load %arg12[%c0_154, %c0_155, %c0_156] : memref<1x2x32xf32, #tpu.memory_space<vmem>>, vector<1x1x32xf32>
    %198 = vector.shape_cast %197 : vector<1x1x32xf32> to vector<1x32xf32>
    %199 = vector.broadcast %198 : vector<1x32xf32> to vector<5x32xf32>
    %200 = arith.addf %196, %199 : vector<5x32xf32>
    %c0_157 = arith.constant 0 : index
    %c2_158 = arith.constant 2 : index
    %c0_159 = arith.constant 0 : index
    %201 = vector.load %arg6[%c0_157, %c2_158, %c0_159] : memref<1x4x32xf32, #tpu.memory_space<vmem>>, vector<1x1x32xf32>
    %202 = vector.shape_cast %201 : vector<1x1x32xf32> to vector<1x32xf32>
    %c0_160 = arith.constant 0 : index
    %c3_161 = arith.constant 3 : index
    %c0_162 = arith.constant 0 : index
    %203 = vector.load %arg6[%c0_160, %c3_161, %c0_162] : memref<1x4x32xf32, #tpu.memory_space<vmem>>, vector<1x1x32xf32>
    %204 = vector.shape_cast %203 : vector<1x1x32xf32> to vector<1x32xf32>
    %cst_163 = arith.constant dense<0.000000e+00> : vector<5xf32>
    %205 = vector.multi_reduction <add>, %200, %cst_163 [1] : vector<5x32xf32> to vector<5xf32>
    %206 = vector.shape_cast %205 : vector<5xf32> to vector<5x1xf32>
    %cst_164 = arith.constant 3.200000e+01 : f32
    %207 = vector.broadcast %cst_164 : f32 to vector<5x1xf32>
    %208 = arith.divf %206, %207 : vector<5x1xf32>
    %209 = vector.broadcast %208 : vector<5x1xf32> to vector<5x32xf32>
    %210 = arith.subf %200, %209 : vector<5x32xf32>
    %211 = arith.mulf %210, %210 : vector<5x32xf32>
    %cst_165 = arith.constant dense<0.000000e+00> : vector<5xf32>
    %212 = vector.multi_reduction <add>, %211, %cst_165 [1] : vector<5x32xf32> to vector<5xf32>
    %213 = vector.shape_cast %212 : vector<5xf32> to vector<5x1xf32>
    %cst_166 = arith.constant 3.200000e+01 : f32
    %214 = vector.broadcast %cst_166 : f32 to vector<5x1xf32>
    %215 = arith.divf %213, %214 : vector<5x1xf32>
    %216 = vector.broadcast %208 : vector<5x1xf32> to vector<5x32xf32>
    %217 = arith.subf %200, %216 : vector<5x32xf32>
    %cst_167 = arith.constant 9.99999974E-6 : f32
    %218 = vector.broadcast %cst_167 : f32 to vector<5x1xf32>
    %219 = arith.addf %215, %218 : vector<5x1xf32>
    %220 = math.rsqrt %219 : vector<5x1xf32>
    %221 = vector.broadcast %220 : vector<5x1xf32> to vector<5x32xf32>
    %222 = arith.mulf %217, %221 : vector<5x32xf32>
    %223 = vector.broadcast %202 : vector<1x32xf32> to vector<5x32xf32>
    %224 = arith.mulf %222, %223 : vector<5x32xf32>
    %225 = vector.broadcast %204 : vector<1x32xf32> to vector<5x32xf32>
    %226 = arith.addf %224, %225 : vector<5x32xf32>
    %227 = arith.truncf %226 : vector<5x32xf32> to vector<5x32xbf16>
    %c0_168 = arith.constant 0 : index
    %c0_169 = arith.constant 0 : index
    %c0_170 = arith.constant 0 : index
    %228 = vector.load %arg13[%c0_168, %c0_169, %c0_170] : memref<1x32x128xbf16, #tpu.memory_space<vmem>>, vector<1x32x128xbf16>
    %229 = vector.shape_cast %228 : vector<1x32x128xbf16> to vector<32x128xbf16>
    %cst_171 = arith.constant dense<0.000000e+00> : vector<5x128xf32>
    %230 = tpu.matmul %227, %229, %cst_171 {dimension_numbers = #tpu.dot_dimension_numbers<[1], [0], [0], [1], [0, 0, 1, 1], [], []>} : vector<5x32xbf16>, vector<32x128xbf16>, vector<5x128xf32> -> vector<5x128xf32>
    %c0_172 = arith.constant 0 : index
    %c0_173 = arith.constant 0 : index
    %c0_174 = arith.constant 0 : index
    %231 = vector.load %arg14[%c0_172, %c0_173, %c0_174] : memref<1x1x128xf32, #tpu.memory_space<vmem>>, vector<1x1x128xf32>
    %232 = vector.shape_cast %231 : vector<1x1x128xf32> to vector<1x128xf32>
    %233 = vector.broadcast %232 : vector<1x128xf32> to vector<5x128xf32>
    %234 = arith.addf %230, %233 : vector<5x128xf32>
    %235 = arith.mulf %234, %234 : vector<5x128xf32>
    %236 = arith.mulf %234, %235 : vector<5x128xf32>
    %cst_175 = arith.constant 4.471500e-02 : f32
    %237 = vector.broadcast %cst_175 : f32 to vector<5x128xf32>
    %238 = arith.mulf %237, %236 : vector<5x128xf32>
    %239 = arith.addf %234, %238 : vector<5x128xf32>
    %cst_176 = arith.constant 0.797884583 : f32
    %240 = vector.broadcast %cst_176 : f32 to vector<5x128xf32>
    %241 = arith.mulf %240, %239 : vector<5x128xf32>
    %242 = math.tanh %241 : vector<5x128xf32>
    %cst_177 = arith.constant 1.000000e+00 : f32
    %243 = vector.broadcast %cst_177 : f32 to vector<5x128xf32>
    %244 = arith.addf %243, %242 : vector<5x128xf32>
    %cst_178 = arith.constant 5.000000e-01 : f32
    %245 = vector.broadcast %cst_178 : f32 to vector<5x128xf32>
    %246 = arith.mulf %245, %244 : vector<5x128xf32>
    %247 = arith.mulf %234, %246 : vector<5x128xf32>
    %248 = arith.truncf %247 : vector<5x128xf32> to vector<5x128xbf16>
    %c0_179 = arith.constant 0 : index
    %c0_180 = arith.constant 0 : index
    %c0_181 = arith.constant 0 : index
    %249 = vector.load %arg15[%c0_179, %c0_180, %c0_181] : memref<1x128x32xbf16, #tpu.memory_space<vmem>>, vector<1x128x32xbf16>
    %250 = vector.shape_cast %249 : vector<1x128x32xbf16> to vector<128x32xbf16>
    %cst_182 = arith.constant dense<0.000000e+00> : vector<5x32xf32>
    %251 = tpu.matmul %248, %250, %cst_182 {dimension_numbers = #tpu.dot_dimension_numbers<[1], [0], [0], [1], [0, 0, 1, 1], [], []>} : vector<5x128xbf16>, vector<128x32xbf16>, vector<5x32xf32> -> vector<5x32xf32>
    %252 = arith.addf %200, %251 : vector<5x32xf32>
    %c0_183 = arith.constant 0 : index
    %c1_184 = arith.constant 1 : index
    %c0_185 = arith.constant 0 : index
    %253 = vector.load %arg12[%c0_183, %c1_184, %c0_185] : memref<1x2x32xf32, #tpu.memory_space<vmem>>, vector<1x1x32xf32>
    %254 = vector.shape_cast %253 : vector<1x1x32xf32> to vector<1x32xf32>
    %255 = vector.broadcast %254 : vector<1x32xf32> to vector<5x32xf32>
    %256 = arith.addf %252, %255 : vector<5x32xf32>
    %c0_186 = arith.constant 0 : index
    %c0_187 = arith.constant 0 : index
    %257 = vector.load %arg19[%c0_186, %c0_187] : memref<5x32xf32, #tpu.memory_space<vmem>>, vector<5x32xf32>
    tpu.vector_store %arg19[%c0_186, %c0_187], %256 {strides = array<i32>} : memref<5x32xf32, #tpu.memory_space<vmem>>, vector<5x32xf32>,
    %c1_i32 = arith.constant 1 : i32
    %258 = arith.cmpi eq, %arg1, %c1_i32 : i32
    %259 = arith.extui %258 : i1 to i32
    %c0_i32_188 = arith.constant 0 : i32
    %260 = arith.cmpi ne, %259, %c0_i32_188 : i32
    scf.if %260 {
      %261 = vector.extract_strided_slice %256 {offsets = [0, 0], sizes = [1, 32], strides = [1, 1]} : vector<5x32xf32> to vector<1x32xf32>
      %c0_189 = arith.constant 0 : index
      %c0_190 = arith.constant 0 : index
      %262 = vector.load %arg16[%c0_189, %c0_190] : memref<2x32xf32, #tpu.memory_space<vmem>>, vector<1x32xf32>
      %c1_191 = arith.constant 1 : index
      %c0_192 = arith.constant 0 : index
      %263 = vector.load %arg16[%c1_191, %c0_192] : memref<2x32xf32, #tpu.memory_space<vmem>>, vector<1x32xf32>
      %cst_193 = arith.constant dense<0.000000e+00> : vector<1xf32>
      %264 = vector.multi_reduction <add>, %261, %cst_193 [1] : vector<1x32xf32> to vector<1xf32>
      %265 = vector.shape_cast %264 : vector<1xf32> to vector<1x1xf32>
      %cst_194 = arith.constant 3.200000e+01 : f32
      %266 = vector.broadcast %cst_194 : f32 to vector<1x1xf32>
      %267 = arith.divf %265, %266 : vector<1x1xf32>
      %268 = vector.broadcast %267 : vector<1x1xf32> to vector<1x32xf32>
      %269 = arith.subf %261, %268 : vector<1x32xf32>
      %270 = arith.mulf %269, %269 : vector<1x32xf32>
      %cst_195 = arith.constant dense<0.000000e+00> : vector<1xf32>
      %271 = vector.multi_reduction <add>, %270, %cst_195 [1] : vector<1x32xf32> to vector<1xf32>
      %272 = vector.shape_cast %271 : vector<1xf32> to vector<1x1xf32>
      %cst_196 = arith.constant 3.200000e+01 : f32
      %273 = vector.broadcast %cst_196 : f32 to vector<1x1xf32>
      %274 = arith.divf %272, %273 : vector<1x1xf32>
      %275 = vector.broadcast %267 : vector<1x1xf32> to vector<1x32xf32>
      %276 = arith.subf %261, %275 : vector<1x32xf32>
      %cst_197 = arith.constant 9.99999974E-6 : f32
      %277 = vector.broadcast %cst_197 : f32 to vector<1x1xf32>
      %278 = arith.addf %274, %277 : vector<1x1xf32>
      %279 = math.rsqrt %278 : vector<1x1xf32>
      %280 = vector.broadcast %279 : vector<1x1xf32> to vector<1x32xf32>
      %281 = arith.mulf %276, %280 : vector<1x32xf32>
      %282 = arith.mulf %281, %262 : vector<1x32xf32>
      %283 = arith.addf %282, %263 : vector<1x32xf32>
      %284 = arith.truncf %283 : vector<1x32xf32> to vector<1x32xbf16>
      %c0_198 = arith.constant 0 : index
      %c0_199 = arith.constant 0 : index
      %285 = vector.load %arg17[%c0_198, %c0_199] : memref<32x16xbf16, #tpu.memory_space<vmem>>, vector<32x16xbf16>
      %cst_200 = arith.constant dense<0.000000e+00> : vector<1x16xf32>
      %286 = tpu.matmul %284, %285, %cst_200 {dimension_numbers = #tpu.dot_dimension_numbers<[1], [0], [0], [1], [0, 0, 1, 1], [], []>} : vector<1x32xbf16>, vector<32x16xbf16>, vector<1x16xf32> -> vector<1x16xf32>
      %c0_201 = arith.constant 0 : index
      %c0_202 = arith.constant 0 : index
      %c0_203 = arith.constant 0 : index
      %287 = vector.load %arg18[%c0_201, %c0_202, %c0_203] : memref<1x1x16xf32, #tpu.memory_space<vmem>>, vector<1x1x16xf32>
      %288 = vector.shape_cast %287 : vector<1x1x16xf32> to vector<1x16xf32>
      %289 = vector.shape_cast %286 : vector<1x16xf32> to vector<1x1x16xf32>
      tpu.vector_store %arg18[%c0_201, %c0_202, %c0_203], %289 {strides = array<i32>} : memref<1x1x16xf32, #tpu.memory_space<vmem>>, vector<1x1x16xf32>,
    } else {
    }
    return
  }
  func.func @transform_0(%arg0: i32, %arg1: i32) -> (i32, i32, i32) {
    %c0_i32 = arith.constant 0 : i32
    %c0_i32_0 = arith.constant 0 : i32
    %c0_i32_1 = arith.constant 0 : i32
    return %arg0, %c0_i32, %c0_i32_0 : i32, i32, i32
  }
  func.func @transform_1(%arg0: i32, %arg1: i32) -> (i32, i32) {
    %c0_i32 = arith.constant 0 : i32
    %c0_i32_0 = arith.constant 0 : i32
    %c0_i32_1 = arith.constant 0 : i32
    return %c0_i32, %c0_i32_0 : i32, i32
  }
  func.func @transform_2(%arg0: i32, %arg1: i32) -> (i32, i32) {
    %c0_i32 = arith.constant 0 : i32
    %c0_i32_0 = arith.constant 0 : i32
    %c0_i32_1 = arith.constant 0 : i32
    return %c0_i32, %c0_i32_0 : i32, i32
  }
  func.func @transform_3(%arg0: i32, %arg1: i32) -> (i32, i32) {
    %c0_i32 = arith.constant 0 : i32
    %c0_i32_0 = arith.constant 0 : i32
    %c0_i32_1 = arith.constant 0 : i32
    return %c0_i32, %c0_i32_0 : i32, i32
  }
  func.func @transform_4(%arg0: i32, %arg1: i32) -> (i32, i32, i32) {
    %c0_i32 = arith.constant 0 : i32
    %c0_i32_0 = arith.constant 0 : i32
    %c0_i32_1 = arith.constant 0 : i32
    return %arg1, %c0_i32, %c0_i32_0 : i32, i32, i32
  }
  func.func @transform_5(%arg0: i32, %arg1: i32) -> (i32, i32, i32, i32) {
    %c0_i32 = arith.constant 0 : i32
    %c0_i32_0 = arith.constant 0 : i32
    %c0_i32_1 = arith.constant 0 : i32
    %c0_i32_2 = arith.constant 0 : i32
    return %arg1, %c0_i32, %c0_i32_0, %c0_i32_1 : i32, i32, i32, i32
  }
  func.func @transform_6(%arg0: i32, %arg1: i32) -> (i32, i32, i32, i32) {
    %c0_i32 = arith.constant 0 : i32
    %c0_i32_0 = arith.constant 0 : i32
    %c0_i32_1 = arith.constant 0 : i32
    %c0_i32_2 = arith.constant 0 : i32
    return %arg1, %c0_i32, %c0_i32_0, %c0_i32_1 : i32, i32, i32, i32
  }
  func.func @transform_7(%arg0: i32, %arg1: i32) -> (i32, i32, i32, i32) {
    %c0_i32 = arith.constant 0 : i32
    %c0_i32_0 = arith.constant 0 : i32
    %c0_i32_1 = arith.constant 0 : i32
    %c0_i32_2 = arith.constant 0 : i32
    return %arg1, %c0_i32, %c0_i32_0, %c0_i32_1 : i32, i32, i32, i32
  }
  func.func @transform_8(%arg0: i32, %arg1: i32) -> (i32, i32, i32, i32) {
    %c0_i32 = arith.constant 0 : i32
    %c0_i32_0 = arith.constant 0 : i32
    %c0_i32_1 = arith.constant 0 : i32
    %c0_i32_2 = arith.constant 0 : i32
    return %arg1, %c0_i32, %c0_i32_0, %c0_i32_1 : i32, i32, i32, i32
  }
  func.func @transform_9(%arg0: i32, %arg1: i32) -> (i32, i32, i32, i32) {
    %c0_i32 = arith.constant 0 : i32
    %c0_i32_0 = arith.constant 0 : i32
    %c0_i32_1 = arith.constant 0 : i32
    %c0_i32_2 = arith.constant 0 : i32
    return %arg1, %c0_i32, %c0_i32_0, %c0_i32_1 : i32, i32, i32, i32
  }
  func.func @transform_10(%arg0: i32, %arg1: i32) -> (i32, i32, i32) {
    %c0_i32 = arith.constant 0 : i32
    %c0_i32_0 = arith.constant 0 : i32
    %c0_i32_1 = arith.constant 0 : i32
    return %arg1, %c0_i32, %c0_i32_0 : i32, i32, i32
  }
  func.func @transform_11(%arg0: i32, %arg1: i32) -> (i32, i32, i32) {
    %c0_i32 = arith.constant 0 : i32
    %c0_i32_0 = arith.constant 0 : i32
    %c0_i32_1 = arith.constant 0 : i32
    return %arg1, %c0_i32, %c0_i32_0 : i32, i32, i32
  }
  func.func @transform_12(%arg0: i32, %arg1: i32) -> (i32, i32, i32) {
    %c0_i32 = arith.constant 0 : i32
    %c0_i32_0 = arith.constant 0 : i32
    %c0_i32_1 = arith.constant 0 : i32
    return %arg1, %c0_i32, %c0_i32_0 : i32, i32, i32
  }
  func.func @transform_13(%arg0: i32, %arg1: i32) -> (i32, i32, i32) {
    %c0_i32 = arith.constant 0 : i32
    %c0_i32_0 = arith.constant 0 : i32
    %c0_i32_1 = arith.constant 0 : i32
    return %arg1, %c0_i32, %c0_i32_0 : i32, i32, i32
  }
  func.func @transform_14(%arg0: i32, %arg1: i32) -> (i32, i32) {
    %c0_i32 = arith.constant 0 : i32
    %c0_i32_0 = arith.constant 0 : i32
    %c0_i32_1 = arith.constant 0 : i32
    return %c0_i32, %c0_i32_0 : i32, i32
  }
  func.func @transform_15(%arg0: i32, %arg1: i32) -> (i32, i32) {
    %c0_i32 = arith.constant 0 : i32
    %c0_i32_0 = arith.constant 0 : i32
    %c0_i32_1 = arith.constant 0 : i32
    return %c0_i32, %c0_i32_0 : i32, i32
  }
  func.func @transform_16(%arg0: i32, %arg1: i32) -> (i32, i32, i32) {
    %c0_i32 = arith.constant 0 : i32
    %c0_i32_0 = arith.constant 0 : i32
    %c0_i32_1 = arith.constant 0 : i32
    return %arg0, %c0_i32, %c0_i32_0 : i32, i32, i32
  }
}

</mosaic_0001>

<llo_original>
// kernel: frozen_openclip_visual_embedder_forward.1
$region0: #{frozen_openclip_visual_embedder_forward.1}
  #allocation0 [shape = 'u32[]', space=smem, size = 0x4, offset = 0x4, fixed_abs, tag = 'smem constant byte address 0x4 - core index']
  #allocation1 [shape = 'u32[144,128]{1,0:T(1,128)}', space=vmem, size = 0x12000, scoped, tag = 'internal scratch']
  #allocation2 [shape = 'f32[5,32]{1,0:T(8,128)}', space=vmem, size = 0x1000, scoped, tag = 'scratch operand']
  %s0 = inlined_call_operand.vmem [shape: bf16[2,5,192], index: 0, kind: input, shape index: {}]
  %s1 = inlined_call_operand.vmem [shape: bf16[192,32], index: 1, kind: input, shape index: {}]
  %s2 = inlined_call_operand.vmem [shape: f32[5,32], index: 2, kind: input, shape index: {}]
  %s3 = inlined_call_operand.vmem [shape: f32[2,32], index: 3, kind: input, shape index: {}]
  %s4 = inlined_call_operand.vmem [shape: f32[2,4,32], index: 4, kind: input, shape index: {}]
  %s5 = inlined_call_operand.vmem [shape: bf16[2,4,32,8], index: 5, kind: input, shape index: {}]
  %s6 = inlined_call_operand.vmem [shape: bf16[2,4,32,8], index: 6, kind: input, shape index: {}]
  %s7 = inlined_call_operand.vmem [shape: bf16[2,4,32,8], index: 7, kind: input, shape index: {}]
  %s8 = inlined_call_operand.vmem [shape: f32[2,4,3,8], index: 8, kind: input, shape index: {}]
  %s9 = inlined_call_operand.vmem [shape: bf16[2,4,8,32], index: 9, kind: input, shape index: {}]
  %s10 = inlined_call_operand.vmem [shape: f32[2,2,32], index: 10, kind: input, shape index: {}]
  %s11 = inlined_call_operand.vmem [shape: bf16[2,32,128], index: 11, kind: input, shape index: {}]
  %s12 = inlined_call_operand.vmem [shape: f32[2,1,128], index: 12, kind: input, shape index: {}]
  %s13 = inlined_call_operand.vmem [shape: bf16[2,128,32], index: 13, kind: input, shape index: {}]
  %s14 = inlined_call_operand.vmem [shape: f32[2,32], index: 14, kind: input, shape index: {}]
  %s15 = inlined_call_operand.vmem [shape: bf16[32,16], index: 15, kind: input, shape index: {}]
  %s16 = inlined_call_operand.hbm [shape: f32[2,1,16], index: 16, kind: output, shape index: {}]
  %s17 = sld [smem:[#allocation0]]
  $region105: #{frozen_openclip_visual_embedder_forward.1} parent=0
    _
  %s19 = ssub.s32 1, %s17
  %s20 = scalar_select 0, %s19, %s17
  $region1: #{frozen_openclip_visual_embedder_forward.1} parent=0
    #allocation3 [shape = 'u8[1024]{0}', space=vmem, size = 0x400, scoped, tag = 'output window, operand 0']
    #allocation4 [shape = 's32[2]{0}', space=sflag, size = 0x8, scoped, tag = 'scoped memory for frozen_openclip_visual_embedder_forward.1']
    %21 = vsyncpa [#allocation4], 0
    %s22 = scalar_lea.sflag [#allocation4], 1
    %23 = vsyncpa %s22, 0
    loop: start=0, step=1, limit=6
    $region2: #{frozen_openclip_visual_embedder_forward.1} parent=1 // loop_pre_header
      _
    $region3: #{frozen_openclip_visual_embedder_forward.1} parent=1 // loop_header
      %s25 = sphi 0, %s29
      %p26 = scmp.ge.s32.totalorder %s25, 6
      %s32 = sphi 0, %s44
      %s33 = sphi 0, %s40
      %s34 = sphi 0, %s32
      %s35 = sphi 0, %s33
      %s36 = sphi 0, %s34
      %s37 = sphi 0, %s35
      %s47 = sphi 0, %s49
      %s50 = sphi 0, %s47
      %s51 = sphi 0, %s50
      %s67 = sphi 0, %s51
      %s71 = sphi 0, %s71
      %s73 = sphi 0, %s71
      %s74 = sphi 0, %s73
      %s88 = sphi 0, %s74
      %s92 = sphi 0, %s92
      %s94 = sphi 0, %s92
      %s95 = sphi 0, %s94
      %s109 = sphi 0, %s95
      %s113 = sphi 0, %s113
      %s115 = sphi 0, %s113
      %s116 = sphi 0, %s115
      %s130 = sphi 0, %s116
      %s136 = sphi 0, %s138
      %s139 = sphi 0, %s136
      %s140 = sphi 0, %s139
      %s156 = sphi 0, %s140
      %s162 = sphi 0, %s164
      %s165 = sphi 0, %s162
      %s166 = sphi 0, %s165
      %s182 = sphi 0, %s166
      %s188 = sphi 0, %s190
      %s191 = sphi 0, %s188
      %s192 = sphi 0, %s191
      %s208 = sphi 0, %s192
      %s214 = sphi 0, %s216
      %s217 = sphi 0, %s214
      %s218 = sphi 0, %s217
      %s234 = sphi 0, %s218
      %s240 = sphi 0, %s242
      %s243 = sphi 0, %s240
      %s244 = sphi 0, %s243
      %s260 = sphi 0, %s244
      %s266 = sphi 0, %s268
      %s269 = sphi 0, %s266
      %s270 = sphi 0, %s269
      %s286 = sphi 0, %s270
      %s292 = sphi 0, %s294
      %s295 = sphi 0, %s292
      %s296 = sphi 0, %s295
      %s312 = sphi 0, %s296
      %s318 = sphi 0, %s320
      %s321 = sphi 0, %s318
      %s322 = sphi 0, %s321
      %s338 = sphi 0, %s322
      %s344 = sphi 0, %s346
      %s347 = sphi 0, %s344
      %s348 = sphi 0, %s347
      %s364 = sphi 0, %s348
      %s370 = sphi 0, %s372
      %s373 = sphi 0, %s370
      %s374 = sphi 0, %s373
      %s390 = sphi 0, %s374
      %s394 = sphi 0, %s394
      %s396 = sphi 0, %s394
      %s397 = sphi 0, %s396
      %s411 = sphi 0, %s397
      %s415 = sphi 0, %s415
      %s417 = sphi 0, %s415
      %s418 = sphi 0, %s417
      %s432 = sphi 0, %s418
      %s438 = sphi 0, %s440
      %s441 = sphi 0, %s438
      %s442 = sphi 0, %s441
      %s458 = sphi 0, %s442
    $region4: #{frozen_openclip_visual_embedder_forward.1} parent=1 // loop_header_branch
      %28 = sbr.rel (%p26) target = $region8
    $region5: #{frozen_openclip_visual_embedder_forward.1} parent=1 // loop_body
      %s30 = ssub.s32 %s25, 1
      %s31 = ssub.s32 %s25, 2
      %s38 = sadd.s32 1, %s33
      %p39 = scmp.ge.s32.totalorder %s38, 2
      %s40 = scalar_select %p39, 0, %s38
      %s41 = sadd.s32 1, %s32
      %s42 = scalar_select %p39, %s41, %s32
      %p43 = scmp.ge.s32.totalorder %s42, 2
      %s44 = scalar_select %p43, 0, %s42
      %s45 = ssub.s32 %s32, %s44
      %p46 = scmp.eq.s32.totalorder %s45, 0
      %s48 = sadd.s32 %s47, 1
      %s49 = scalar_select %p46, %s47, %s48
      %p52 = pneg %p46
      %p53 = scmp.eq.s32.totalorder %s25, 3
      %p54 = por %p52, %p53
      %p55 = scmp.ne.s32.totalorder %s47, %s50
      %p56 = scmp.eq.s32.totalorder %s25, 0
      %p57 = por %p55, %p56
      %p58 = scmp.ne.s32.totalorder %s47, %s50
      %p59 = scmp.eq.s32.totalorder %s30, 3
      %p60 = por %p58, %p59
      %p61 = scmp.ne.s32.totalorder %s50, %s51
      %p62 = scmp.eq.s32.totalorder %s30, 0
      %p63 = por %p61, %p62
      %p64 = scmp.ne.s32.totalorder %s50, %s51
      %p65 = scmp.eq.s32.totalorder %s31, 3
      %p66 = por %p64, %p65
      %p68 = scmp.ne.s32.totalorder %s51, %s67
      %p69 = scmp.eq.s32.totalorder %s31, 0
      %p70 = por %p68, %p69
      %s72 = sadd.s32 %s71, 1
      %p75 = scmp.eq.s32.totalorder %s25, 3
      %p76 = scmp.ne.s32.totalorder %s71, %s73
      %p77 = scmp.eq.s32.totalorder %s25, 0
      %p78 = por %p76, %p77
      %p79 = scmp.ne.s32.totalorder %s71, %s73
      %p80 = scmp.eq.s32.totalorder %s30, 3
      %p81 = por %p79, %p80
      %p82 = scmp.ne.s32.totalorder %s73, %s74
      %p83 = scmp.eq.s32.totalorder %s30, 0
      %p84 = por %p82, %p83
      %p85 = scmp.ne.s32.totalorder %s73, %s74
      %p86 = scmp.eq.s32.totalorder %s31, 3
      %p87 = por %p85, %p86
      %p89 = scmp.ne.s32.totalorder %s74, %s88
      %p90 = scmp.eq.s32.totalorder %s31, 0
      %p91 = por %p89, %p90
      %s93 = sadd.s32 %s92, 1
      %p96 = scmp.eq.s32.totalorder %s25, 3
      %p97 = scmp.ne.s32.totalorder %s92, %s94
      %p98 = scmp.eq.s32.totalorder %s25, 0
      %p99 = por %p97, %p98
      %p100 = scmp.ne.s32.totalorder %s92, %s94
      %p101 = scmp.eq.s32.totalorder %s30, 3
      %p102 = por %p100, %p101
      %p103 = scmp.ne.s32.totalorder %s94, %s95
      %p104 = scmp.eq.s32.totalorder %s30, 0
      %p105 = por %p103, %p104
      %p106 = scmp.ne.s32.totalorder %s94, %s95
      %p107 = scmp.eq.s32.totalorder %s31, 3
      %p108 = por %p106, %p107
      %p110 = scmp.ne.s32.totalorder %s95, %s109
      %p111 = scmp.eq.s32.totalorder %s31, 0
      %p112 = por %p110, %p111
      %s114 = sadd.s32 %s113, 1
      %p117 = scmp.eq.s32.totalorder %s25, 3
      %p118 = scmp.ne.s32.totalorder %s113, %s115
      %p119 = scmp.eq.s32.totalorder %s25, 0
      %p120 = por %p118, %p119
      %p121 = scmp.ne.s32.totalorder %s113, %s115
      %p122 = scmp.eq.s32.totalorder %s30, 3
      %p123 = por %p121, %p122
      %p124 = scmp.ne.s32.totalorder %s115, %s116
      %p125 = scmp.eq.s32.totalorder %s30, 0
      %p126 = por %p124, %p125
      %p127 = scmp.ne.s32.totalorder %s115, %s116
      %p128 = scmp.eq.s32.totalorder %s31, 3
      %p129 = por %p127, %p128
      %p131 = scmp.ne.s32.totalorder %s116, %s130
      %p132 = scmp.eq.s32.totalorder %s31, 0
      %p133 = por %p131, %p132
      %s134 = ssub.s32 %s33, %s40
      %p135 = scmp.eq.s32.totalorder %s134, 0
      %s137 = sadd.s32 %s136, 1
      %s138 = scalar_select %p135, %s136, %s137
      %p141 = pneg %p135
      %p142 = scmp.eq.s32.totalorder %s25, 3
      %p143 = por %p141, %p142
      %p144 = scmp.ne.s32.totalorder %s136, %s139
      %p145 = scmp.eq.s32.totalorder %s25, 0
      %p146 = por %p144, %p145
      %p147 = scmp.ne.s32.totalorder %s136, %s139
      %p148 = scmp.eq.s32.totalorder %s30, 3
      %p149 = por %p147, %p148
      %p150 = scmp.ne.s32.totalorder %s139, %s140
      %p151 = scmp.eq.s32.totalorder %s30, 0
      %p152 = por %p150, %p151
      %p153 = scmp.ne.s32.totalorder %s139, %s140
      %p154 = scmp.eq.s32.totalorder %s31, 3
      %p155 = por %p153, %p154
      %p157 = scmp.ne.s32.totalorder %s140, %s156
      %p158 = scmp.eq.s32.totalorder %s31, 0
      %p159 = por %p157, %p158
      %s160 = ssub.s32 %s33, %s40
      %p161 = scmp.eq.s32.totalorder %s160, 0
      %s163 = sadd.s32 %s162, 1
      %s164 = scalar_select %p161, %s162, %s163
      %p167 = pneg %p161
      %p168 = scmp.eq.s32.totalorder %s25, 3
      %p169 = por %p167, %p168
      %p170 = scmp.ne.s32.totalorder %s162, %s165
      %p171 = scmp.eq.s32.totalorder %s25, 0
      %p172 = por %p170, %p171
      %p173 = scmp.ne.s32.totalorder %s162, %s165
      %p174 = scmp.eq.s32.totalorder %s30, 3
      %p175 = por %p173, %p174
      %p176 = scmp.ne.s32.totalorder %s165, %s166
      %p177 = scmp.eq.s32.totalorder %s30, 0
      %p178 = por %p176, %p177
      %p179 = scmp.ne.s32.totalorder %s165, %s166
      %p180 = scmp.eq.s32.totalorder %s31, 3
      %p181 = por %p179, %p180
      %p183 = scmp.ne.s32.totalorder %s166, %s182
      %p184 = scmp.eq.s32.totalorder %s31, 0
      %p185 = por %p183, %p184
      %s186 = ssub.s32 %s33, %s40
      %p187 = scmp.eq.s32.totalorder %s186, 0
      %s189 = sadd.s32 %s188, 1
      %s190 = scalar_select %p187, %s188, %s189
      %p193 = pneg %p187
      %p194 = scmp.eq.s32.totalorder %s25, 3
      %p195 = por %p193, %p194
      %p196 = scmp.ne.s32.totalorder %s188, %s191
      %p197 = scmp.eq.s32.totalorder %s25, 0
      %p198 = por %p196, %p197
      %p199 = scmp.ne.s32.totalorder %s188, %s191
      %p200 = scmp.eq.s32.totalorder %s30, 3
      %p201 = por %p199, %p200
      %p202 = scmp.ne.s32.totalorder %s191, %s192
      %p203 = scmp.eq.s32.totalorder %s30, 0
      %p204 = por %p202, %p203
      %p205 = scmp.ne.s32.totalorder %s191, %s192
      %p206 = scmp.eq.s32.totalorder %s31, 3
      %p207 = por %p205, %p206
      %p209 = scmp.ne.s32.totalorder %s192, %s208
      %p210 = scmp.eq.s32.totalorder %s31, 0
      %p211 = por %p209, %p210
      %s212 = ssub.s32 %s33, %s40
      %p213 = scmp.eq.s32.totalorder %s212, 0
      %s215 = sadd.s32 %s214, 1
      %s216 = scalar_select %p213, %s214, %s215
      %p219 = pneg %p213
      %p220 = scmp.eq.s32.totalorder %s25, 3
      %p221 = por %p219, %p220
      %p222 = scmp.ne.s32.totalorder %s214, %s217
      %p223 = scmp.eq.s32.totalorder %s25, 0
      %p224 = por %p222, %p223
      %p225 = scmp.ne.s32.totalorder %s214, %s217
      %p226 = scmp.eq.s32.totalorder %s30, 3
      %p227 = por %p225, %p226
      %p228 = scmp.ne.s32.totalorder %s217, %s218
      %p229 = scmp.eq.s32.totalorder %s30, 0
      %p230 = por %p228, %p229
      %p231 = scmp.ne.s32.totalorder %s217, %s218
      %p232 = scmp.eq.s32.totalorder %s31, 3
      %p233 = por %p231, %p232
      %p235 = scmp.ne.s32.totalorder %s218, %s234
      %p236 = scmp.eq.s32.totalorder %s31, 0
      %p237 = por %p235, %p236
      %s238 = ssub.s32 %s33, %s40
      %p239 = scmp.eq.s32.totalorder %s238, 0
      %s241 = sadd.s32 %s240, 1
      %s242 = scalar_select %p239, %s240, %s241
      %p245 = pneg %p239
      %p246 = scmp.eq.s32.totalorder %s25, 3
      %p247 = por %p245, %p246
      %p248 = scmp.ne.s32.totalorder %s240, %s243
      %p249 = scmp.eq.s32.totalorder %s25, 0
      %p250 = por %p248, %p249
      %p251 = scmp.ne.s32.totalorder %s240, %s243
      %p252 = scmp.eq.s32.totalorder %s30, 3
      %p253 = por %p251, %p252
      %p254 = scmp.ne.s32.totalorder %s243, %s244
      %p255 = scmp.eq.s32.totalorder %s30, 0
      %p256 = por %p254, %p255
      %p257 = scmp.ne.s32.totalorder %s243, %s244
      %p258 = scmp.eq.s32.totalorder %s31, 3
      %p259 = por %p257, %p258
      %p261 = scmp.ne.s32.totalorder %s244, %s260
      %p262 = scmp.eq.s32.totalorder %s31, 0
      %p263 = por %p261, %p262
      %s264 = ssub.s32 %s33, %s40
      %p265 = scmp.eq.s32.totalorder %s264, 0
      %s267 = sadd.s32 %s266, 1
      %s268 = scalar_select %p265, %s266, %s267
      %p271 = pneg %p265
      %p272 = scmp.eq.s32.totalorder %s25, 3
      %p273 = por %p271, %p272
      %p274 = scmp.ne.s32.totalorder %s266, %s269
      %p275 = scmp.eq.s32.totalorder %s25, 0
      %p276 = por %p274, %p275
      %p277 = scmp.ne.s32.totalorder %s266, %s269
      %p278 = scmp.eq.s32.totalorder %s30, 3
      %p279 = por %p277, %p278
      %p280 = scmp.ne.s32.totalorder %s269, %s270
      %p281 = scmp.eq.s32.totalorder %s30, 0
      %p282 = por %p280, %p281
      %p283 = scmp.ne.s32.totalorder %s269, %s270
      %p284 = scmp.eq.s32.totalorder %s31, 3
      %p285 = por %p283, %p284
      %p287 = scmp.ne.s32.totalorder %s270, %s286
      %p288 = scmp.eq.s32.totalorder %s31, 0
      %p289 = por %p287, %p288
      %s290 = ssub.s32 %s33, %s40
      %p291 = scmp.eq.s32.totalorder %s290, 0
      %s293 = sadd.s32 %s292, 1
      %s294 = scalar_select %p291, %s292, %s293
      %p297 = pneg %p291
      %p298 = scmp.eq.s32.totalorder %s25, 3
      %p299 = por %p297, %p298
      %p300 = scmp.ne.s32.totalorder %s292, %s295
      %p301 = scmp.eq.s32.totalorder %s25, 0
      %p302 = por %p300, %p301
      %p303 = scmp.ne.s32.totalorder %s292, %s295
      %p304 = scmp.eq.s32.totalorder %s30, 3
      %p305 = por %p303, %p304
      %p306 = scmp.ne.s32.totalorder %s295, %s296
      %p307 = scmp.eq.s32.totalorder %s30, 0
      %p308 = por %p306, %p307
      %p309 = scmp.ne.s32.totalorder %s295, %s296
      %p310 = scmp.eq.s32.totalorder %s31, 3
      %p311 = por %p309, %p310
      %p313 = scmp.ne.s32.totalorder %s296, %s312
      %p314 = scmp.eq.s32.totalorder %s31, 0
      %p315 = por %p313, %p314
      %s316 = ssub.s32 %s33, %s40
      %p317 = scmp.eq.s32.totalorder %s316, 0
      %s319 = sadd.s32 %s318, 1
      %s320 = scalar_select %p317, %s318, %s319
      %p323 = pneg %p317
      %p324 = scmp.eq.s32.totalorder %s25, 3
      %p325 = por %p323, %p324
      %p326 = scmp.ne.s32.totalorder %s318, %s321
      %p327 = scmp.eq.s32.totalorder %s25, 0
      %p328 = por %p326, %p327
      %p329 = scmp.ne.s32.totalorder %s318, %s321
      %p330 = scmp.eq.s32.totalorder %s30, 3
      %p331 = por %p329, %p330
      %p332 = scmp.ne.s32.totalorder %s321, %s322
      %p333 = scmp.eq.s32.totalorder %s30, 0
      %p334 = por %p332, %p333
      %p335 = scmp.ne.s32.totalorder %s321, %s322
      %p336 = scmp.eq.s32.totalorder %s31, 3
      %p337 = por %p335, %p336
      %p339 = scmp.ne.s32.totalorder %s322, %s338
      %p340 = scmp.eq.s32.totalorder %s31, 0
      %p341 = por %p339, %p340
      %s342 = ssub.s32 %s33, %s40
      %p343 = scmp.eq.s32.totalorder %s342, 0
      %s345 = sadd.s32 %s344, 1
      %s346 = scalar_select %p343, %s344, %s345
      %p349 = pneg %p343
      %p350 = scmp.eq.s32.totalorder %s25, 3
      %p351 = por %p349, %p350
      %p352 = scmp.ne.s32.totalorder %s344, %s347
      %p353 = scmp.eq.s32.totalorder %s25, 0
      %p354 = por %p352, %p353
      %p355 = scmp.ne.s32.totalorder %s344, %s347
      %p356 = scmp.eq.s32.totalorder %s30, 3
      %p357 = por %p355, %p356
      %p358 = scmp.ne.s32.totalorder %s347, %s348
      %p359 = scmp.eq.s32.totalorder %s30, 0
      %p360 = por %p358, %p359
      %p361 = scmp.ne.s32.totalorder %s347, %s348
      %p362 = scmp.eq.s32.totalorder %s31, 3
      %p363 = por %p361, %p362
      %p365 = scmp.ne.s32.totalorder %s348, %s364
      %p366 = scmp.eq.s32.totalorder %s31, 0
      %p367 = por %p365, %p366
      %s368 = ssub.s32 %s33, %s40
      %p369 = scmp.eq.s32.totalorder %s368, 0
      %s371 = sadd.s32 %s370, 1
      %s372 = scalar_select %p369, %s370, %s371
      %p375 = pneg %p369
      %p376 = scmp.eq.s32.totalorder %s25, 3
      %p377 = por %p375, %p376
      %p378 = scmp.ne.s32.totalorder %s370, %s373
      %p379 = scmp.eq.s32.totalorder %s25, 0
      %p380 = por %p378, %p379
      %p381 = scmp.ne.s32.totalorder %s370, %s373
      %p382 = scmp.eq.s32.totalorder %s30, 3
      %p383 = por %p381, %p382
      %p384 = scmp.ne.s32.totalorder %s373, %s374
      %p385 = scmp.eq.s32.totalorder %s30, 0
      %p386 = por %p384, %p385
      %p387 = scmp.ne.s32.totalorder %s373, %s374
      %p388 = scmp.eq.s32.totalorder %s31, 3
      %p389 = por %p387, %p388
      %p391 = scmp.ne.s32.totalorder %s374, %s390
      %p392 = scmp.eq.s32.totalorder %s31, 0
      %p393 = por %p391, %p392
      %s395 = sadd.s32 %s394, 1
      %p398 = scmp.eq.s32.totalorder %s25, 3
      %p399 = scmp.ne.s32.totalorder %s394, %s396
      %p400 = scmp.eq.s32.totalorder %s25, 0
      %p401 = por %p399, %p400
      %p402 = scmp.ne.s32.totalorder %s394, %s396
      %p403 = scmp.eq.s32.totalorder %s30, 3
      %p404 = por %p402, %p403
      %p405 = scmp.ne.s32.totalorder %s396, %s397
      %p406 = scmp.eq.s32.totalorder %s30, 0
      %p407 = por %p405, %p406
      %p408 = scmp.ne.s32.totalorder %s396, %s397
      %p409 = scmp.eq.s32.totalorder %s31, 3
      %p410 = por %p408, %p409
      %p412 = scmp.ne.s32.totalorder %s397, %s411
      %p413 = scmp.eq.s32.totalorder %s31, 0
      %p414 = por %p412, %p413
      %s416 = sadd.s32 %s415, 1
      %p419 = scmp.eq.s32.totalorder %s25, 3
      %p420 = scmp.ne.s32.totalorder %s415, %s417
      %p421 = scmp.eq.s32.totalorder %s25, 0
      %p422 = por %p420, %p421
      %p423 = scmp.ne.s32.totalorder %s415, %s417
      %p424 = scmp.eq.s32.totalorder %s30, 3
      %p425 = por %p423, %p424
      %p426 = scmp.ne.s32.totalorder %s417, %s418
      %p427 = scmp.eq.s32.totalorder %s30, 0
      %p428 = por %p426, %p427
      %p429 = scmp.ne.s32.totalorder %s417, %s418
      %p430 = scmp.eq.s32.totalorder %s31, 3
      %p431 = por %p429, %p430
      %p433 = scmp.ne.s32.totalorder %s418, %s432
      %p434 = scmp.eq.s32.totalorder %s31, 0
      %p435 = por %p433, %p434
      %s436 = ssub.s32 %s32, %s44
      %p437 = scmp.eq.s32.totalorder %s436, 0
      %s439 = sadd.s32 %s438, 1
      %s440 = scalar_select %p437, %s438, %s439
      %p443 = pneg %p437
      %p444 = scmp.eq.s32.totalorder %s25, 3
      %p445 = por %p443, %p444
      %p446 = scmp.ne.s32.totalorder %s438, %s441
      %p447 = scmp.eq.s32.totalorder %s25, 0
      %p448 = por %p446, %p447
      %p449 = scmp.ne.s32.totalorder %s438, %s441
      %p450 = scmp.eq.s32.totalorder %s30, 3
      %p451 = por %p449, %p450
      %p452 = scmp.ne.s32.totalorder %s441, %s442
      %p453 = scmp.eq.s32.totalorder %s30, 0
      %p454 = por %p452, %p453
      %p455 = scmp.ne.s32.totalorder %s441, %s442
      %p456 = scmp.eq.s32.totalorder %s31, 3
      %p457 = por %p455, %p456
      %p459 = scmp.ne.s32.totalorder %s442, %s458
      %p460 = scmp.eq.s32.totalorder %s31, 0
      %p461 = por %p459, %p460
      %p462 = scmp.le.s32.totalorder 1, %s25
      %p463 = scmp.lt.s32.totalorder %s25, 5
      %p464 = pnand %p462, %p463
      %p465 = pneg %p464
      // Predicated region
      $region9: #{frozen_openclip_visual_embedder_forward.1} parent=5 // pred_check
        _
      $region10: #{frozen_openclip_visual_embedder_forward.1} parent=5 // pred_check_branch
        %467 = sbr.rel (%p464) target = $region12
      $region11: #{frozen_openclip_visual_embedder_forward.1} parent=5 // pred_region
        %s468 = ssub.s32 %s25, 1
        // Predicated region
        $region13: #{frozen_openclip_visual_embedder_forward.1} parent=11 // pred_check
          %p469 = pneg %p84
        $region14: #{frozen_openclip_visual_embedder_forward.1} parent=11 // pred_check_branch
          %471 = sbr.rel (%p469) target = $region16
        $region15: #{frozen_openclip_visual_embedder_forward.1} parent=11 // pred_region
          _
        $region16: #{frozen_openclip_visual_embedder_forward.1} parent=11 // pred_fallthru
          _
        // Predicated region
        $region17: #{frozen_openclip_visual_embedder_forward.1} parent=11 // pred_check
          %p472 = pneg %p105
        $region18: #{frozen_openclip_visual_embedder_forward.1} parent=11 // pred_check_branch
          %474 = sbr.rel (%p472) target = $region20
        $region19: #{frozen_openclip_visual_embedder_forward.1} parent=11 // pred_region
          _
        $region20: #{frozen_openclip_visual_embedder_forward.1} parent=11 // pred_fallthru
          _
        // Predicated region
        $region21: #{frozen_openclip_visual_embedder_forward.1} parent=11 // pred_check
          %p475 = pneg %p126
        $region22: #{frozen_openclip_visual_embedder_forward.1} parent=11 // pred_check_branch
          %477 = sbr.rel (%p475) target = $region24
        $region23: #{frozen_openclip_visual_embedder_forward.1} parent=11 // pred_region
          _
        $region24: #{frozen_openclip_visual_embedder_forward.1} parent=11 // pred_fallthru
          _
        // Predicated region
        $region25: #{frozen_openclip_visual_embedder_forward.1} parent=11 // pred_check
          %p478 = pneg %p407
        $region26: #{frozen_openclip_visual_embedder_forward.1} parent=11 // pred_check_branch
          %480 = sbr.rel (%p478) target = $region28
        $region27: #{frozen_openclip_visual_embedder_forward.1} parent=11 // pred_region
          _
        $region28: #{frozen_openclip_visual_embedder_forward.1} parent=11 // pred_fallthru
          _
        // Predicated region
        $region29: #{frozen_openclip_visual_embedder_forward.1} parent=11 // pred_check
          %p481 = pneg %p428
        $region30: #{frozen_openclip_visual_embedder_forward.1} parent=11 // pred_check_branch
          %483 = sbr.rel (%p481) target = $region32
        $region31: #{frozen_openclip_visual_embedder_forward.1} parent=11 // pred_region
          _
        $region32: #{frozen_openclip_visual_embedder_forward.1} parent=11 // pred_fallthru
          _
      $region12: #{frozen_openclip_visual_embedder_forward.1} parent=5 // pred_fallthru
        _
      %p484 = scmp.lt.s32.totalorder %s25, 4
      // Predicated region
      $region33: #{frozen_openclip_visual_embedder_forward.1} parent=5 // pred_check
        %p485 = pneg %p484
      $region34: #{frozen_openclip_visual_embedder_forward.1} parent=5 // pred_check_branch
        %487 = sbr.rel (%p485) target = $region36
      $region35: #{frozen_openclip_visual_embedder_forward.1} parent=5 // pred_region
        // Predicated region
        $region37: #{frozen_openclip_visual_embedder_forward.1} parent=35 // pred_check
          %p488 = pneg %p57
        $region38: #{frozen_openclip_visual_embedder_forward.1} parent=35 // pred_check_branch
          %490 = sbr.rel (%p488) target = $region40
        $region39: #{frozen_openclip_visual_embedder_forward.1} parent=35 // pred_region
          %p491 = scmp.lt.s32.totalorder %s32, 1
          %s492 = scalar_select %p491, %s32, 1
          %s493 = smul.addr %s492, 2
          %s494 = smul.addr %s493, 4
          %s495 = scalar_lea.vmem %s0, %s494
        $region40: #{frozen_openclip_visual_embedder_forward.1} parent=35 // pred_fallthru
          _
        // Predicated region
        $region41: #{frozen_openclip_visual_embedder_forward.1} parent=35 // pred_check
          %p496 = pneg %p146
        $region42: #{frozen_openclip_visual_embedder_forward.1} parent=35 // pred_check_branch
          %498 = sbr.rel (%p496) target = $region44
        $region43: #{frozen_openclip_visual_embedder_forward.1} parent=35 // pred_region
          %p499 = scmp.lt.s32.totalorder %s33, 1
          %s500 = scalar_select %p499, %s33, 1
          %s501 = smul.addr %s500, 4
          %s502 = scalar_lea.vmem %s4, %s501
        $region44: #{frozen_openclip_visual_embedder_forward.1} parent=35 // pred_fallthru
          _
        // Predicated region
        $region45: #{frozen_openclip_visual_embedder_forward.1} parent=35 // pred_check
          %p503 = pneg %p172
        $region46: #{frozen_openclip_visual_embedder_forward.1} parent=35 // pred_check_branch
          %505 = sbr.rel (%p503) target = $region48
        $region47: #{frozen_openclip_visual_embedder_forward.1} parent=35 // pred_region
          %p506 = scmp.lt.s32.totalorder %s33, 1
          %s507 = scalar_select %p506, %s33, 1
          %s508 = smul.addr %s507, 16
          %s509 = smul.addr %s508, 4
          %s510 = scalar_lea.vmem %s5, %s509
        $region48: #{frozen_openclip_visual_embedder_forward.1} parent=35 // pred_fallthru
          _
        // Predicated region
        $region49: #{frozen_openclip_visual_embedder_forward.1} parent=35 // pred_check
          %p511 = pneg %p198
        $region50: #{frozen_openclip_visual_embedder_forward.1} parent=35 // pred_check_branch
          %513 = sbr.rel (%p511) target = $region52
        $region51: #{frozen_openclip_visual_embedder_forward.1} parent=35 // pred_region
          %p514 = scmp.lt.s32.totalorder %s33, 1
          %s515 = scalar_select %p514, %s33, 1
          %s516 = smul.addr %s515, 16
          %s517 = smul.addr %s516, 4
          %s518 = scalar_lea.vmem %s6, %s517
        $region52: #{frozen_openclip_visual_embedder_forward.1} parent=35 // pred_fallthru
          _
        // Predicated region
        $region53: #{frozen_openclip_visual_embedder_forward.1} parent=35 // pred_check
          %p519 = pneg %p224
        $region54: #{frozen_openclip_visual_embedder_forward.1} parent=35 // pred_check_branch
          %521 = sbr.rel (%p519) target = $region56
        $region55: #{frozen_openclip_visual_embedder_forward.1} parent=35 // pred_region
          %p522 = scmp.lt.s32.totalorder %s33, 1
          %s523 = scalar_select %p522, %s33, 1
          %s524 = smul.addr %s523, 16
          %s525 = smul.addr %s524, 4
          %s526 = scalar_lea.vmem %s7, %s525
        $region56: #{frozen_openclip_visual_embedder_forward.1} parent=35 // pred_fallthru
          _
        // Predicated region
        $region57: #{frozen_openclip_visual_embedder_forward.1} parent=35 // pred_check
          %p527 = pneg %p250
        $region58: #{frozen_openclip_visual_embedder_forward.1} parent=35 // pred_check_branch
          %529 = sbr.rel (%p527) target = $region60
        $region59: #{frozen_openclip_visual_embedder_forward.1} parent=35 // pred_region
          %p530 = scmp.lt.s32.totalorder %s33, 1
          %s531 = scalar_select %p530, %s33, 1
          %s532 = smul.addr %s531, 4
          %s533 = smul.addr %s532, 4
          %s534 = scalar_lea.vmem %s8, %s533
        $region60: #{frozen_openclip_visual_embedder_forward.1} parent=35 // pred_fallthru
          _
        // Predicated region
        $region61: #{frozen_openclip_visual_embedder_forward.1} parent=35 // pred_check
          %p535 = pneg %p276
        $region62: #{frozen_openclip_visual_embedder_forward.1} parent=35 // pred_check_branch
          %537 = sbr.rel (%p535) target = $region64
        $region63: #{frozen_openclip_visual_embedder_forward.1} parent=35 // pred_region
          %p538 = scmp.lt.s32.totalorder %s33, 1
          %s539 = scalar_select %p538, %s33, 1
          %s540 = smul.addr %s539, 4
          %s541 = smul.addr %s540, 4
          %s542 = scalar_lea.vmem %s9, %s541
        $region64: #{frozen_openclip_visual_embedder_forward.1} parent=35 // pred_fallthru
          _
        // Predicated region
        $region65: #{frozen_openclip_visual_embedder_forward.1} parent=35 // pred_check
          %p543 = pneg %p302
        $region66: #{frozen_openclip_visual_embedder_forward.1} parent=35 // pred_check_branch
          %545 = sbr.rel (%p543) target = $region68
        $region67: #{frozen_openclip_visual_embedder_forward.1} parent=35 // pred_region
          %p546 = scmp.lt.s32.totalorder %s33, 1
          %s547 = scalar_select %p546, %s33, 1
          %s548 = smul.addr %s547, 2
          %s549 = scalar_lea.vmem %s10, %s548
        $region68: #{frozen_openclip_visual_embedder_forward.1} parent=35 // pred_fallthru
          _
        // Predicated region
        $region69: #{frozen_openclip_visual_embedder_forward.1} parent=35 // pred_check
          %p550 = pneg %p328
        $region70: #{frozen_openclip_visual_embedder_forward.1} parent=35 // pred_check_branch
          %552 = sbr.rel (%p550) target = $region72
        $region71: #{frozen_openclip_visual_embedder_forward.1} parent=35 // pred_region
          %p553 = scmp.lt.s32.totalorder %s33, 1
          %s554 = scalar_select %p553, %s33, 1
          %s555 = smul.addr %s554, 4
          %s556 = smul.addr %s555, 4
          %s557 = scalar_lea.vmem %s11, %s556
        $region72: #{frozen_openclip_visual_embedder_forward.1} parent=35 // pred_fallthru
          _
        // Predicated region
        $region73: #{frozen_openclip_visual_embedder_forward.1} parent=35 // pred_check
          %p558 = pneg %p354
        $region74: #{frozen_openclip_visual_embedder_forward.1} parent=35 // pred_check_branch
          %560 = sbr.rel (%p558) target = $region76
        $region75: #{frozen_openclip_visual_embedder_forward.1} parent=35 // pred_region
          %p561 = scmp.lt.s32.totalorder %s33, 1
          %s562 = scalar_select %p561, %s33, 1
          %s563 = scalar_lea.vmem %s12, %s562
        $region76: #{frozen_openclip_visual_embedder_forward.1} parent=35 // pred_fallthru
          _
        // Predicated region
        $region77: #{frozen_openclip_visual_embedder_forward.1} parent=35 // pred_check
          %p564 = pneg %p380
        $region78: #{frozen_openclip_visual_embedder_forward.1} parent=35 // pred_check_branch
          %566 = sbr.rel (%p564) target = $region80
        $region79: #{frozen_openclip_visual_embedder_forward.1} parent=35 // pred_region
          %p567 = scmp.lt.s32.totalorder %s33, 1
          %s568 = scalar_select %p567, %s33, 1
          %s569 = smul.addr %s568, 16
          %s570 = smul.addr %s569, 4
          %s571 = scalar_lea.vmem %s13, %s570
        $region80: #{frozen_openclip_visual_embedder_forward.1} parent=35 // pred_fallthru
          _
      $region36: #{frozen_openclip_visual_embedder_forward.1} parent=5 // pred_fallthru
        _
      %p572 = scmp.le.s32.totalorder 1, %s25
      %p573 = scmp.lt.s32.totalorder %s25, 5
      %p574 = pnand %p572, %p573
      %p575 = pneg %p574
      // Predicated region
      $region81: #{frozen_openclip_visual_embedder_forward.1} parent=5 // pred_check
        _
      $region82: #{frozen_openclip_visual_embedder_forward.1} parent=5 // pred_check_branch
        %577 = sbr.rel (%p574) target = $region84
      $region83: #{frozen_openclip_visual_embedder_forward.1} parent=5 // pred_region
        %s578 = ssub.s32 %s25, 1
        %p579 = scmp.lt.s32.totalorder %s34, 1
        %s580 = scalar_select %p579, %s34, 1
        %s581 = smul.addr %s580, 2
        %s582 = smul.addr %s581, 4
        %s583 = scalar_lea.vmem %s0, %s582
        %p584 = pneg %p63
        %p585 = pneg %p60
        %p586 = pneg %p84
        %p587 = pneg %p81
        %p588 = pneg %p105
        %p589 = pneg %p102
        %p590 = pneg %p126
        %p591 = pneg %p123
        %p592 = scmp.lt.s32.totalorder %s35, 1
        %s593 = scalar_select %p592, %s35, 1
        %s594 = smul.addr %s593, 4
        %s595 = scalar_lea.vmem %s4, %s594
        %p596 = pneg %p152
        %p597 = pneg %p149
        %p598 = scmp.lt.s32.totalorder %s35, 1
        %s599 = scalar_select %p598, %s35, 1
        %s600 = smul.addr %s599, 16
        %s601 = smul.addr %s600, 4
        %s602 = scalar_lea.vmem %s5, %s601
        %p603 = pneg %p178
        %p604 = pneg %p175
        %p605 = scmp.lt.s32.totalorder %s35, 1
        %s606 = scalar_select %p605, %s35, 1
        %s607 = smul.addr %s606, 16
        %s608 = smul.addr %s607, 4
        %s609 = scalar_lea.vmem %s6, %s608
        %p610 = pneg %p204
        %p611 = pneg %p201
        %p612 = scmp.lt.s32.totalorder %s35, 1
        %s613 = scalar_select %p612, %s35, 1
        %s614 = smul.addr %s613, 16
        %s615 = smul.addr %s614, 4
        %s616 = scalar_lea.vmem %s7, %s615
        %p617 = pneg %p230
        %p618 = pneg %p227
        %p619 = scmp.lt.s32.totalorder %s35, 1
        %s620 = scalar_select %p619, %s35, 1
        %s621 = smul.addr %s620, 4
        %s622 = smul.addr %s621, 4
        %s623 = scalar_lea.vmem %s8, %s622
        %p624 = pneg %p256
        %p625 = pneg %p253
        %p626 = scmp.lt.s32.totalorder %s35, 1
        %s627 = scalar_select %p626, %s35, 1
        %s628 = smul.addr %s627, 4
        %s629 = smul.addr %s628, 4
        %s630 = scalar_lea.vmem %s9, %s629
        %p631 = pneg %p282
        %p632 = pneg %p279
        %p633 = scmp.lt.s32.totalorder %s35, 1
        %s634 = scalar_select %p633, %s35, 1
        %s635 = smul.addr %s634, 2
        %s636 = scalar_lea.vmem %s10, %s635
        %p637 = pneg %p308
        %p638 = pneg %p305
        %p639 = scmp.lt.s32.totalorder %s35, 1
        %s640 = scalar_select %p639, %s35, 1
        %s641 = smul.addr %s640, 4
        %s642 = smul.addr %s641, 4
        %s643 = scalar_lea.vmem %s11, %s642
        %p644 = pneg %p334
        %p645 = pneg %p331
        %p646 = scmp.lt.s32.totalorder %s35, 1
        %s647 = scalar_select %p646, %s35, 1
        %s648 = scalar_lea.vmem %s12, %s647
        %p649 = pneg %p360
        %p650 = pneg %p357
        %p651 = scmp.lt.s32.totalorder %s35, 1
        %s652 = scalar_select %p651, %s35, 1
        %s653 = smul.addr %s652, 16
        %s654 = smul.addr %s653, 4
        %s655 = scalar_lea.vmem %s13, %s654
        %p656 = pneg %p386
        %p657 = pneg %p383
        %p658 = pneg %p407
        %p659 = pneg %p404
        %p660 = pneg %p428
        %p661 = pneg %p425
        %p662 = pneg %p454
        %p663 = pneg %p451
        %s664 = sand.u32 %s441, 1
        %s665 = scalar_lea.sflag [#allocation4], %s664
        %s666 = sand.u32 %s441, 1
        %s667 = scalar_lea.vmem [#allocation3], %s666
        %p668 = scmp.lt.s32.totalorder %s34, 1
        %s669 = scalar_select %p668, %s34, 1
        %s670 = smul.addr %s669, 2
        %s671 = smul.addr %s670, 4
        %s672 = scalar_lea.vmem %s0, %s671
        %p673 = scmp.lt.s32.totalorder %s35, 1
        %s674 = scalar_select %p673, %s35, 1
        %s675 = smul.addr %s674, 4
        %s676 = scalar_lea.vmem %s4, %s675
        %p677 = scmp.lt.s32.totalorder %s35, 1
        %s678 = scalar_select %p677, %s35, 1
        %s679 = smul.addr %s678, 16
        %s680 = smul.addr %s679, 4
        %s681 = scalar_lea.vmem %s5, %s680
        %p682 = scmp.lt.s32.totalorder %s35, 1
        %s683 = scalar_select %p682, %s35, 1
        %s684 = smul.addr %s683, 16
        %s685 = smul.addr %s684, 4
        %s686 = scalar_lea.vmem %s6, %s685
        %p687 = scmp.lt.s32.totalorder %s35, 1
        %s688 = scalar_select %p687, %s35, 1
        %s689 = smul.addr %s688, 16
        %s690 = smul.addr %s689, 4
        %s691 = scalar_lea.vmem %s7, %s690
        %p692 = scmp.lt.s32.totalorder %s35, 1
        %s693 = scalar_select %p692, %s35, 1
        %s694 = smul.addr %s693, 4
        %s695 = smul.addr %s694, 4
        %s696 = scalar_lea.vmem %s8, %s695
        %p697 = scmp.lt.s32.totalorder %s35, 1
        %s698 = scalar_select %p697, %s35, 1
        %s699 = smul.addr %s698, 4
        %s700 = smul.addr %s699, 4
        %s701 = scalar_lea.vmem %s9, %s700
        %p702 = scmp.lt.s32.totalorder %s35, 1
        %s703 = scalar_select %p702, %s35, 1
        %s704 = smul.addr %s703, 2
        %s705 = scalar_lea.vmem %s10, %s704
        %p706 = scmp.lt.s32.totalorder %s35, 1
        %s707 = scalar_select %p706, %s35, 1
        %s708 = smul.addr %s707, 4
        %s709 = smul.addr %s708, 4
        %s710 = scalar_lea.vmem %s11, %s709
        %p711 = scmp.lt.s32.totalorder %s35, 1
        %s712 = scalar_select %p711, %s35, 1
        %s713 = scalar_lea.vmem %s12, %s712
        %p714 = scmp.lt.s32.totalorder %s35, 1
        %s715 = scalar_select %p714, %s35, 1
        %s716 = smul.addr %s715, 16
        %s717 = smul.addr %s716, 4
        %s718 = scalar_lea.vmem %s13, %s717
        %p720 = scmp.eq.s32.totalorder %s35, 0
        // Predicated region
        $region85: #{frozen_openclip_visual_embedder_forward.1} parent=83 // pred_check
          %p721 = pneg %p720
        $region86: #{frozen_openclip_visual_embedder_forward.1} parent=83 // pred_check_branch
          %723 = sbr.rel (%p721) target = $region88
        $region87: #{frozen_openclip_visual_embedder_forward.1} parent=83 // pred_region
          %v724 = vld [vmem:[%s672] sm:$0x77]
          %v725 = vld [vmem:[%s1] sm:$0xf]
          %v726 = vld [vmem:[%s1 + $0x4] sm:$0xf]
          %v727 = vld [vmem:[%s1 + $0x8] sm:$0xf]
          %v728 = vld [vmem:[%s1 + $0xc] sm:$0xf]
          %v729 = vld [vmem:[%s1 + $0x10] sm:$0xf]
          %v730 = vld [vmem:[%s1 + $0x14] sm:$0xf]
          %v731 = vld [vmem:[%s1 + $0x18] sm:$0xf]
          %v732 = vld [vmem:[%s1 + $0x1c] sm:$0xf]
          %v733 = vld [vmem:[%s1 + $0x20] sm:$0xf]
          %v734 = vld [vmem:[%s1 + $0x24] sm:$0xf]
          %v735 = vld [vmem:[%s1 + $0x28] sm:$0xf]
          %v736 = vld [vmem:[%s1 + $0x2c] sm:$0xf]
          %v737 = vld [vmem:[%s1 + $0x30] sm:$0xf]
          %v738 = vld [vmem:[%s1 + $0x34] sm:$0xf]
          %v739 = vld [vmem:[%s1 + $0x38] sm:$0xf]
          %v740 = vld [vmem:[%s1 + $0x3c] sm:$0xf]
          %v741 = vld [vmem:[%s1 + $0x40] sm:$0xf]
          %v742 = vld [vmem:[%s1 + $0x44] sm:$0xf]
          %v743 = vld [vmem:[%s1 + $0x48] sm:$0xf]
          %v744 = vld [vmem:[%s1 + $0x4c] sm:$0xf]
          %v745 = vld [vmem:[%s1 + $0x50] sm:$0xf]
          %v746 = vld [vmem:[%s1 + $0x54] sm:$0xf]
          %v747 = vld [vmem:[%s1 + $0x58] sm:$0xf]
          %v748 = vld [vmem:[%s1 + $0x5c] sm:$0xf]
          %v749 = vld [vmem:[%s2] sm:$0x1f]
          %v751 = vunpack.c.l.b16 %v724
          %v752 = vunpack.c.h.b16 %v724
          %v753 = vpack.c.b16 %v751, %v751
          %v754 = vpack.c.b16 %v752, %v752
          %v780 = vunpack.c.l.b16 %v725
          %v781 = vunpack.c.l.b16 %v726
          %v782 = vunpack.c.l.b16 %v727
          %v783 = vunpack.c.l.b16 %v728
          %v784 = vunpack.c.l.b16 %v729
          %v785 = vunpack.c.l.b16 %v730
          %v786 = vunpack.c.l.b16 %v731
          %v787 = vunpack.c.l.b16 %v732
          %v788 = vunpack.c.l.b16 %v733
          %v789 = vunpack.c.l.b16 %v734
          %v790 = vunpack.c.l.b16 %v735
          %v791 = vunpack.c.l.b16 %v736
          %v792 = vunpack.c.l.b16 %v737
          %v793 = vunpack.c.l.b16 %v738
          %v794 = vunpack.c.l.b16 %v739
          %v795 = vunpack.c.l.b16 %v740
          %v796 = vunpack.c.l.b16 %v741
          %v797 = vunpack.c.l.b16 %v742
          %v798 = vunpack.c.l.b16 %v743
          %v799 = vunpack.c.l.b16 %v744
          %v800 = vunpack.c.l.b16 %v745
          %v801 = vunpack.c.l.b16 %v746
          %v802 = vunpack.c.l.b16 %v747
          %v803 = vunpack.c.l.b16 %v748
          %v804 = vpack.c.b16 %v781, %v780
          %v805 = vpack.c.b16 %v783, %v782
          %v806 = vpack.c.b16 %v785, %v784
          %v807 = vpack.c.b16 %v787, %v786
          %v808 = vpack.c.b16 %v789, %v788
          %v809 = vpack.c.b16 %v791, %v790
          %v810 = vpack.c.b16 %v793, %v792
          %v811 = vpack.c.b16 %v795, %v794
          %v812 = vpack.c.b16 %v797, %v796
          %v813 = vpack.c.b16 %v799, %v798
          %v814 = vpack.c.b16 %v801, %v800
          %v815 = vpack.c.b16 %v803, %v802
          %vm828 = vcmask 523264
          %v830 = vsel %vm828, %v754, 0
          %832 = vmatprep.subr.bf16.mxu0 0
          %833 = vmatpush1.bf16.msra.mxu0 %v804
          %834 = vmatprep.subr.bf16.mxu0 0
          %835 = vmatpush1.bf16.msra.mxu0 %v805
          %836 = vmatprep.subr.bf16.mxu0 0
          %837 = vmatpush1.bf16.msra.mxu0 %v806
          %838 = vmatprep.subr.bf16.mxu0 0
          %839 = vmatpush1.bf16.msra.mxu0 %v807
          %840 = vmatprep.subr.bf16.mxu0 0
          %841 = vmatpush1.bf16.msra.mxu0 %v808
          %842 = vmatprep.subr.bf16.mxu0 0
          %843 = vmatpush1.bf16.msra.mxu0 %v809
          %844 = vmatprep.subr.bf16.mxu0 0
          %845 = vmatpush1.bf16.msra.mxu0 %v810
          %846 = vmatprep.subr.bf16.mxu0 0
          %847 = vmatpush1.bf16.msra.mxu0 %v811
          %848 = vmatprep.subr.bf16.mxu0 0
          %849 = vmatpush1.bf16.msra.mxu0 %v812
          %850 = vmatprep.subr.bf16.mxu0 0
          %851 = vmatpush1.bf16.msra.mxu0 %v813
          %852 = vmatprep.subr.bf16.mxu0 0
          %853 = vmatpush1.bf16.msra.mxu0 %v814
          %854 = vmatprep.subr.bf16.mxu0 0
          %855 = vmatpush1.bf16.msra.mxu0 %v815
          %856 = vmatprep.subr.bf16.mxu0 0
          %857 = vmatpush1.bf16.msra.mxu0 0
          %858 = vmatprep.subr.bf16.mxu0 0
          %859 = vmatpush1.bf16.msra.mxu0 0
          %860 = vmatprep.subr.bf16.mxu0 0
          %861 = vmatpush1.bf16.msra.mxu0 0
          %862 = vmatprep.subr.bf16.mxu0 0
          %863 = vmatpush1.bf16.msra.mxu0 0
          %864 = vmatprep.mubr.bf16.mxu0 %v830
          %865 = vmatmul.mubr.bf16.gmra.mrb[0].mxu0 %v753
          %v866 = vpop.f32.mrb[0].mxu0
          %v867 = vadd.f32 %v749, %v866
          %v868 = vpop.f32.mrb[0].mxu0
          %v869 = vpop.f32.mrb[0].mxu0
          %v870 = vpop.f32.mrb[0].mxu0
          %871 = vdwg.mxu0
          %v872 = vld [vmem:[%s3] sm:$0x1]
          %v873 = vld [vmem:[%s3 + $0x1] sm:$0x1]
          %vm874 = vcmask 258048
          %v875 = vsel %vm874, %v867, 0.0
          %876 = vadd.xlane.f32.xlu0 %v875
          %v877 = vpop.xlane.xlu0 %876
          %v878 = vrcp.pop 32.0
          %v879 = vmul.f32 %v877, %v878
          %v880 = vsub.f32 %v867, %v879
          %v881 = vmul.f32 %v880, %v880
          %v882 = vsel %vm874, %v881, 0.0
          %883 = vadd.xlane.f32.xlu0 %v882
          %v884 = vpop.xlane.xlu0 %883
          %v885 = vmul.f32 %v884, %v878
          %v886 = vadd.f32 %v885, 1e-05
          %v887 = vrsqrt.pop %v886
          %v888 = vmul.f32 %v880, %v887
          %v889 = vlaneseq
          %v890 = vshrl.u32 %v889, 7
          %v891 = vsub.s32 0, %v890
          %v892 = vrot.slane %v872, %v891
          %v893 = vmul.f32 %v888, %v892
          %v894 = vlaneseq
          %v895 = vshrl.u32 %v894, 7
          %v896 = vsub.s32 0, %v895
          %v897 = vrot.slane %v873, %v896
          %v898 = vadd.f32 %v893, %v897
          %899 = vst.msk [vmem:[#allocation2] sm:$0x1f] %vm874, %v898
        $region88: #{frozen_openclip_visual_embedder_forward.1} parent=83 // pred_fallthru
          _
        %v900 = vld [vmem:[#allocation2] sm:$0x1f]
        %v901 = vld [vmem:[%s676] sm:$0x1]
        %v902 = vld [vmem:[%s676 + $0x1] sm:$0x1]
        %vm903 = vcmask 258048
        %v904 = vsel %vm903, %v900, 0.0
        %905 = vadd.xlane.f32.xlu0 %v904
        %v906 = vpop.xlane.xlu0 %905
        %v907 = vrcp.pop 32.0
        %v908 = vmul.f32 %v906, %v907
        %v909 = vsub.f32 %v900, %v908
        %v910 = vmul.f32 %v909, %v909
        %v911 = vsel %vm903, %v910, 0.0
        %912 = vadd.xlane.f32.xlu0 %v911
        %v913 = vpop.xlane.xlu0 %912
        %v914 = vmul.f32 %v913, %v907
        %v915 = vadd.f32 %v914, 1e-05
        %v916 = vrsqrt.pop %v915
        %v917 = vmul.f32 %v909, %v916
        %v918 = vlaneseq
        %v919 = vshrl.u32 %v918, 7
        %v920 = vsub.s32 0, %v919
        %v921 = vrot.slane %v901, %v920
        %v922 = vmul.f32 %v917, %v921
        %v923 = vlaneseq
        %v924 = vshrl.u32 %v923, 7
        %v925 = vsub.s32 0, %v924
        %v926 = vrot.slane %v902, %v925
        %v927 = vadd.f32 %v922, %v926
        %v928 = vpack.c.bf16 %v927, %v927
        %v929 = vld [vmem:[%s681] sm:$0xf]
        %v930 = vld [vmem:[%s681 + $0x4] sm:$0xf]
        %v931 = vld [vmem:[%s681 + $0x8] sm:$0xf]
        %v932 = vld [vmem:[%s681 + $0xc] sm:$0xf]
        %v933 = vld [vmem:[%s696] sm:$0x1]
        %v934 = vlaneseq
        %v935 = vshrl.u32 %v934, 7
        %v936 = vsub.s32 0, %v935
        %v937 = vrot.slane %v933, %v936
        %v942 = vunpack.c.l.b16 %v929
        %v943 = vunpack.c.l.b16 %v930
        %v944 = vunpack.c.l.b16 %v931
        %v945 = vunpack.c.l.b16 %v932
        %v946 = vpack.c.b16 %v943, %v942
        %v947 = vpack.c.b16 %v945, %v944
        %vm950 = vcmask 261120
        %v952 = vsel %vm950, %v928, 0
        %954 = vmatprep.subr.bf16.mxu0 0
        %955 = vmatpush1.bf16.msra.mxu0 %v946
        %956 = vmatprep.subr.bf16.mxu0 0
        %957 = vmatpush1.bf16.msra.mxu0 %v947
        %958 = vmatprep.subr.bf16.mxu0 0
        %959 = vmatpush1.bf16.msra.mxu0 0
        %960 = vmatprep.subr.bf16.mxu0 0
        %961 = vmatpush1.bf16.msra.mxu0 0
        %962 = vmatprep.subr.bf16.mxu0 0
        %963 = vmatpush1.bf16.msra.mxu0 0
        %964 = vmatprep.subr.bf16.mxu0 0
        %965 = vmatpush1.bf16.msra.mxu0 0
        %966 = vmatprep.subr.bf16.mxu0 0
        %967 = vmatpush1.bf16.msra.mxu0 0
        %968 = vmatprep.subr.bf16.mxu0 0
        %969 = vmatpush1.bf16.msra.mxu0 0
        %970 = vmatprep.subr.bf16.mxu0 0
        %971 = vmatpush1.bf16.msra.mxu0 0
        %972 = vmatprep.subr.bf16.mxu0 0
        %973 = vmatpush1.bf16.msra.mxu0 0
        %974 = vmatprep.subr.bf16.mxu0 0
        %975 = vmatpush1.bf16.msra.mxu0 0
        %976 = vmatprep.subr.bf16.mxu0 0
        %977 = vmatpush1.bf16.msra.mxu0 0
        %978 = vmatprep.subr.bf16.mxu0 0
        %979 = vmatpush1.bf16.msra.mxu0 0
        %980 = vmatprep.subr.bf16.mxu0 0
        %981 = vmatpush1.bf16.msra.mxu0 0
        %982 = vmatprep.subr.bf16.mxu0 0
        %983 = vmatpush1.bf16.msra.mxu0 0
        %984 = vmatprep.subr.bf16.mxu0 0
        %985 = vmatpush1.bf16.msra.mxu0 0
        %986 = vmatprep.mubr.bf16.mxu0 0
        %987 = vmatmul.mubr.bf16.gmra.mrb[0].mxu0 %v952
        %v988 = vpop.f32.mrb[0].mxu0
        %v989 = vadd.f32 %v937, %v988
        %v990 = vpop.f32.mrb[0].mxu0
        %v991 = vpop.f32.mrb[0].mxu0
        %v992 = vpop.f32.mrb[0].mxu0
        %993 = vdwg.mxu0
        %v994 = vpack.c.bf16 %v989, %v989
        %v995 = vld [vmem:[%s686] sm:$0xf]
        %v996 = vld [vmem:[%s686 + $0x4] sm:$0xf]
        %v997 = vld [vmem:[%s686 + $0x8] sm:$0xf]
        %v998 = vld [vmem:[%s686 + $0xc] sm:$0xf]
        %v999 = vld [vmem:[%s696 + $0x1] sm:$0x1]
        %v1000 = vlaneseq
        %v1001 = vshrl.u32 %v1000, 7
        %v1002 = vsub.s32 0, %v1001
        %v1003 = vrot.slane %v999, %v1002
        %v1008 = vunpack.c.l.b16 %v995
        %v1009 = vunpack.c.l.b16 %v996
        %v1010 = vunpack.c.l.b16 %v997
        %v1011 = vunpack.c.l.b16 %v998
        %v1012 = vpack.c.b16 %v1009, %v1008
        %v1013 = vpack.c.b16 %v1011, %v1010
        %1016 = vmatprep.subr.bf16.mxu0 0
        %1017 = vmatpush1.bf16.msra.mxu0 %v1012
        %1018 = vmatprep.subr.bf16.mxu0 0
        %1019 = vmatpush1.bf16.msra.mxu0 %v1013
        %1020 = vmatprep.subr.bf16.mxu0 0
        %1021 = vmatpush1.bf16.msra.mxu0 0
        %1022 = vmatprep.subr.bf16.mxu0 0
        %1023 = vmatpush1.bf16.msra.mxu0 0
        %1024 = vmatprep.subr.bf16.mxu0 0
        %1025 = vmatpush1.bf16.msra.mxu0 0
        %1026 = vmatprep.subr.bf16.mxu0 0
        %1027 = vmatpush1.bf16.msra.mxu0 0
        %1028 = vmatprep.subr.bf16.mxu0 0
        %1029 = vmatpush1.bf16.msra.mxu0 0
        %1030 = vmatprep.subr.bf16.mxu0 0
        %1031 = vmatpush1.bf16.msra.mxu0 0
        %1032 = vmatprep.subr.bf16.mxu0 0
        %1033 = vmatpush1.bf16.msra.mxu0 0
        %1034 = vmatprep.subr.bf16.mxu0 0
        %1035 = vmatpush1.bf16.msra.mxu0 0
        %1036 = vmatprep.subr.bf16.mxu0 0
        %1037 = vmatpush1.bf16.msra.mxu0 0
        %1038 = vmatprep.subr.bf16.mxu0 0
        %1039 = vmatpush1.bf16.msra.mxu0 0
        %1040 = vmatprep.subr.bf16.mxu0 0
        %1041 = vmatpush1.bf16.msra.mxu0 0
        %1042 = vmatprep.subr.bf16.mxu0 0
        %1043 = vmatpush1.bf16.msra.mxu0 0
        %1044 = vmatprep.subr.bf16.mxu0 0
        %1045 = vmatpush1.bf16.msra.mxu0 0
        %1046 = vmatprep.subr.bf16.mxu0 0
        %1047 = vmatpush1.bf16.msra.mxu0 0
        %1048 = vmatprep.mubr.bf16.mxu0 0
        %1049 = vmatmul.mubr.bf16.gmra.mrb[0].mxu0 %v952
        %v1050 = vpop.f32.mrb[0].mxu0
        %v1051 = vadd.f32 %v1003, %v1050
        %v1052 = vpop.f32.mrb[0].mxu0
        %v1053 = vpop.f32.mrb[0].mxu0
        %v1054 = vpop.f32.mrb[0].mxu0
        %1055 = vdwg.mxu0
        %v1056 = vpack.c.bf16 %v1051, %v1051
        %v1057 = vld [vmem:[%s691] sm:$0xf]
        %v1058 = vld [vmem:[%s691 + $0x4] sm:$0xf]
        %v1059 = vld [vmem:[%s691 + $0x8] sm:$0xf]
        %v1060 = vld [vmem:[%s691 + $0xc] sm:$0xf]
        %v1061 = vld [vmem:[%s696 + $0x2] sm:$0x1]
        %v1062 = vlaneseq
        %v1063 = vshrl.u32 %v1062, 7
        %v1064 = vsub.s32 0, %v1063
        %v1065 = vrot.slane %v1061, %v1064
        %v1070 = vunpack.c.l.b16 %v1057
        %v1071 = vunpack.c.l.b16 %v1058
        %v1072 = vunpack.c.l.b16 %v1059
        %v1073 = vunpack.c.l.b16 %v1060
        %v1074 = vpack.c.b16 %v1071, %v1070
        %v1075 = vpack.c.b16 %v1073, %v1072
        %1078 = vmatprep.subr.bf16.mxu0 0
        %1079 = vmatpush1.bf16.msra.mxu0 %v1074
        %1080 = vmatprep.subr.bf16.mxu0 0
        %1081 = vmatpush1.bf16.msra.mxu0 %v1075
        %1082 = vmatprep.subr.bf16.mxu0 0
        %1083 = vmatpush1.bf16.msra.mxu0 0
        %1084 = vmatprep.subr.bf16.mxu0 0
        %1085 = vmatpush1.bf16.msra.mxu0 0
        %1086 = vmatprep.subr.bf16.mxu0 0
        %1087 = vmatpush1.bf16.msra.mxu0 0
        %1088 = vmatprep.subr.bf16.mxu0 0
        %1089 = vmatpush1.bf16.msra.mxu0 0
        %1090 = vmatprep.subr.bf16.mxu0 0
        %1091 = vmatpush1.bf16.msra.mxu0 0
        %1092 = vmatprep.subr.bf16.mxu0 0
        %1093 = vmatpush1.bf16.msra.mxu0 0
        %1094 = vmatprep.subr.bf16.mxu0 0
        %1095 = vmatpush1.bf16.msra.mxu0 0
        %1096 = vmatprep.subr.bf16.mxu0 0
        %1097 = vmatpush1.bf16.msra.mxu0 0
        %1098 = vmatprep.subr.bf16.mxu0 0
        %1099 = vmatpush1.bf16.msra.mxu0 0
        %1100 = vmatprep.subr.bf16.mxu0 0
        %1101 = vmatpush1.bf16.msra.mxu0 0
        %1102 = vmatprep.subr.bf16.mxu0 0
        %1103 = vmatpush1.bf16.msra.mxu0 0
        %1104 = vmatprep.subr.bf16.mxu0 0
        %1105 = vmatpush1.bf16.msra.mxu0 0
        %1106 = vmatprep.subr.bf16.mxu0 0
        %1107 = vmatpush1.bf16.msra.mxu0 0
        %1108 = vmatprep.subr.bf16.mxu0 0
        %1109 = vmatpush1.bf16.msra.mxu0 0
        %1110 = vmatprep.mubr.bf16.mxu0 0
        %1111 = vmatmul.mubr.bf16.gmra.mrb[0].mxu0 %v952
        %v1112 = vpop.f32.mrb[0].mxu0
        %v1113 = vadd.f32 %v1065, %v1112
        %v1114 = vpop.f32.mrb[0].mxu0
        %v1115 = vpop.f32.mrb[0].mxu0
        %v1116 = vpop.f32.mrb[0].mxu0
        %1117 = vdwg.mxu0
        %v1118 = vpack.c.bf16 %v1113, %v1113
        %vm1119 = vcmask 64512
        %v1121 = vsel %vm1119, %v994, 0
        %v1124 = vsel %vm1119, %v1056, 0
        %1126 = vmatprep.subr.bf16.mxu0 0
        %1127 = vmatpush1.bf16.xpose.msra.mxu0 %v1124
        %1128 = vmatprep.subr.bf16.mxu0 0
        %1129 = vmatpush1.bf16.xpose.msra.mxu0 0
        %1130 = vmatprep.subr.bf16.mxu0 0
        %1131 = vmatpush1.bf16.xpose.msra.mxu0 0
        %1132 = vmatprep.subr.bf16.mxu0 0
        %1133 = vmatpush1.bf16.xpose.msra.mxu0 0
        %1134 = vmatprep.subr.bf16.mxu0 0
        %1135 = vmatpush1.bf16.xpose.msra.mxu0 0
        %1136 = vmatprep.subr.bf16.mxu0 0
        %1137 = vmatpush1.bf16.xpose.msra.mxu0 0
        %1138 = vmatprep.subr.bf16.mxu0 0
        %1139 = vmatpush1.bf16.xpose.msra.mxu0 0
        %1140 = vmatprep.subr.bf16.mxu0 0
        %1141 = vmatpush1.bf16.xpose.msra.mxu0 0
        %1142 = vmatprep.subr.bf16.mxu0 0
        %1143 = vmatpush1.bf16.xpose.msra.mxu0 0
        %1144 = vmatprep.subr.bf16.mxu0 0
        %1145 = vmatpush1.bf16.xpose.msra.mxu0 0
        %1146 = vmatprep.subr.bf16.mxu0 0
        %1147 = vmatpush1.bf16.xpose.msra.mxu0 0
        %1148 = vmatprep.subr.bf16.mxu0 0
        %1149 = vmatpush1.bf16.xpose.msra.mxu0 0
        %1150 = vmatprep.subr.bf16.mxu0 0
        %1151 = vmatpush1.bf16.xpose.msra.mxu0 0
        %1152 = vmatprep.subr.bf16.mxu0 0
        %1153 = vmatpush1.bf16.xpose.msra.mxu0 0
        %1154 = vmatprep.subr.bf16.mxu0 0
        %1155 = vmatpush1.bf16.xpose.msra.mxu0 0
        %1156 = vmatprep.subr.bf16.mxu0 0
        %1157 = vmatpush1.bf16.xpose.msra.mxu0 0
        %1158 = vmatprep.mubr.bf16.mxu0 0
        %1159 = vmatmul.mubr.bf16.gmra.mrb[0].mxu0 %v1121
        %v1160 = vpop.f32.mrb[0].mxu0
        %v1161 = vadd.f32 0.0, %v1160
        %v1162 = vpop.f32.mrb[0].mxu0
        %v1163 = vpop.f32.mrb[0].mxu0
        %v1164 = vpop.f32.mrb[0].mxu0
        %1165 = vdwg.mxu0
        %vm1166 = vcmask 36864
        %v1167 = vsel %vm1166, %v1161, -inf
        %1168 = vmax.xlane.f32.xlu0 %v1167
        %v1169 = vpop.xlane.xlu0 %1168
        %v1170 = vsub.f32 %v1161, %v1169
        %v1171 = vmul.f32 %v1170, 1.442695
        %v1172 = vpow.pop %v1171
        %v1173 = vsel %vm1166, %v1172, 0.0
        %1174 = vadd.xlane.f32.xlu0 %v1173
        %v1175 = vpop.xlane.xlu0 %1174
        %v1176 = vrcp.pop %v1175
        %v1177 = vmul.f32 %v1172, %v1176
        %v1178 = vpack.c.bf16 %v1177, %v1177
        %vm1179 = vcmask 39936
        %v1181 = vsel %vm1179, %v1178, 0
        %vm1183 = vcmask 1041408
        %vm1184 = vcmask 1042432
        %v1185 = vsel %vm1183, 4294967295, 65535
        %v1186 = vsel %vm1184, %v1185, 0
        %v1188 = vand.u32 %v1118, %v1186
        %1190 = vmatprep.subr.bf16.mxu0 0
        %1191 = vmatpush1.bf16.msra.mxu0 %v1188
        %1192 = vmatprep.subr.bf16.mxu0 0
        %1193 = vmatpush1.bf16.msra.mxu0 0
        %1194 = vmatprep.subr.bf16.mxu0 0
        %1195 = vmatpush1.bf16.msra.mxu0 0
        %1196 = vmatprep.subr.bf16.mxu0 0
        %1197 = vmatpush1.bf16.msra.mxu0 0
        %1198 = vmatprep.subr.bf16.mxu0 0
        %1199 = vmatpush1.bf16.msra.mxu0 0
        %1200 = vmatprep.subr.bf16.mxu0 0
        %1201 = vmatpush1.bf16.msra.mxu0 0
        %1202 = vmatprep.subr.bf16.mxu0 0
        %1203 = vmatpush1.bf16.msra.mxu0 0
        %1204 = vmatprep.subr.bf16.mxu0 0
        %1205 = vmatpush1.bf16.msra.mxu0 0
        %1206 = vmatprep.subr.bf16.mxu0 0
        %1207 = vmatpush1.bf16.msra.mxu0 0
        %1208 = vmatprep.subr.bf16.mxu0 0
        %1209 = vmatpush1.bf16.msra.mxu0 0
        %1210 = vmatprep.subr.bf16.mxu0 0
        %1211 = vmatpush1.bf16.msra.mxu0 0
        %1212 = vmatprep.subr.bf16.mxu0 0
        %1213 = vmatpush1.bf16.msra.mxu0 0
        %1214 = vmatprep.subr.bf16.mxu0 0
        %1215 = vmatpush1.bf16.msra.mxu0 0
        %1216 = vmatprep.subr.bf16.mxu0 0
        %1217 = vmatpush1.bf16.msra.mxu0 0
        %1218 = vmatprep.subr.bf16.mxu0 0
        %1219 = vmatpush1.bf16.msra.mxu0 0
        %1220 = vmatprep.subr.bf16.mxu0 0
        %1221 = vmatpush1.bf16.msra.mxu0 0
        %1222 = vmatprep.mubr.bf16.mxu0 0
        %1223 = vmatmul.mubr.bf16.gmra.mrb[0].mxu0 %v1181
        %v1224 = vpop.f32.mrb[0].mxu0
        %v1225 = vadd.f32 0.0, %v1224
        %v1226 = vpop.f32.mrb[0].mxu0
        %v1227 = vpop.f32.mrb[0].mxu0
        %v1228 = vpop.f32.mrb[0].mxu0
        %1229 = vdwg.mxu0
        %v1230 = vpack.c.bf16 %v1225, %v1225
        %v1231 = vld [vmem:[%s701] sm:$0xf]
        %s1232 = scalar_lea.vmem %s681, 16
        %v1233 = vld [vmem:[%s1232] sm:$0xf]
        %v1234 = vld [vmem:[%s1232 + $0x4] sm:$0xf]
        %v1235 = vld [vmem:[%s1232 + $0x8] sm:$0xf]
        %v1236 = vld [vmem:[%s1232 + $0xc] sm:$0xf]
        %s1237 = scalar_lea.vmem %s696, 4
        %v1238 = vld [vmem:[%s1237] sm:$0x1]
        %v1239 = vlaneseq
        %v1240 = vshrl.u32 %v1239, 7
        %v1241 = vsub.s32 0, %v1240
        %v1242 = vrot.slane %v1238, %v1241
        %v1247 = vunpack.c.l.b16 %v1233
        %v1248 = vunpack.c.l.b16 %v1234
        %v1249 = vunpack.c.l.b16 %v1235
        %v1250 = vunpack.c.l.b16 %v1236
        %v1251 = vpack.c.b16 %v1248, %v1247
        %v1252 = vpack.c.b16 %v1250, %v1249
        %1255 = vmatprep.subr.bf16.mxu0 0
        %1256 = vmatpush1.bf16.msra.mxu0 %v1251
        %1257 = vmatprep.subr.bf16.mxu0 0
        %1258 = vmatpush1.bf16.msra.mxu0 %v1252
        %1259 = vmatprep.subr.bf16.mxu0 0
        %1260 = vmatpush1.bf16.msra.mxu0 0
        %1261 = vmatprep.subr.bf16.mxu0 0
        %1262 = vmatpush1.bf16.msra.mxu0 0
        %1263 = vmatprep.subr.bf16.mxu0 0
        %1264 = vmatpush1.bf16.msra.mxu0 0
        %1265 = vmatprep.subr.bf16.mxu0 0
        %1266 = vmatpush1.bf16.msra.mxu0 0
        %1267 = vmatprep.subr.bf16.mxu0 0
        %1268 = vmatpush1.bf16.msra.mxu0 0
        %1269 = vmatprep.subr.bf16.mxu0 0
        %1270 = vmatpush1.bf16.msra.mxu0 0
        %1271 = vmatprep.subr.bf16.mxu0 0
        %1272 = vmatpush1.bf16.msra.mxu0 0
        %1273 = vmatprep.subr.bf16.mxu0 0
        %1274 = vmatpush1.bf16.msra.mxu0 0
        %1275 = vmatprep.subr.bf16.mxu0 0
        %1276 = vmatpush1.bf16.msra.mxu0 0
        %1277 = vmatprep.subr.bf16.mxu0 0
        %1278 = vmatpush1.bf16.msra.mxu0 0
        %1279 = vmatprep.subr.bf16.mxu0 0
        %1280 = vmatpush1.bf16.msra.mxu0 0
        %1281 = vmatprep.subr.bf16.mxu0 0
        %1282 = vmatpush1.bf16.msra.mxu0 0
        %1283 = vmatprep.subr.bf16.mxu0 0
        %1284 = vmatpush1.bf16.msra.mxu0 0
        %1285 = vmatprep.subr.bf16.mxu0 0
        %1286 = vmatpush1.bf16.msra.mxu0 0
        %1287 = vmatprep.mubr.bf16.mxu0 0
        %1288 = vmatmul.mubr.bf16.gmra.mrb[0].mxu0 %v952
        %v1289 = vpop.f32.mrb[0].mxu0
        %v1290 = vadd.f32 %v1242, %v1289
        %v1291 = vpop.f32.mrb[0].mxu0
        %v1292 = vpop.f32.mrb[0].mxu0
        %v1293 = vpop.f32.mrb[0].mxu0
        %1294 = vdwg.mxu0
        %v1295 = vpack.c.bf16 %v1290, %v1290
        %s1296 = scalar_lea.vmem %s686, 16
        %v1297 = vld [vmem:[%s1296] sm:$0xf]
        %v1298 = vld [vmem:[%s1296 + $0x4] sm:$0xf]
        %v1299 = vld [vmem:[%s1296 + $0x8] sm:$0xf]
        %v1300 = vld [vmem:[%s1296 + $0xc] sm:$0xf]
        %v1301 = vld [vmem:[%s1237 + $0x1] sm:$0x1]
        %v1302 = vlaneseq
        %v1303 = vshrl.u32 %v1302, 7
        %v1304 = vsub.s32 0, %v1303
        %v1305 = vrot.slane %v1301, %v1304
        %v1310 = vunpack.c.l.b16 %v1297
        %v1311 = vunpack.c.l.b16 %v1298
        %v1312 = vunpack.c.l.b16 %v1299
        %v1313 = vunpack.c.l.b16 %v1300
        %v1314 = vpack.c.b16 %v1311, %v1310
        %v1315 = vpack.c.b16 %v1313, %v1312
        %1318 = vmatprep.subr.bf16.mxu0 0
        %1319 = vmatpush1.bf16.msra.mxu0 %v1314
        %1320 = vmatprep.subr.bf16.mxu0 0
        %1321 = vmatpush1.bf16.msra.mxu0 %v1315
        %1322 = vmatprep.subr.bf16.mxu0 0
        %1323 = vmatpush1.bf16.msra.mxu0 0
        %1324 = vmatprep.subr.bf16.mxu0 0
        %1325 = vmatpush1.bf16.msra.mxu0 0
        %1326 = vmatprep.subr.bf16.mxu0 0
        %1327 = vmatpush1.bf16.msra.mxu0 0
        %1328 = vmatprep.subr.bf16.mxu0 0
        %1329 = vmatpush1.bf16.msra.mxu0 0
        %1330 = vmatprep.subr.bf16.mxu0 0
        %1331 = vmatpush1.bf16.msra.mxu0 0
        %1332 = vmatprep.subr.bf16.mxu0 0
        %1333 = vmatpush1.bf16.msra.mxu0 0
        %1334 = vmatprep.subr.bf16.mxu0 0
        %1335 = vmatpush1.bf16.msra.mxu0 0
        %1336 = vmatprep.subr.bf16.mxu0 0
        %1337 = vmatpush1.bf16.msra.mxu0 0
        %1338 = vmatprep.subr.bf16.mxu0 0
        %1339 = vmatpush1.bf16.msra.mxu0 0
        %1340 = vmatprep.subr.bf16.mxu0 0
        %1341 = vmatpush1.bf16.msra.mxu0 0
        %1342 = vmatprep.subr.bf16.mxu0 0
        %1343 = vmatpush1.bf16.msra.mxu0 0
        %1344 = vmatprep.subr.bf16.mxu0 0
        %1345 = vmatpush1.bf16.msra.mxu0 0
        %1346 = vmatprep.subr.bf16.mxu0 0
        %1347 = vmatpush1.bf16.msra.mxu0 0
        %1348 = vmatprep.subr.bf16.mxu0 0
        %1349 = vmatpush1.bf16.msra.mxu0 0
        %1350 = vmatprep.mubr.bf16.mxu0 0
        %1351 = vmatmul.mubr.bf16.gmra.mrb[0].mxu0 %v952
        %v1352 = vpop.f32.mrb[0].mxu0
        %v1353 = vadd.f32 %v1305, %v1352
        %v1354 = vpop.f32.mrb[0].mxu0
        %v1355 = vpop.f32.mrb[0].mxu0
        %v1356 = vpop.f32.mrb[0].mxu0
        %1357 = vdwg.mxu0
        %v1358 = vpack.c.bf16 %v1353, %v1353
        %s1359 = scalar_lea.vmem %s691, 16
        %v1360 = vld [vmem:[%s1359] sm:$0xf]
        %v1361 = vld [vmem:[%s1359 + $0x4] sm:$0xf]
        %v1362 = vld [vmem:[%s1359 + $0x8] sm:$0xf]
        %v1363 = vld [vmem:[%s1359 + $0xc] sm:$0xf]
        %v1364 = vld [vmem:[%s1237 + $0x2] sm:$0x1]
        %v1365 = vlaneseq
        %v1366 = vshrl.u32 %v1365, 7
        %v1367 = vsub.s32 0, %v1366
        %v1368 = vrot.slane %v1364, %v1367
        %v1373 = vunpack.c.l.b16 %v1360
        %v1374 = vunpack.c.l.b16 %v1361
        %v1375 = vunpack.c.l.b16 %v1362
        %v1376 = vunpack.c.l.b16 %v1363
        %v1377 = vpack.c.b16 %v1374, %v1373
        %v1378 = vpack.c.b16 %v1376, %v1375
        %1381 = vmatprep.subr.bf16.mxu0 0
        %1382 = vmatpush1.bf16.msra.mxu0 %v1377
        %1383 = vmatprep.subr.bf16.mxu0 0
        %1384 = vmatpush1.bf16.msra.mxu0 %v1378
        %1385 = vmatprep.subr.bf16.mxu0 0
        %1386 = vmatpush1.bf16.msra.mxu0 0
        %1387 = vmatprep.subr.bf16.mxu0 0
        %1388 = vmatpush1.bf16.msra.mxu0 0
        %1389 = vmatprep.subr.bf16.mxu0 0
        %1390 = vmatpush1.bf16.msra.mxu0 0
        %1391 = vmatprep.subr.bf16.mxu0 0
        %1392 = vmatpush1.bf16.msra.mxu0 0
        %1393 = vmatprep.subr.bf16.mxu0 0
        %1394 = vmatpush1.bf16.msra.mxu0 0
        %1395 = vmatprep.subr.bf16.mxu0 0
        %1396 = vmatpush1.bf16.msra.mxu0 0
        %1397 = vmatprep.subr.bf16.mxu0 0
        %1398 = vmatpush1.bf16.msra.mxu0 0
        %1399 = vmatprep.subr.bf16.mxu0 0
        %1400 = vmatpush1.bf16.msra.mxu0 0
        %1401 = vmatprep.subr.bf16.mxu0 0
        %1402 = vmatpush1.bf16.msra.mxu0 0
        %1403 = vmatprep.subr.bf16.mxu0 0
        %1404 = vmatpush1.bf16.msra.mxu0 0
        %1405 = vmatprep.subr.bf16.mxu0 0
        %1406 = vmatpush1.bf16.msra.mxu0 0
        %1407 = vmatprep.subr.bf16.mxu0 0
        %1408 = vmatpush1.bf16.msra.mxu0 0
        %1409 = vmatprep.subr.bf16.mxu0 0
        %1410 = vmatpush1.bf16.msra.mxu0 0
        %1411 = vmatprep.subr.bf16.mxu0 0
        %1412 = vmatpush1.bf16.msra.mxu0 0
        %1413 = vmatprep.mubr.bf16.mxu0 0
        %1414 = vmatmul.mubr.bf16.gmra.mrb[0].mxu0 %v952
        %v1415 = vpop.f32.mrb[0].mxu0
        %v1416 = vadd.f32 %v1368, %v1415
        %v1417 = vpop.f32.mrb[0].mxu0
        %v1418 = vpop.f32.mrb[0].mxu0
        %v1419 = vpop.f32.mrb[0].mxu0
        %1420 = vdwg.mxu0
        %v1421 = vpack.c.bf16 %v1416, %v1416
        %v1423 = vsel %vm1119, %v1295, 0
        %v1426 = vsel %vm1119, %v1358, 0
        %1428 = vmatprep.subr.bf16.mxu0 0
        %1429 = vmatpush1.bf16.xpose.msra.mxu0 %v1426
        %1430 = vmatprep.subr.bf16.mxu0 0
        %1431 = vmatpush1.bf16.xpose.msra.mxu0 0
        %1432 = vmatprep.subr.bf16.mxu0 0
        %1433 = vmatpush1.bf16.xpose.msra.mxu0 0
        %1434 = vmatprep.subr.bf16.mxu0 0
        %1435 = vmatpush1.bf16.xpose.msra.mxu0 0
        %1436 = vmatprep.subr.bf16.mxu0 0
        %1437 = vmatpush1.bf16.xpose.msra.mxu0 0
        %1438 = vmatprep.subr.bf16.mxu0 0
        %1439 = vmatpush1.bf16.xpose.msra.mxu0 0
        %1440 = vmatprep.subr.bf16.mxu0 0
        %1441 = vmatpush1.bf16.xpose.msra.mxu0 0
        %1442 = vmatprep.subr.bf16.mxu0 0
        %1443 = vmatpush1.bf16.xpose.msra.mxu0 0
        %1444 = vmatprep.subr.bf16.mxu0 0
        %1445 = vmatpush1.bf16.xpose.msra.mxu0 0
        %1446 = vmatprep.subr.bf16.mxu0 0
        %1447 = vmatpush1.bf16.xpose.msra.mxu0 0
        %1448 = vmatprep.subr.bf16.mxu0 0
        %1449 = vmatpush1.bf16.xpose.msra.mxu0 0
        %1450 = vmatprep.subr.bf16.mxu0 0
        %1451 = vmatpush1.bf16.xpose.msra.mxu0 0
        %1452 = vmatprep.subr.bf16.mxu0 0
        %1453 = vmatpush1.bf16.xpose.msra.mxu0 0
        %1454 = vmatprep.subr.bf16.mxu0 0
        %1455 = vmatpush1.bf16.xpose.msra.mxu0 0
        %1456 = vmatprep.subr.bf16.mxu0 0
        %1457 = vmatpush1.bf16.xpose.msra.mxu0 0
        %1458 = vmatprep.subr.bf16.mxu0 0
        %1459 = vmatpush1.bf16.xpose.msra.mxu0 0
        %1460 = vmatprep.mubr.bf16.mxu0 0
        %1461 = vmatmul.mubr.bf16.gmra.mrb[0].mxu0 %v1423
        %v1462 = vpop.f32.mrb[0].mxu0
        %v1463 = vadd.f32 0.0, %v1462
        %v1464 = vpop.f32.mrb[0].mxu0
        %v1465 = vpop.f32.mrb[0].mxu0
        %v1466 = vpop.f32.mrb[0].mxu0
        %1467 = vdwg.mxu0
        %v1468 = vsel %vm1166, %v1463, -inf
        %1469 = vmax.xlane.f32.xlu0 %v1468
        %v1470 = vpop.xlane.xlu0 %1469
        %v1471 = vsub.f32 %v1463, %v1470
        %v1472 = vmul.f32 %v1471, 1.442695
        %v1473 = vpow.pop %v1472
        %v1474 = vsel %vm1166, %v1473, 0.0
        %1475 = vadd.xlane.f32.xlu0 %v1474
        %v1476 = vpop.xlane.xlu0 %1475
        %v1477 = vrcp.pop %v1476
        %v1478 = vmul.f32 %v1473, %v1477
        %v1479 = vpack.c.bf16 %v1478, %v1478
        %v1481 = vsel %vm1179, %v1479, 0
        %v1484 = vand.u32 %v1421, %v1186
        %1486 = vmatprep.subr.bf16.mxu0 0
        %1487 = vmatpush1.bf16.msra.mxu0 %v1484
        %1488 = vmatprep.subr.bf16.mxu0 0
        %1489 = vmatpush1.bf16.msra.mxu0 0
        %1490 = vmatprep.subr.bf16.mxu0 0
        %1491 = vmatpush1.bf16.msra.mxu0 0
        %1492 = vmatprep.subr.bf16.mxu0 0
        %1493 = vmatpush1.bf16.msra.mxu0 0
        %1494 = vmatprep.subr.bf16.mxu0 0
        %1495 = vmatpush1.bf16.msra.mxu0 0
        %1496 = vmatprep.subr.bf16.mxu0 0
        %1497 = vmatpush1.bf16.msra.mxu0 0
        %1498 = vmatprep.subr.bf16.mxu0 0
        %1499 = vmatpush1.bf16.msra.mxu0 0
        %1500 = vmatprep.subr.bf16.mxu0 0
        %1501 = vmatpush1.bf16.msra.mxu0 0
        %1502 = vmatprep.subr.bf16.mxu0 0
        %1503 = vmatpush1.bf16.msra.mxu0 0
        %1504 = vmatprep.subr.bf16.mxu0 0
        %1505 = vmatpush1.bf16.msra.mxu0 0
        %1506 = vmatprep.subr.bf16.mxu0 0
        %1507 = vmatpush1.bf16.msra.mxu0 0
        %1508 = vmatprep.subr.bf16.mxu0 0
        %1509 = vmatpush1.bf16.msra.mxu0 0
        %1510 = vmatprep.subr.bf16.mxu0 0
        %1511 = vmatpush1.bf16.msra.mxu0 0
        %1512 = vmatprep.subr.bf16.mxu0 0
        %1513 = vmatpush1.bf16.msra.mxu0 0
        %1514 = vmatprep.subr.bf16.mxu0 0
        %1515 = vmatpush1.bf16.msra.mxu0 0
        %1516 = vmatprep.subr.bf16.mxu0 0
        %1517 = vmatpush1.bf16.msra.mxu0 0
        %1518 = vmatprep.mubr.bf16.mxu0 0
        %1519 = vmatmul.mubr.bf16.gmra.mrb[0].mxu0 %v1481
        %v1520 = vpop.f32.mrb[0].mxu0
        %v1521 = vadd.f32 0.0, %v1520
        %v1522 = vpop.f32.mrb[0].mxu0
        %v1523 = vpop.f32.mrb[0].mxu0
        %v1524 = vpop.f32.mrb[0].mxu0
        %1525 = vdwg.mxu0
        %v1526 = vpack.c.bf16 %v1521, %v1521
        %s1527 = scalar_lea.vmem %s701, 4
        %v1528 = vld [vmem:[%s1527] sm:$0xf]
        %v1530 = vsel %vm1119, %v1526, 0
        %vm1532 = vcmask 1043456
        %v1534 = vsel %vm1532, %v1528, 0
        %1536 = vmatprep.subr.bf16.mxu0 0
        %1537 = vmatpush1.bf16.msra.mxu0 %v1534
        %1538 = vmatprep.subr.bf16.mxu0 0
        %1539 = vmatpush1.bf16.msra.mxu0 0
        %1540 = vmatprep.subr.bf16.mxu0 0
        %1541 = vmatpush1.bf16.msra.mxu0 0
        %1542 = vmatprep.subr.bf16.mxu0 0
        %1543 = vmatpush1.bf16.msra.mxu0 0
        %1544 = vmatprep.subr.bf16.mxu0 0
        %1545 = vmatpush1.bf16.msra.mxu0 0
        %1546 = vmatprep.subr.bf16.mxu0 0
        %1547 = vmatpush1.bf16.msra.mxu0 0
        %1548 = vmatprep.subr.bf16.mxu0 0
        %1549 = vmatpush1.bf16.msra.mxu0 0
        %1550 = vmatprep.subr.bf16.mxu0 0
        %1551 = vmatpush1.bf16.msra.mxu0 0
        %1552 = vmatprep.subr.bf16.mxu0 0
        %1553 = vmatpush1.bf16.msra.mxu0 0
        %1554 = vmatprep.subr.bf16.mxu0 0
        %1555 = vmatpush1.bf16.msra.mxu0 0
        %1556 = vmatprep.subr.bf16.mxu0 0
        %1557 = vmatpush1.bf16.msra.mxu0 0
        %1558 = vmatprep.subr.bf16.mxu0 0
        %1559 = vmatpush1.bf16.msra.mxu0 0
        %1560 = vmatprep.subr.bf16.mxu0 0
        %1561 = vmatpush1.bf16.msra.mxu0 0
        %1562 = vmatprep.subr.bf16.mxu0 0
        %1563 = vmatpush1.bf16.msra.mxu0 0
        %1564 = vmatprep.subr.bf16.mxu0 0
        %1565 = vmatpush1.bf16.msra.mxu0 0
        %1566 = vmatprep.subr.bf16.mxu0 0
        %1567 = vmatpush1.bf16.msra.mxu0 0
        %1568 = vmatprep.mubr.bf16.mxu0 0
        %1569 = vmatmul.mubr.bf16.gmra.mrb[0].mxu0 %v1530
        %v1570 = vpop.f32.mrb[0].mxu0
        %v1571 = vadd.f32 0.0, %v1570
        %v1572 = vpop.f32.mrb[0].mxu0
        %v1573 = vpop.f32.mrb[0].mxu0
        %v1574 = vpop.f32.mrb[0].mxu0
        %1575 = vdwg.mxu0
        %v1577 = vsel %vm1119, %v1230, 0
        %v1580 = vsel %vm1532, %v1231, 0
        %1582 = vmatprep.subr.bf16.mxu0 0
        %1583 = vmatpush1.bf16.msra.mxu0 %v1580
        %1584 = vmatprep.subr.bf16.mxu0 0
        %1585 = vmatpush1.bf16.msra.mxu0 0
        %1586 = vmatprep.subr.bf16.mxu0 0
        %1587 = vmatpush1.bf16.msra.mxu0 0
        %1588 = vmatprep.subr.bf16.mxu0 0
        %1589 = vmatpush1.bf16.msra.mxu0 0
        %1590 = vmatprep.subr.bf16.mxu0 0
        %1591 = vmatpush1.bf16.msra.mxu0 0
        %1592 = vmatprep.subr.bf16.mxu0 0
        %1593 = vmatpush1.bf16.msra.mxu0 0
        %1594 = vmatprep.subr.bf16.mxu0 0
        %1595 = vmatpush1.bf16.msra.mxu0 0
        %1596 = vmatprep.subr.bf16.mxu0 0
        %1597 = vmatpush1.bf16.msra.mxu0 0
        %1598 = vmatprep.subr.bf16.mxu0 0
        %1599 = vmatpush1.bf16.msra.mxu0 0
        %1600 = vmatprep.subr.bf16.mxu0 0
        %1601 = vmatpush1.bf16.msra.mxu0 0
        %1602 = vmatprep.subr.bf16.mxu0 0
        %1603 = vmatpush1.bf16.msra.mxu0 0
        %1604 = vmatprep.subr.bf16.mxu0 0
        %1605 = vmatpush1.bf16.msra.mxu0 0
        %1606 = vmatprep.subr.bf16.mxu0 0
        %1607 = vmatpush1.bf16.msra.mxu0 0
        %1608 = vmatprep.subr.bf16.mxu0 0
        %1609 = vmatpush1.bf16.msra.mxu0 0
        %1610 = vmatprep.subr.bf16.mxu0 0
        %1611 = vmatpush1.bf16.msra.mxu0 0
        %1612 = vmatprep.subr.bf16.mxu0 0
        %1613 = vmatpush1.bf16.msra.mxu0 0
        %1614 = vmatprep.mubr.bf16.mxu0 0
        %1615 = vmatmul.mubr.bf16.gmra.mrb[0].mxu0 %v1577
        %v1616 = vpop.f32.mrb[0].mxu0
        %v1617 = vadd.f32 %v1571, %v1616
        %v1618 = vpop.f32.mrb[0].mxu0
        %v1619 = vpop.f32.mrb[0].mxu0
        %v1620 = vpop.f32.mrb[0].mxu0
        %1621 = vdwg.mxu0
        %s1622 = scalar_lea.vmem %s681, 32
        %v1623 = vld [vmem:[%s1622] sm:$0xf]
        %v1624 = vld [vmem:[%s1622 + $0x4] sm:$0xf]
        %v1625 = vld [vmem:[%s1622 + $0x8] sm:$0xf]
        %v1626 = vld [vmem:[%s1622 + $0xc] sm:$0xf]
        %s1627 = scalar_lea.vmem %s696, 8
        %v1628 = vld [vmem:[%s1627] sm:$0x1]
        %v1629 = vlaneseq
        %v1630 = vshrl.u32 %v1629, 7
        %v1631 = vsub.s32 0, %v1630
        %v1632 = vrot.slane %v1628, %v1631
        %v1637 = vunpack.c.l.b16 %v1623
        %v1638 = vunpack.c.l.b16 %v1624
        %v1639 = vunpack.c.l.b16 %v1625
        %v1640 = vunpack.c.l.b16 %v1626
        %v1641 = vpack.c.b16 %v1638, %v1637
        %v1642 = vpack.c.b16 %v1640, %v1639
        %1645 = vmatprep.subr.bf16.mxu0 0
        %1646 = vmatpush1.bf16.msra.mxu0 %v1641
        %1647 = vmatprep.subr.bf16.mxu0 0
        %1648 = vmatpush1.bf16.msra.mxu0 %v1642
        %1649 = vmatprep.subr.bf16.mxu0 0
        %1650 = vmatpush1.bf16.msra.mxu0 0
        %1651 = vmatprep.subr.bf16.mxu0 0
        %1652 = vmatpush1.bf16.msra.mxu0 0
        %1653 = vmatprep.subr.bf16.mxu0 0
        %1654 = vmatpush1.bf16.msra.mxu0 0
        %1655 = vmatprep.subr.bf16.mxu0 0
        %1656 = vmatpush1.bf16.msra.mxu0 0
        %1657 = vmatprep.subr.bf16.mxu0 0
        %1658 = vmatpush1.bf16.msra.mxu0 0
        %1659 = vmatprep.subr.bf16.mxu0 0
        %1660 = vmatpush1.bf16.msra.mxu0 0
        %1661 = vmatprep.subr.bf16.mxu0 0
        %1662 = vmatpush1.bf16.msra.mxu0 0
        %1663 = vmatprep.subr.bf16.mxu0 0
        %1664 = vmatpush1.bf16.msra.mxu0 0
        %1665 = vmatprep.subr.bf16.mxu0 0
        %1666 = vmatpush1.bf16.msra.mxu0 0
        %1667 = vmatprep.subr.bf16.mxu0 0
        %1668 = vmatpush1.bf16.msra.mxu0 0
        %1669 = vmatprep.subr.bf16.mxu0 0
        %1670 = vmatpush1.bf16.msra.mxu0 0
        %1671 = vmatprep.subr.bf16.mxu0 0
        %1672 = vmatpush1.bf16.msra.mxu0 0
        %1673 = vmatprep.subr.bf16.mxu0 0
        %1674 = vmatpush1.bf16.msra.mxu0 0
        %1675 = vmatprep.subr.bf16.mxu0 0
        %1676 = vmatpush1.bf16.msra.mxu0 0
        %1677 = vmatprep.mubr.bf16.mxu0 0
        %1678 = vmatmul.mubr.bf16.gmra.mrb[0].mxu0 %v952
        %v1679 = vpop.f32.mrb[0].mxu0
        %v1680 = vadd.f32 %v1632, %v1679
        %v1681 = vpop.f32.mrb[0].mxu0
        %v1682 = vpop.f32.mrb[0].mxu0
        %v1683 = vpop.f32.mrb[0].mxu0
        %1684 = vdwg.mxu0
        %v1685 = vpack.c.bf16 %v1680, %v1680
        %s1686 = scalar_lea.vmem %s686, 32
        %v1687 = vld [vmem:[%s1686] sm:$0xf]
        %v1688 = vld [vmem:[%s1686 + $0x4] sm:$0xf]
        %v1689 = vld [vmem:[%s1686 + $0x8] sm:$0xf]
        %v1690 = vld [vmem:[%s1686 + $0xc] sm:$0xf]
        %v1691 = vld [vmem:[%s1627 + $0x1] sm:$0x1]
        %v1692 = vlaneseq
        %v1693 = vshrl.u32 %v1692, 7
        %v1694 = vsub.s32 0, %v1693
        %v1695 = vrot.slane %v1691, %v1694
        %v1700 = vunpack.c.l.b16 %v1687
        %v1701 = vunpack.c.l.b16 %v1688
        %v1702 = vunpack.c.l.b16 %v1689
        %v1703 = vunpack.c.l.b16 %v1690
        %v1704 = vpack.c.b16 %v1701, %v1700
        %v1705 = vpack.c.b16 %v1703, %v1702
        %1708 = vmatprep.subr.bf16.mxu0 0
        %1709 = vmatpush1.bf16.msra.mxu0 %v1704
        %1710 = vmatprep.subr.bf16.mxu0 0
        %1711 = vmatpush1.bf16.msra.mxu0 %v1705
        %1712 = vmatprep.subr.bf16.mxu0 0
        %1713 = vmatpush1.bf16.msra.mxu0 0
        %1714 = vmatprep.subr.bf16.mxu0 0
        %1715 = vmatpush1.bf16.msra.mxu0 0
        %1716 = vmatprep.subr.bf16.mxu0 0
        %1717 = vmatpush1.bf16.msra.mxu0 0
        %1718 = vmatprep.subr.bf16.mxu0 0
        %1719 = vmatpush1.bf16.msra.mxu0 0
        %1720 = vmatprep.subr.bf16.mxu0 0
        %1721 = vmatpush1.bf16.msra.mxu0 0
        %1722 = vmatprep.subr.bf16.mxu0 0
        %1723 = vmatpush1.bf16.msra.mxu0 0
        %1724 = vmatprep.subr.bf16.mxu0 0
        %1725 = vmatpush1.bf16.msra.mxu0 0
        %1726 = vmatprep.subr.bf16.mxu0 0
        %1727 = vmatpush1.bf16.msra.mxu0 0
        %1728 = vmatprep.subr.bf16.mxu0 0
        %1729 = vmatpush1.bf16.msra.mxu0 0
        %1730 = vmatprep.subr.bf16.mxu0 0
        %1731 = vmatpush1.bf16.msra.mxu0 0
        %1732 = vmatprep.subr.bf16.mxu0 0
        %1733 = vmatpush1.bf16.msra.mxu0 0
        %1734 = vmatprep.subr.bf16.mxu0 0
        %1735 = vmatpush1.bf16.msra.mxu0 0
        %1736 = vmatprep.subr.bf16.mxu0 0
        %1737 = vmatpush1.bf16.msra.mxu0 0
        %1738 = vmatprep.subr.bf16.mxu0 0
        %1739 = vmatpush1.bf16.msra.mxu0 0
        %1740 = vmatprep.mubr.bf16.mxu0 0
        %1741 = vmatmul.mubr.bf16.gmra.mrb[0].mxu0 %v952
        %v1742 = vpop.f32.mrb[0].mxu0
        %v1743 = vadd.f32 %v1695, %v1742
        %v1744 = vpop.f32.mrb[0].mxu0
        %v1745 = vpop.f32.mrb[0].mxu0
        %v1746 = vpop.f32.mrb[0].mxu0
        %1747 = vdwg.mxu0
        %v1748 = vpack.c.bf16 %v1743, %v1743
        %s1749 = scalar_lea.vmem %s691, 32
        %v1750 = vld [vmem:[%s1749] sm:$0xf]
        %v1751 = vld [vmem:[%s1749 + $0x4] sm:$0xf]
        %v1752 = vld [vmem:[%s1749 + $0x8] sm:$0xf]
        %v1753 = vld [vmem:[%s1749 + $0xc] sm:$0xf]
        %v1754 = vld [vmem:[%s1627 + $0x2] sm:$0x1]
        %v1755 = vlaneseq
        %v1756 = vshrl.u32 %v1755, 7
        %v1757 = vsub.s32 0, %v1756
        %v1758 = vrot.slane %v1754, %v1757
        %v1763 = vunpack.c.l.b16 %v1750
        %v1764 = vunpack.c.l.b16 %v1751
        %v1765 = vunpack.c.l.b16 %v1752
        %v1766 = vunpack.c.l.b16 %v1753
        %v1767 = vpack.c.b16 %v1764, %v1763
        %v1768 = vpack.c.b16 %v1766, %v1765
        %1771 = vmatprep.subr.bf16.mxu0 0
        %1772 = vmatpush1.bf16.msra.mxu0 %v1767
        %1773 = vmatprep.subr.bf16.mxu0 0
        %1774 = vmatpush1.bf16.msra.mxu0 %v1768
        %1775 = vmatprep.subr.bf16.mxu0 0
        %1776 = vmatpush1.bf16.msra.mxu0 0
        %1777 = vmatprep.subr.bf16.mxu0 0
        %1778 = vmatpush1.bf16.msra.mxu0 0
        %1779 = vmatprep.subr.bf16.mxu0 0
        %1780 = vmatpush1.bf16.msra.mxu0 0
        %1781 = vmatprep.subr.bf16.mxu0 0
        %1782 = vmatpush1.bf16.msra.mxu0 0
        %1783 = vmatprep.subr.bf16.mxu0 0
        %1784 = vmatpush1.bf16.msra.mxu0 0
        %1785 = vmatprep.subr.bf16.mxu0 0
        %1786 = vmatpush1.bf16.msra.mxu0 0
        %1787 = vmatprep.subr.bf16.mxu0 0
        %1788 = vmatpush1.bf16.msra.mxu0 0
        %1789 = vmatprep.subr.bf16.mxu0 0
        %1790 = vmatpush1.bf16.msra.mxu0 0
        %1791 = vmatprep.subr.bf16.mxu0 0
        %1792 = vmatpush1.bf16.msra.mxu0 0
        %1793 = vmatprep.subr.bf16.mxu0 0
        %1794 = vmatpush1.bf16.msra.mxu0 0
        %1795 = vmatprep.subr.bf16.mxu0 0
        %1796 = vmatpush1.bf16.msra.mxu0 0
        %1797 = vmatprep.subr.bf16.mxu0 0
        %1798 = vmatpush1.bf16.msra.mxu0 0
        %1799 = vmatprep.subr.bf16.mxu0 0
        %1800 = vmatpush1.bf16.msra.mxu0 0
        %1801 = vmatprep.subr.bf16.mxu0 0
        %1802 = vmatpush1.bf16.msra.mxu0 0
        %1803 = vmatprep.mubr.bf16.mxu0 0
        %1804 = vmatmul.mubr.bf16.gmra.mrb[0].mxu0 %v952
        %v1805 = vpop.f32.mrb[0].mxu0
        %v1806 = vadd.f32 %v1758, %v1805
        %v1807 = vpop.f32.mrb[0].mxu0
        %v1808 = vpop.f32.mrb[0].mxu0
        %v1809 = vpop.f32.mrb[0].mxu0
        %1810 = vdwg.mxu0
        %v1811 = vpack.c.bf16 %v1806, %v1806
        %v1813 = vsel %vm1119, %v1685, 0
        %v1816 = vsel %vm1119, %v1748, 0
        %1818 = vmatprep.subr.bf16.mxu0 0
        %1819 = vmatpush1.bf16.xpose.msra.mxu0 %v1816
        %1820 = vmatprep.subr.bf16.mxu0 0
        %1821 = vmatpush1.bf16.xpose.msra.mxu0 0
        %1822 = vmatprep.subr.bf16.mxu0 0
        %1823 = vmatpush1.bf16.xpose.msra.mxu0 0
        %1824 = vmatprep.subr.bf16.mxu0 0
        %1825 = vmatpush1.bf16.xpose.msra.mxu0 0
        %1826 = vmatprep.subr.bf16.mxu0 0
        %1827 = vmatpush1.bf16.xpose.msra.mxu0 0
        %1828 = vmatprep.subr.bf16.mxu0 0
        %1829 = vmatpush1.bf16.xpose.msra.mxu0 0
        %1830 = vmatprep.subr.bf16.mxu0 0
        %1831 = vmatpush1.bf16.xpose.msra.mxu0 0
        %1832 = vmatprep.subr.bf16.mxu0 0
        %1833 = vmatpush1.bf16.xpose.msra.mxu0 0
        %1834 = vmatprep.subr.bf16.mxu0 0
        %1835 = vmatpush1.bf16.xpose.msra.mxu0 0
        %1836 = vmatprep.subr.bf16.mxu0 0
        %1837 = vmatpush1.bf16.xpose.msra.mxu0 0
        %1838 = vmatprep.subr.bf16.mxu0 0
        %1839 = vmatpush1.bf16.xpose.msra.mxu0 0
        %1840 = vmatprep.subr.bf16.mxu0 0
        %1841 = vmatpush1.bf16.xpose.msra.mxu0 0
        %1842 = vmatprep.subr.bf16.mxu0 0
        %1843 = vmatpush1.bf16.xpose.msra.mxu0 0
        %1844 = vmatprep.subr.bf16.mxu0 0
        %1845 = vmatpush1.bf16.xpose.msra.mxu0 0
        %1846 = vmatprep.subr.bf16.mxu0 0
        %1847 = vmatpush1.bf16.xpose.msra.mxu0 0
        %1848 = vmatprep.subr.bf16.mxu0 0
        %1849 = vmatpush1.bf16.xpose.msra.mxu0 0
        %1850 = vmatprep.mubr.bf16.mxu0 0
        %1851 = vmatmul.mubr.bf16.gmra.mrb[0].mxu0 %v1813
        %v1852 = vpop.f32.mrb[0].mxu0
        %v1853 = vadd.f32 0.0, %v1852
        %v1854 = vpop.f32.mrb[0].mxu0
        %v1855 = vpop.f32.mrb[0].mxu0
        %v1856 = vpop.f32.mrb[0].mxu0
        %1857 = vdwg.mxu0
        %v1858 = vsel %vm1166, %v1853, -inf
        %1859 = vmax.xlane.f32.xlu0 %v1858
        %v1860 = vpop.xlane.xlu0 %1859
        %v1861 = vsub.f32 %v1853, %v1860
        %v1862 = vmul.f32 %v1861, 1.442695
        %v1863 = vpow.pop %v1862
        %v1864 = vsel %vm1166, %v1863, 0.0
        %1865 = vadd.xlane.f32.xlu0 %v1864
        %v1866 = vpop.xlane.xlu0 %1865
        %v1867 = vrcp.pop %v1866
        %v1868 = vmul.f32 %v1863, %v1867
        %v1869 = vpack.c.bf16 %v1868, %v1868
        %v1871 = vsel %vm1179, %v1869, 0
        %v1874 = vand.u32 %v1811, %v1186
        %1876 = vmatprep.subr.bf16.mxu0 0
        %1877 = vmatpush1.bf16.msra.mxu0 %v1874
        %1878 = vmatprep.subr.bf16.mxu0 0
        %1879 = vmatpush1.bf16.msra.mxu0 0
        %1880 = vmatprep.subr.bf16.mxu0 0
        %1881 = vmatpush1.bf16.msra.mxu0 0
        %1882 = vmatprep.subr.bf16.mxu0 0
        %1883 = vmatpush1.bf16.msra.mxu0 0
        %1884 = vmatprep.subr.bf16.mxu0 0
        %1885 = vmatpush1.bf16.msra.mxu0 0
        %1886 = vmatprep.subr.bf16.mxu0 0
        %1887 = vmatpush1.bf16.msra.mxu0 0
        %1888 = vmatprep.subr.bf16.mxu0 0
        %1889 = vmatpush1.bf16.msra.mxu0 0
        %1890 = vmatprep.subr.bf16.mxu0 0
        %1891 = vmatpush1.bf16.msra.mxu0 0
        %1892 = vmatprep.subr.bf16.mxu0 0
        %1893 = vmatpush1.bf16.msra.mxu0 0
        %1894 = vmatprep.subr.bf16.mxu0 0
        %1895 = vmatpush1.bf16.msra.mxu0 0
        %1896 = vmatprep.subr.bf16.mxu0 0
        %1897 = vmatpush1.bf16.msra.mxu0 0
        %1898 = vmatprep.subr.bf16.mxu0 0
        %1899 = vmatpush1.bf16.msra.mxu0 0
        %1900 = vmatprep.subr.bf16.mxu0 0
        %1901 = vmatpush1.bf16.msra.mxu0 0
        %1902 = vmatprep.subr.bf16.mxu0 0
        %1903 = vmatpush1.bf16.msra.mxu0 0
        %1904 = vmatprep.subr.bf16.mxu0 0
        %1905 = vmatpush1.bf16.msra.mxu0 0
        %1906 = vmatprep.subr.bf16.mxu0 0
        %1907 = vmatpush1.bf16.msra.mxu0 0
        %1908 = vmatprep.mubr.bf16.mxu0 0
        %1909 = vmatmul.mubr.bf16.gmra.mrb[0].mxu0 %v1871
        %v1910 = vpop.f32.mrb[0].mxu0
        %v1911 = vadd.f32 0.0, %v1910
        %v1912 = vpop.f32.mrb[0].mxu0
        %v1913 = vpop.f32.mrb[0].mxu0
        %v1914 = vpop.f32.mrb[0].mxu0
        %1915 = vdwg.mxu0
        %v1916 = vpack.c.bf16 %v1911, %v1911
        %s1917 = scalar_lea.vmem %s701, 8
        %v1918 = vld [vmem:[%s1917] sm:$0xf]
        %v1920 = vsel %vm1119, %v1916, 0
        %v1923 = vsel %vm1532, %v1918, 0
        %1925 = vmatprep.subr.bf16.mxu0 0
        %1926 = vmatpush1.bf16.msra.mxu0 %v1923
        %1927 = vmatprep.subr.bf16.mxu0 0
        %1928 = vmatpush1.bf16.msra.mxu0 0
        %1929 = vmatprep.subr.bf16.mxu0 0
        %1930 = vmatpush1.bf16.msra.mxu0 0
        %1931 = vmatprep.subr.bf16.mxu0 0
        %1932 = vmatpush1.bf16.msra.mxu0 0
        %1933 = vmatprep.subr.bf16.mxu0 0
        %1934 = vmatpush1.bf16.msra.mxu0 0
        %1935 = vmatprep.subr.bf16.mxu0 0
        %1936 = vmatpush1.bf16.msra.mxu0 0
        %1937 = vmatprep.subr.bf16.mxu0 0
        %1938 = vmatpush1.bf16.msra.mxu0 0
        %1939 = vmatprep.subr.bf16.mxu0 0
        %1940 = vmatpush1.bf16.msra.mxu0 0
        %1941 = vmatprep.subr.bf16.mxu0 0
        %1942 = vmatpush1.bf16.msra.mxu0 0
        %1943 = vmatprep.subr.bf16.mxu0 0
        %1944 = vmatpush1.bf16.msra.mxu0 0
        %1945 = vmatprep.subr.bf16.mxu0 0
        %1946 = vmatpush1.bf16.msra.mxu0 0
        %1947 = vmatprep.subr.bf16.mxu0 0
        %1948 = vmatpush1.bf16.msra.mxu0 0
        %1949 = vmatprep.subr.bf16.mxu0 0
        %1950 = vmatpush1.bf16.msra.mxu0 0
        %1951 = vmatprep.subr.bf16.mxu0 0
        %1952 = vmatpush1.bf16.msra.mxu0 0
        %1953 = vmatprep.subr.bf16.mxu0 0
        %1954 = vmatpush1.bf16.msra.mxu0 0
        %1955 = vmatprep.subr.bf16.mxu0 0
        %1956 = vmatpush1.bf16.msra.mxu0 0
        %1957 = vmatprep.mubr.bf16.mxu0 0
        %1958 = vmatmul.mubr.bf16.gmra.mrb[0].mxu0 %v1920
        %v1959 = vpop.f32.mrb[0].mxu0
        %v1960 = vadd.f32 0.0, %v1959
        %v1961 = vpop.f32.mrb[0].mxu0
        %v1962 = vpop.f32.mrb[0].mxu0
        %v1963 = vpop.f32.mrb[0].mxu0
        %1964 = vdwg.mxu0
        %v1965 = vadd.f32 %v1617, %v1960
        %s1966 = scalar_lea.vmem %s681, 48
        %v1967 = vld [vmem:[%s1966] sm:$0xf]
        %v1968 = vld [vmem:[%s1966 + $0x4] sm:$0xf]
        %v1969 = vld [vmem:[%s1966 + $0x8] sm:$0xf]
        %v1970 = vld [vmem:[%s1966 + $0xc] sm:$0xf]
        %s1971 = scalar_lea.vmem %s696, 12
        %v1972 = vld [vmem:[%s1971] sm:$0x1]
        %v1973 = vlaneseq
        %v1974 = vshrl.u32 %v1973, 7
        %v1975 = vsub.s32 0, %v1974
        %v1976 = vrot.slane %v1972, %v1975
        %v1981 = vunpack.c.l.b16 %v1967
        %v1982 = vunpack.c.l.b16 %v1968
        %v1983 = vunpack.c.l.b16 %v1969
        %v1984 = vunpack.c.l.b16 %v1970
        %v1985 = vpack.c.b16 %v1982, %v1981
        %v1986 = vpack.c.b16 %v1984, %v1983
        %1989 = vmatprep.subr.bf16.mxu0 0
        %1990 = vmatpush1.bf16.msra.mxu0 %v1985
        %1991 = vmatprep.subr.bf16.mxu0 0
        %1992 = vmatpush1.bf16.msra.mxu0 %v1986
        %1993 = vmatprep.subr.bf16.mxu0 0
        %1994 = vmatpush1.bf16.msra.mxu0 0
        %1995 = vmatprep.subr.bf16.mxu0 0
        %1996 = vmatpush1.bf16.msra.mxu0 0
        %1997 = vmatprep.subr.bf16.mxu0 0
        %1998 = vmatpush1.bf16.msra.mxu0 0
        %1999 = vmatprep.subr.bf16.mxu0 0
        %2000 = vmatpush1.bf16.msra.mxu0 0
        %2001 = vmatprep.subr.bf16.mxu0 0
        %2002 = vmatpush1.bf16.msra.mxu0 0
        %2003 = vmatprep.subr.bf16.mxu0 0
        %2004 = vmatpush1.bf16.msra.mxu0 0
        %2005 = vmatprep.subr.bf16.mxu0 0
        %2006 = vmatpush1.bf16.msra.mxu0 0
        %2007 = vmatprep.subr.bf16.mxu0 0
        %2008 = vmatpush1.bf16.msra.mxu0 0
        %2009 = vmatprep.subr.bf16.mxu0 0
        %2010 = vmatpush1.bf16.msra.mxu0 0
        %2011 = vmatprep.subr.bf16.mxu0 0
        %2012 = vmatpush1.bf16.msra.mxu0 0
        %2013 = vmatprep.subr.bf16.mxu0 0
        %2014 = vmatpush1.bf16.msra.mxu0 0
        %2015 = vmatprep.subr.bf16.mxu0 0
        %2016 = vmatpush1.bf16.msra.mxu0 0
        %2017 = vmatprep.subr.bf16.mxu0 0
        %2018 = vmatpush1.bf16.msra.mxu0 0
        %2019 = vmatprep.subr.bf16.mxu0 0
        %2020 = vmatpush1.bf16.msra.mxu0 0
        %2021 = vmatprep.mubr.bf16.mxu0 0
        %2022 = vmatmul.mubr.bf16.gmra.mrb[0].mxu0 %v952
        %v2023 = vpop.f32.mrb[0].mxu0
        %v2024 = vadd.f32 %v1976, %v2023
        %v2025 = vpop.f32.mrb[0].mxu0
        %v2026 = vpop.f32.mrb[0].mxu0
        %v2027 = vpop.f32.mrb[0].mxu0
        %2028 = vdwg.mxu0
        %v2029 = vpack.c.bf16 %v2024, %v2024
        %s2030 = scalar_lea.vmem %s686, 48
        %v2031 = vld [vmem:[%s2030] sm:$0xf]
        %v2032 = vld [vmem:[%s2030 + $0x4] sm:$0xf]
        %v2033 = vld [vmem:[%s2030 + $0x8] sm:$0xf]
        %v2034 = vld [vmem:[%s2030 + $0xc] sm:$0xf]
        %v2035 = vld [vmem:[%s1971 + $0x1] sm:$0x1]
        %v2036 = vlaneseq
        %v2037 = vshrl.u32 %v2036, 7
        %v2038 = vsub.s32 0, %v2037
        %v2039 = vrot.slane %v2035, %v2038
        %v2044 = vunpack.c.l.b16 %v2031
        %v2045 = vunpack.c.l.b16 %v2032
        %v2046 = vunpack.c.l.b16 %v2033
        %v2047 = vunpack.c.l.b16 %v2034
        %v2048 = vpack.c.b16 %v2045, %v2044
        %v2049 = vpack.c.b16 %v2047, %v2046
        %2052 = vmatprep.subr.bf16.mxu0 0
        %2053 = vmatpush1.bf16.msra.mxu0 %v2048
        %2054 = vmatprep.subr.bf16.mxu0 0
        %2055 = vmatpush1.bf16.msra.mxu0 %v2049
        %2056 = vmatprep.subr.bf16.mxu0 0
        %2057 = vmatpush1.bf16.msra.mxu0 0
        %2058 = vmatprep.subr.bf16.mxu0 0
        %2059 = vmatpush1.bf16.msra.mxu0 0
        %2060 = vmatprep.subr.bf16.mxu0 0
        %2061 = vmatpush1.bf16.msra.mxu0 0
        %2062 = vmatprep.subr.bf16.mxu0 0
        %2063 = vmatpush1.bf16.msra.mxu0 0
        %2064 = vmatprep.subr.bf16.mxu0 0
        %2065 = vmatpush1.bf16.msra.mxu0 0
        %2066 = vmatprep.subr.bf16.mxu0 0
        %2067 = vmatpush1.bf16.msra.mxu0 0
        %2068 = vmatprep.subr.bf16.mxu0 0
        %2069 = vmatpush1.bf16.msra.mxu0 0
        %2070 = vmatprep.subr.bf16.mxu0 0
        %2071 = vmatpush1.bf16.msra.mxu0 0
        %2072 = vmatprep.subr.bf16.mxu0 0
        %2073 = vmatpush1.bf16.msra.mxu0 0
        %2074 = vmatprep.subr.bf16.mxu0 0
        %2075 = vmatpush1.bf16.msra.mxu0 0
        %2076 = vmatprep.subr.bf16.mxu0 0
        %2077 = vmatpush1.bf16.msra.mxu0 0
        %2078 = vmatprep.subr.bf16.mxu0 0
        %2079 = vmatpush1.bf16.msra.mxu0 0
        %2080 = vmatprep.subr.bf16.mxu0 0
        %2081 = vmatpush1.bf16.msra.mxu0 0
        %2082 = vmatprep.subr.bf16.mxu0 0
        %2083 = vmatpush1.bf16.msra.mxu0 0
        %2084 = vmatprep.mubr.bf16.mxu0 0
        %2085 = vmatmul.mubr.bf16.gmra.mrb[0].mxu0 %v952
        %v2086 = vpop.f32.mrb[0].mxu0
        %v2087 = vadd.f32 %v2039, %v2086
        %v2088 = vpop.f32.mrb[0].mxu0
        %v2089 = vpop.f32.mrb[0].mxu0
        %v2090 = vpop.f32.mrb[0].mxu0
        %2091 = vdwg.mxu0
        %v2092 = vpack.c.bf16 %v2087, %v2087
        %s2093 = scalar_lea.vmem %s691, 48
        %v2094 = vld [vmem:[%s2093] sm:$0xf]
        %v2095 = vld [vmem:[%s2093 + $0x4] sm:$0xf]
        %v2096 = vld [vmem:[%s2093 + $0x8] sm:$0xf]
        %v2097 = vld [vmem:[%s2093 + $0xc] sm:$0xf]
        %v2098 = vld [vmem:[%s1971 + $0x2] sm:$0x1]
        %v2099 = vlaneseq
        %v2100 = vshrl.u32 %v2099, 7
        %v2101 = vsub.s32 0, %v2100
        %v2102 = vrot.slane %v2098, %v2101
        %v2107 = vunpack.c.l.b16 %v2094
        %v2108 = vunpack.c.l.b16 %v2095
        %v2109 = vunpack.c.l.b16 %v2096
        %v2110 = vunpack.c.l.b16 %v2097
        %v2111 = vpack.c.b16 %v2108, %v2107
        %v2112 = vpack.c.b16 %v2110, %v2109
        %2115 = vmatprep.subr.bf16.mxu0 0
        %2116 = vmatpush1.bf16.msra.mxu0 %v2111
        %2117 = vmatprep.subr.bf16.mxu0 0
        %2118 = vmatpush1.bf16.msra.mxu0 %v2112
        %2119 = vmatprep.subr.bf16.mxu0 0
        %2120 = vmatpush1.bf16.msra.mxu0 0
        %2121 = vmatprep.subr.bf16.mxu0 0
        %2122 = vmatpush1.bf16.msra.mxu0 0
        %2123 = vmatprep.subr.bf16.mxu0 0
        %2124 = vmatpush1.bf16.msra.mxu0 0
        %2125 = vmatprep.subr.bf16.mxu0 0
        %2126 = vmatpush1.bf16.msra.mxu0 0
        %2127 = vmatprep.subr.bf16.mxu0 0
        %2128 = vmatpush1.bf16.msra.mxu0 0
        %2129 = vmatprep.subr.bf16.mxu0 0
        %2130 = vmatpush1.bf16.msra.mxu0 0
        %2131 = vmatprep.subr.bf16.mxu0 0
        %2132 = vmatpush1.bf16.msra.mxu0 0
        %2133 = vmatprep.subr.bf16.mxu0 0
        %2134 = vmatpush1.bf16.msra.mxu0 0
        %2135 = vmatprep.subr.bf16.mxu0 0
        %2136 = vmatpush1.bf16.msra.mxu0 0
        %2137 = vmatprep.subr.bf16.mxu0 0
        %2138 = vmatpush1.bf16.msra.mxu0 0
        %2139 = vmatprep.subr.bf16.mxu0 0
        %2140 = vmatpush1.bf16.msra.mxu0 0
        %2141 = vmatprep.subr.bf16.mxu0 0
        %2142 = vmatpush1.bf16.msra.mxu0 0
        %2143 = vmatprep.subr.bf16.mxu0 0
        %2144 = vmatpush1.bf16.msra.mxu0 0
        %2145 = vmatprep.subr.bf16.mxu0 0
        %2146 = vmatpush1.bf16.msra.mxu0 0
        %2147 = vmatprep.mubr.bf16.mxu0 0
        %2148 = vmatmul.mubr.bf16.gmra.mrb[0].mxu0 %v952
        %v2149 = vpop.f32.mrb[0].mxu0
        %v2150 = vadd.f32 %v2102, %v2149
        %v2151 = vpop.f32.mrb[0].mxu0
        %v2152 = vpop.f32.mrb[0].mxu0
        %v2153 = vpop.f32.mrb[0].mxu0
        %2154 = vdwg.mxu0
        %v2155 = vpack.c.bf16 %v2150, %v2150
        %v2157 = vsel %vm1119, %v2029, 0
        %v2160 = vsel %vm1119, %v2092, 0
        %2162 = vmatprep.subr.bf16.mxu0 0
        %2163 = vmatpush1.bf16.xpose.msra.mxu0 %v2160
        %2164 = vmatprep.subr.bf16.mxu0 0
        %2165 = vmatpush1.bf16.xpose.msra.mxu0 0
        %2166 = vmatprep.subr.bf16.mxu0 0
        %2167 = vmatpush1.bf16.xpose.msra.mxu0 0
        %2168 = vmatprep.subr.bf16.mxu0 0
        %2169 = vmatpush1.bf16.xpose.msra.mxu0 0
        %2170 = vmatprep.subr.bf16.mxu0 0
        %2171 = vmatpush1.bf16.xpose.msra.mxu0 0
        %2172 = vmatprep.subr.bf16.mxu0 0
        %2173 = vmatpush1.bf16.xpose.msra.mxu0 0
        %2174 = vmatprep.subr.bf16.mxu0 0
        %2175 = vmatpush1.bf16.xpose.msra.mxu0 0
        %2176 = vmatprep.subr.bf16.mxu0 0
        %2177 = vmatpush1.bf16.xpose.msra.mxu0 0
        %2178 = vmatprep.subr.bf16.mxu0 0
        %2179 = vmatpush1.bf16.xpose.msra.mxu0 0
        %2180 = vmatprep.subr.bf16.mxu0 0
        %2181 = vmatpush1.bf16.xpose.msra.mxu0 0
        %2182 = vmatprep.subr.bf16.mxu0 0
        %2183 = vmatpush1.bf16.xpose.msra.mxu0 0
        %2184 = vmatprep.subr.bf16.mxu0 0
        %2185 = vmatpush1.bf16.xpose.msra.mxu0 0
        %2186 = vmatprep.subr.bf16.mxu0 0
        %2187 = vmatpush1.bf16.xpose.msra.mxu0 0
        %2188 = vmatprep.subr.bf16.mxu0 0
        %2189 = vmatpush1.bf16.xpose.msra.mxu0 0
        %2190 = vmatprep.subr.bf16.mxu0 0
        %2191 = vmatpush1.bf16.xpose.msra.mxu0 0
        %2192 = vmatprep.subr.bf16.mxu0 0
        %2193 = vmatpush1.bf16.xpose.msra.mxu0 0
        %2194 = vmatprep.mubr.bf16.mxu0 0
        %2195 = vmatmul.mubr.bf16.gmra.mrb[0].mxu0 %v2157
        %v2196 = vpop.f32.mrb[0].mxu0
        %v2197 = vadd.f32 0.0, %v2196
        %v2198 = vpop.f32.mrb[0].mxu0
        %v2199 = vpop.f32.mrb[0].mxu0
        %v2200 = vpop.f32.mrb[0].mxu0
        %2201 = vdwg.mxu0
        %v2202 = vsel %vm1166, %v2197, -inf
        %2203 = vmax.xlane.f32.xlu0 %v2202
        %v2204 = vpop.xlane.xlu0 %2203
        %v2205 = vsub.f32 %v2197, %v2204
        %v2206 = vmul.f32 %v2205, 1.442695
        %v2207 = vpow.pop %v2206
        %v2208 = vsel %vm1166, %v2207, 0.0
        %2209 = vadd.xlane.f32.xlu0 %v2208
        %v2210 = vpop.xlane.xlu0 %2209
        %v2211 = vrcp.pop %v2210
        %v2212 = vmul.f32 %v2207, %v2211
        %v2213 = vpack.c.bf16 %v2212, %v2212
        %v2215 = vsel %vm1179, %v2213, 0
        %v2218 = vand.u32 %v2155, %v1186
        %2220 = vmatprep.subr.bf16.mxu0 0
        %2221 = vmatpush1.bf16.msra.mxu0 %v2218
        %2222 = vmatprep.subr.bf16.mxu0 0
        %2223 = vmatpush1.bf16.msra.mxu0 0
        %2224 = vmatprep.subr.bf16.mxu0 0
        %2225 = vmatpush1.bf16.msra.mxu0 0
        %2226 = vmatprep.subr.bf16.mxu0 0
        %2227 = vmatpush1.bf16.msra.mxu0 0
        %2228 = vmatprep.subr.bf16.mxu0 0
        %2229 = vmatpush1.bf16.msra.mxu0 0
        %2230 = vmatprep.subr.bf16.mxu0 0
        %2231 = vmatpush1.bf16.msra.mxu0 0
        %2232 = vmatprep.subr.bf16.mxu0 0
        %2233 = vmatpush1.bf16.msra.mxu0 0
        %2234 = vmatprep.subr.bf16.mxu0 0
        %2235 = vmatpush1.bf16.msra.mxu0 0
        %2236 = vmatprep.subr.bf16.mxu0 0
        %2237 = vmatpush1.bf16.msra.mxu0 0
        %2238 = vmatprep.subr.bf16.mxu0 0
        %2239 = vmatpush1.bf16.msra.mxu0 0
        %2240 = vmatprep.subr.bf16.mxu0 0
        %2241 = vmatpush1.bf16.msra.mxu0 0
        %2242 = vmatprep.subr.bf16.mxu0 0
        %2243 = vmatpush1.bf16.msra.mxu0 0
        %2244 = vmatprep.subr.bf16.mxu0 0
        %2245 = vmatpush1.bf16.msra.mxu0 0
        %2246 = vmatprep.subr.bf16.mxu0 0
        %2247 = vmatpush1.bf16.msra.mxu0 0
        %2248 = vmatprep.subr.bf16.mxu0 0
        %2249 = vmatpush1.bf16.msra.mxu0 0
        %2250 = vmatprep.subr.bf16.mxu0 0
        %2251 = vmatpush1.bf16.msra.mxu0 0
        %2252 = vmatprep.mubr.bf16.mxu0 0
        %2253 = vmatmul.mubr.bf16.gmra.mrb[0].mxu0 %v2215
        %v2254 = vpop.f32.mrb[0].mxu0
        %v2255 = vadd.f32 0.0, %v2254
        %v2256 = vpop.f32.mrb[0].mxu0
        %v2257 = vpop.f32.mrb[0].mxu0
        %v2258 = vpop.f32.mrb[0].mxu0
        %2259 = vdwg.mxu0
        %v2260 = vpack.c.bf16 %v2255, %v2255
        %s2261 = scalar_lea.vmem %s701, 12
        %v2262 = vld [vmem:[%s2261] sm:$0xf]
        %v2264 = vsel %vm1119, %v2260, 0
        %v2267 = vsel %vm1532, %v2262, 0
        %2269 = vmatprep.subr.bf16.mxu0 0
        %2270 = vmatpush1.bf16.msra.mxu0 %v2267
        %2271 = vmatprep.subr.bf16.mxu0 0
        %2272 = vmatpush1.bf16.msra.mxu0 0
        %2273 = vmatprep.subr.bf16.mxu0 0
        %2274 = vmatpush1.bf16.msra.mxu0 0
        %2275 = vmatprep.subr.bf16.mxu0 0
        %2276 = vmatpush1.bf16.msra.mxu0 0
        %2277 = vmatprep.subr.bf16.mxu0 0
        %2278 = vmatpush1.bf16.msra.mxu0 0
        %2279 = vmatprep.subr.bf16.mxu0 0
        %2280 = vmatpush1.bf16.msra.mxu0 0
        %2281 = vmatprep.subr.bf16.mxu0 0
        %2282 = vmatpush1.bf16.msra.mxu0 0
        %2283 = vmatprep.subr.bf16.mxu0 0
        %2284 = vmatpush1.bf16.msra.mxu0 0
        %2285 = vmatprep.subr.bf16.mxu0 0
        %2286 = vmatpush1.bf16.msra.mxu0 0
        %2287 = vmatprep.subr.bf16.mxu0 0
        %2288 = vmatpush1.bf16.msra.mxu0 0
        %2289 = vmatprep.subr.bf16.mxu0 0
        %2290 = vmatpush1.bf16.msra.mxu0 0
        %2291 = vmatprep.subr.bf16.mxu0 0
        %2292 = vmatpush1.bf16.msra.mxu0 0
        %2293 = vmatprep.subr.bf16.mxu0 0
        %2294 = vmatpush1.bf16.msra.mxu0 0
        %2295 = vmatprep.subr.bf16.mxu0 0
        %2296 = vmatpush1.bf16.msra.mxu0 0
        %2297 = vmatprep.subr.bf16.mxu0 0
        %2298 = vmatpush1.bf16.msra.mxu0 0
        %2299 = vmatprep.subr.bf16.mxu0 0
        %2300 = vmatpush1.bf16.msra.mxu0 0
        %2301 = vmatprep.mubr.bf16.mxu0 0
        %2302 = vmatmul.mubr.bf16.gmra.mrb[0].mxu0 %v2264
        %v2303 = vpop.f32.mrb[0].mxu0
        %v2304 = vadd.f32 0.0, %v2303
        %v2305 = vpop.f32.mrb[0].mxu0
        %v2306 = vpop.f32.mrb[0].mxu0
        %v2307 = vpop.f32.mrb[0].mxu0
        %2308 = vdwg.mxu0
        %v2309 = vadd.f32 %v1965, %v2304
        %v2310 = vadd.f32 %v900, %v2309
        %v2311 = vld [vmem:[%s705] sm:$0x1]
        %v2312 = vlaneseq
        %v2313 = vshrl.u32 %v2312, 7
        %v2314 = vsub.s32 0, %v2313
        %v2315 = vrot.slane %v2311, %v2314
        %v2316 = vadd.f32 %v2310, %v2315
        %v2317 = vld [vmem:[%s676 + $0x2] sm:$0x1]
        %v2318 = vld [vmem:[%s676 + $0x3] sm:$0x1]
        %v2319 = vsel %vm903, %v2316, 0.0
        %2320 = vadd.xlane.f32.xlu0 %v2319
        %v2321 = vpop.xlane.xlu0 %2320
        %v2322 = vmul.f32 %v2321, %v907
        %v2323 = vsub.f32 %v2316, %v2322
        %v2324 = vmul.f32 %v2323, %v2323
        %v2325 = vsel %vm903, %v2324, 0.0
        %2326 = vadd.xlane.f32.xlu0 %v2325
        %v2327 = vpop.xlane.xlu0 %2326
        %v2328 = vmul.f32 %v2327, %v907
        %v2329 = vadd.f32 %v2328, 1e-05
        %v2330 = vrsqrt.pop %v2329
        %v2331 = vmul.f32 %v2323, %v2330
        %v2332 = vlaneseq
        %v2333 = vshrl.u32 %v2332, 7
        %v2334 = vsub.s32 0, %v2333
        %v2335 = vrot.slane %v2317, %v2334
        %v2336 = vmul.f32 %v2331, %v2335
        %v2337 = vlaneseq
        %v2338 = vshrl.u32 %v2337, 7
        %v2339 = vsub.s32 0, %v2338
        %v2340 = vrot.slane %v2318, %v2339
        %v2341 = vadd.f32 %v2336, %v2340
        %v2342 = vpack.c.bf16 %v2341, %v2341
        %v2343 = vld [vmem:[%s710] sm:$0xf]
        %v2344 = vld [vmem:[%s710 + $0x4] sm:$0xf]
        %v2345 = vld [vmem:[%s710 + $0x8] sm:$0xf]
        %v2346 = vld [vmem:[%s710 + $0xc] sm:$0xf]
        %v2347 = vld [vmem:[%s713] sm:$0x1]
        %v2349 = vlaneseq
        %v2350 = vshrl.u32 %v2349, 7
        %v2351 = vsub.s32 0, %v2350
        %v2352 = vrot.slane %v2347, %v2351
        %v2358 = vunpack.c.l.b16 %v2343
        %v2359 = vunpack.c.l.b16 %v2344
        %v2360 = vunpack.c.l.b16 %v2345
        %v2361 = vunpack.c.l.b16 %v2346
        %v2362 = vpack.c.b16 %v2359, %v2358
        %v2363 = vpack.c.b16 %v2361, %v2360
        %v2367 = vsel %vm950, %v2342, 0
        %2369 = vmatprep.subr.bf16.mxu0 0
        %2370 = vmatpush1.bf16.msra.mxu0 %v2362
        %2371 = vmatprep.subr.bf16.mxu0 0
        %2372 = vmatpush1.bf16.msra.mxu0 %v2363
        %2373 = vmatprep.subr.bf16.mxu0 0
        %2374 = vmatpush1.bf16.msra.mxu0 0
        %2375 = vmatprep.subr.bf16.mxu0 0
        %2376 = vmatpush1.bf16.msra.mxu0 0
        %2377 = vmatprep.subr.bf16.mxu0 0
        %2378 = vmatpush1.bf16.msra.mxu0 0
        %2379 = vmatprep.subr.bf16.mxu0 0
        %2380 = vmatpush1.bf16.msra.mxu0 0
        %2381 = vmatprep.subr.bf16.mxu0 0
        %2382 = vmatpush1.bf16.msra.mxu0 0
        %2383 = vmatprep.subr.bf16.mxu0 0
        %2384 = vmatpush1.bf16.msra.mxu0 0
        %2385 = vmatprep.subr.bf16.mxu0 0
        %2386 = vmatpush1.bf16.msra.mxu0 0
        %2387 = vmatprep.subr.bf16.mxu0 0
        %2388 = vmatpush1.bf16.msra.mxu0 0
        %2389 = vmatprep.subr.bf16.mxu0 0
        %2390 = vmatpush1.bf16.msra.mxu0 0
        %2391 = vmatprep.subr.bf16.mxu0 0
        %2392 = vmatpush1.bf16.msra.mxu0 0
        %2393 = vmatprep.subr.bf16.mxu0 0
        %2394 = vmatpush1.bf16.msra.mxu0 0
        %2395 = vmatprep.subr.bf16.mxu0 0
        %2396 = vmatpush1.bf16.msra.mxu0 0
        %2397 = vmatprep.subr.bf16.mxu0 0
        %2398 = vmatpush1.bf16.msra.mxu0 0
        %2399 = vmatprep.subr.bf16.mxu0 0
        %2400 = vmatpush1.bf16.msra.mxu0 0
        %2401 = vmatprep.mubr.bf16.mxu0 0
        %2402 = vmatmul.mubr.bf16.gmra.mrb[0].mxu0 %v2367
        %v2403 = vpop.f32.mrb[0].mxu0
        %v2404 = vadd.f32 %v2352, %v2403
        %v2405 = vpop.f32.mrb[0].mxu0
        %v2406 = vpop.f32.mrb[0].mxu0
        %v2407 = vpop.f32.mrb[0].mxu0
        %2408 = vdwg.mxu0
        %v2409 = vmul.f32 %v2404, %v2404
        %v2410 = vmul.f32 %v2404, %v2409
        %v2411 = vmul.f32 %v2410, 0.044715
        %v2412 = vadd.f32 %v2404, %v2411
        %v2413 = vmul.f32 %v2412, 0.7978846
        %v2414 = vtanh.pop %v2413
        %v2415 = vadd.f32 %v2414, 1.0
        %v2416 = vmul.f32 %v2415, 0.5
        %v2417 = vmul.f32 %v2404, %v2416
        %v2418 = vpack.c.bf16 %v2417, %v2417
        %v2419 = vld [vmem:[%s718] sm:$0xf]
        %v2420 = vld [vmem:[%s718 + $0x4] sm:$0xf]
        %v2421 = vld [vmem:[%s718 + $0x8] sm:$0xf]
        %v2422 = vld [vmem:[%s718 + $0xc] sm:$0xf]
        %v2423 = vld [vmem:[%s718 + $0x10] sm:$0xf]
        %v2424 = vld [vmem:[%s718 + $0x14] sm:$0xf]
        %v2425 = vld [vmem:[%s718 + $0x18] sm:$0xf]
        %v2426 = vld [vmem:[%s718 + $0x1c] sm:$0xf]
        %v2427 = vld [vmem:[%s718 + $0x20] sm:$0xf]
        %v2428 = vld [vmem:[%s718 + $0x24] sm:$0xf]
        %v2429 = vld [vmem:[%s718 + $0x28] sm:$0xf]
        %v2430 = vld [vmem:[%s718 + $0x2c] sm:$0xf]
        %v2431 = vld [vmem:[%s718 + $0x30] sm:$0xf]
        %v2432 = vld [vmem:[%s718 + $0x34] sm:$0xf]
        %v2433 = vld [vmem:[%s718 + $0x38] sm:$0xf]
        %v2434 = vld [vmem:[%s718 + $0x3c] sm:$0xf]
        %v2451 = vunpack.c.l.b16 %v2419
        %v2452 = vunpack.c.l.b16 %v2420
        %v2453 = vunpack.c.l.b16 %v2421
        %v2454 = vunpack.c.l.b16 %v2422
        %v2455 = vunpack.c.l.b16 %v2423
        %v2456 = vunpack.c.l.b16 %v2424
        %v2457 = vunpack.c.l.b16 %v2425
        %v2458 = vunpack.c.l.b16 %v2426
        %v2459 = vunpack.c.l.b16 %v2427
        %v2460 = vunpack.c.l.b16 %v2428
        %v2461 = vunpack.c.l.b16 %v2429
        %v2462 = vunpack.c.l.b16 %v2430
        %v2463 = vunpack.c.l.b16 %v2431
        %v2464 = vunpack.c.l.b16 %v2432
        %v2465 = vunpack.c.l.b16 %v2433
        %v2466 = vunpack.c.l.b16 %v2434
        %v2467 = vpack.c.b16 %v2452, %v2451
        %v2468 = vpack.c.b16 %v2454, %v2453
        %v2469 = vpack.c.b16 %v2456, %v2455
        %v2470 = vpack.c.b16 %v2458, %v2457
        %v2471 = vpack.c.b16 %v2460, %v2459
        %v2472 = vpack.c.b16 %v2462, %v2461
        %v2473 = vpack.c.b16 %v2464, %v2463
        %v2474 = vpack.c.b16 %v2466, %v2465
        %2483 = vmatprep.subr.bf16.mxu0 0
        %2484 = vmatpush1.bf16.msra.mxu0 %v2467
        %2485 = vmatprep.subr.bf16.mxu0 0
        %2486 = vmatpush1.bf16.msra.mxu0 %v2468
        %2487 = vmatprep.subr.bf16.mxu0 0
        %2488 = vmatpush1.bf16.msra.mxu0 %v2469
        %2489 = vmatprep.subr.bf16.mxu0 0
        %2490 = vmatpush1.bf16.msra.mxu0 %v2470
        %2491 = vmatprep.subr.bf16.mxu0 0
        %2492 = vmatpush1.bf16.msra.mxu0 %v2471
        %2493 = vmatprep.subr.bf16.mxu0 0
        %2494 = vmatpush1.bf16.msra.mxu0 %v2472
        %2495 = vmatprep.subr.bf16.mxu0 0
        %2496 = vmatpush1.bf16.msra.mxu0 %v2473
        %2497 = vmatprep.subr.bf16.mxu0 0
        %2498 = vmatpush1.bf16.msra.mxu0 %v2474
        %2499 = vmatprep.subr.bf16.mxu0 0
        %2500 = vmatpush1.bf16.msra.mxu0 0
        %2501 = vmatprep.subr.bf16.mxu0 0
        %2502 = vmatpush1.bf16.msra.mxu0 0
        %2503 = vmatprep.subr.bf16.mxu0 0
        %2504 = vmatpush1.bf16.msra.mxu0 0
        %2505 = vmatprep.subr.bf16.mxu0 0
        %2506 = vmatpush1.bf16.msra.mxu0 0
        %2507 = vmatprep.subr.bf16.mxu0 0
        %2508 = vmatpush1.bf16.msra.mxu0 0
        %2509 = vmatprep.subr.bf16.mxu0 0
        %2510 = vmatpush1.bf16.msra.mxu0 0
        %2511 = vmatprep.subr.bf16.mxu0 0
        %2512 = vmatpush1.bf16.msra.mxu0 0
        %2513 = vmatprep.subr.bf16.mxu0 0
        %2514 = vmatpush1.bf16.msra.mxu0 0
        %2515 = vmatprep.mubr.bf16.mxu0 0
        %2516 = vmatmul.mubr.bf16.gmra.mrb[0].mxu0 %v2418
        %v2517 = vpop.f32.mrb[0].mxu0
        %v2518 = vadd.f32 0.0, %v2517
        %v2519 = vpop.f32.mrb[0].mxu0
        %v2520 = vpop.f32.mrb[0].mxu0
        %v2521 = vpop.f32.mrb[0].mxu0
        %2522 = vdwg.mxu0
        %v2523 = vadd.f32 %v2316, %v2518
        %v2524 = vld [vmem:[%s705 + $0x1] sm:$0x1]
        %v2525 = vlaneseq
        %v2526 = vshrl.u32 %v2525, 7
        %v2527 = vsub.s32 0, %v2526
        %v2528 = vrot.slane %v2524, %v2527
        %v2529 = vadd.f32 %v2523, %v2528
        %2530 = vst.msk [vmem:[#allocation2] sm:$0x1f] %vm903, %v2529
        %p2531 = scmp.eq.s32.totalorder %s35, 1
        // Predicated region
        $region89: #{frozen_openclip_visual_embedder_forward.1} parent=83 // pred_check
          %p2532 = pneg %p2531
        $region90: #{frozen_openclip_visual_embedder_forward.1} parent=83 // pred_check_branch
          %2534 = sbr.rel (%p2532) target = $region92
        $region91: #{frozen_openclip_visual_embedder_forward.1} parent=83 // pred_region
          %v2535 = vld [vmem:[%s14] sm:$0x1]
          %v2536 = vld [vmem:[%s14 + $0x1] sm:$0x1]
          %vm2537 = vcmask 253952
          %v2538 = vsel %vm2537, %v2529, 0.0
          %2539 = vadd.xlane.f32.xlu0 %v2538
          %v2540 = vpop.xlane.xlu0 %2539
          %v2541 = vmul.f32 %v2540, %v907
          %v2542 = vsub.f32 %v2529, %v2541
          %v2543 = vmul.f32 %v2542, %v2542
          %v2544 = vsel %vm2537, %v2543, 0.0
          %2545 = vadd.xlane.f32.xlu0 %v2544
          %v2546 = vpop.xlane.xlu0 %2545
          %v2547 = vmul.f32 %v2546, %v907
          %v2548 = vadd.f32 %v2547, 1e-05
          %v2549 = vrsqrt.pop %v2548
          %v2550 = vmul.f32 %v2542, %v2549
          %v2551 = vmul.f32 %v2550, %v2535
          %v2552 = vadd.f32 %v2551, %v2536
          %v2553 = vpack.c.bf16 %v2552, %v2552
          %v2554 = vld [vmem:[%s15] sm:$0xf]
          %v2555 = vld [vmem:[%s15 + $0x4] sm:$0xf]
          %v2556 = vld [vmem:[%s15 + $0x8] sm:$0xf]
          %v2557 = vld [vmem:[%s15 + $0xc] sm:$0xf]
          %v2562 = vunpack.c.l.b16 %v2554
          %v2563 = vunpack.c.l.b16 %v2555
          %v2564 = vunpack.c.l.b16 %v2556
          %v2565 = vunpack.c.l.b16 %v2557
          %v2566 = vpack.c.b16 %v2563, %v2562
          %v2567 = vpack.c.b16 %v2565, %v2564
          %v2571 = vsel %vm950, %v2553, 0
          %2573 = vmatprep.subr.bf16.mxu0 0
          %2574 = vmatpush1.bf16.msra.mxu0 %v2566
          %2575 = vmatprep.subr.bf16.mxu0 0
          %2576 = vmatpush1.bf16.msra.mxu0 %v2567
          %2577 = vmatprep.subr.bf16.mxu0 0
          %2578 = vmatpush1.bf16.msra.mxu0 0
          %2579 = vmatprep.subr.bf16.mxu0 0
          %2580 = vmatpush1.bf16.msra.mxu0 0
          %2581 = vmatprep.subr.bf16.mxu0 0
          %2582 = vmatpush1.bf16.msra.mxu0 0
          %2583 = vmatprep.subr.bf16.mxu0 0
          %2584 = vmatpush1.bf16.msra.mxu0 0
          %2585 = vmatprep.subr.bf16.mxu0 0
          %2586 = vmatpush1.bf16.msra.mxu0 0
          %2587 = vmatprep.subr.bf16.mxu0 0
          %2588 = vmatpush1.bf16.msra.mxu0 0
          %2589 = vmatprep.subr.bf16.mxu0 0
          %2590 = vmatpush1.bf16.msra.mxu0 0
          %2591 = vmatprep.subr.bf16.mxu0 0
          %2592 = vmatpush1.bf16.msra.mxu0 0
          %2593 = vmatprep.subr.bf16.mxu0 0
          %2594 = vmatpush1.bf16.msra.mxu0 0
          %2595 = vmatprep.subr.bf16.mxu0 0
          %2596 = vmatpush1.bf16.msra.mxu0 0
          %2597 = vmatprep.subr.bf16.mxu0 0
          %2598 = vmatpush1.bf16.msra.mxu0 0
          %2599 = vmatprep.subr.bf16.mxu0 0
          %2600 = vmatpush1.bf16.msra.mxu0 0
          %2601 = vmatprep.subr.bf16.mxu0 0
          %2602 = vmatpush1.bf16.msra.mxu0 0
          %2603 = vmatprep.subr.bf16.mxu0 0
          %2604 = vmatpush1.bf16.msra.mxu0 0
          %2605 = vmatprep.mubr.bf16.mxu0 0
          %2606 = vmatmul.mubr.bf16.gmra.mrb[0].mxu0 %v2571
          %v2607 = vpop.f32.mrb[0].mxu0
          %v2608 = vadd.f32 0.0, %v2607
          %v2609 = vpop.f32.mrb[0].mxu0
          %v2610 = vpop.f32.mrb[0].mxu0
          %v2611 = vpop.f32.mrb[0].mxu0
          %2612 = vdwg.mxu0
          %vm2613 = vcmask 122880
          %2614 = vst.msk [vmem:[%s667] sm:$0x1] %vm2613, %v2608
        $region92: #{frozen_openclip_visual_embedder_forward.1} parent=83 // pred_fallthru
          _
        %s2615 = sand.u32 %s441, 1
        %s2616 = scalar_lea.sflag [#allocation4], %s2615
        %s2617 = sand.u32 %s441, 1
        %s2618 = scalar_lea.vmem [#allocation3], %s2617
        // Predicated region
        $region93: #{frozen_openclip_visual_embedder_forward.1} parent=83 // pred_check
          %p2619 = pneg %p451
        $region94: #{frozen_openclip_visual_embedder_forward.1} parent=83 // pred_check_branch
          %2621 = sbr.rel (%p2619) target = $region96
        $region95: #{frozen_openclip_visual_embedder_forward.1} parent=83 // pred_region
          %s2623 = ssub.s32 16, 16
          %2624 = vsyncadd %s2616, %s2623
          %s2625 = smul.addr %s34, 16
          %s2626 = scalar_lea.hbm %s16, %s2625
          %s2628 = sshll.u32 %s2618, 4
          %s2629 = int_to_ptr.vmem [resolvable:$true] %s2628
          %2631 = dma.vmem_to_hbm [thread:$0]  %s2629, 16, %s2626, %s2616
        $region96: #{frozen_openclip_visual_embedder_forward.1} parent=83 // pred_fallthru
          _
      $region84: #{frozen_openclip_visual_embedder_forward.1} parent=5 // pred_fallthru
        _
      %p2632 = scmp.le.s32.totalorder 2, %s25
      // Predicated region
      $region97: #{frozen_openclip_visual_embedder_forward.1} parent=5 // pred_check
        %p2633 = pneg %p2632
      $region98: #{frozen_openclip_visual_embedder_forward.1} parent=5 // pred_check_branch
        %2635 = sbr.rel (%p2633) target = $region100
      $region99: #{frozen_openclip_visual_embedder_forward.1} parent=5 // pred_region
        %s2636 = ssub.s32 %s25, 2
        // Predicated region
        $region101: #{frozen_openclip_visual_embedder_forward.1} parent=99 // pred_check
          %p2637 = pneg %p457
        $region102: #{frozen_openclip_visual_embedder_forward.1} parent=99 // pred_check_branch
          %2639 = sbr.rel (%p2637) target = $region104
        $region103: #{frozen_openclip_visual_embedder_forward.1} parent=99 // pred_region
          %s2640 = sand.u32 %s442, 1
          %s2641 = scalar_lea.sflag [#allocation4], %s2640
          %s2642 = sand.u32 %s442, 1
          %s2643 = scalar_lea.vmem [#allocation3], %s2642
          %2644 = dma.done %s2641, 16
        $region104: #{frozen_openclip_visual_embedder_forward.1} parent=99 // pred_fallthru
          _
      $region100: #{frozen_openclip_visual_embedder_forward.1} parent=5 // pred_fallthru
        _
    $region6: #{frozen_openclip_visual_embedder_forward.1} parent=1 // loop_footer
      %s29 = sadd.s32 1, %s25
    $region7: #{frozen_openclip_visual_embedder_forward.1} parent=1 // loop_footer_branch
      %24 = sbr.rel target = $region3
    $region8: #{frozen_openclip_visual_embedder_forward.1} parent=1 // loop_exit
      _
    %2645 = vsyncpa [#allocation4], 1
    %s2646 = scalar_lea.sflag [#allocation4], 1
    %2647 = vsyncpa %s2646, 1

</llo_original>
